<compile_context>
chip_gen: v7x
topology: tpu7x:2x2x1
jax: 0.10.0
libtpu: 0.0.40
codegen_flags: <defaults>
</compile_context>

<pallas_src>
import functools

import jax
import jax.numpy as jnp
from jax import lax
from jax.experimental import pallas as pl
from jax.experimental.pallas import tpu as pltpu


# ---------------------------------------------------------------------------
# exact-GELU helper (erf via Abramowitz & Stegun 7.1.26, |err| < 1.5e-7).
# The transcendental chain runs in f32 (EUP / guaranteed lowering); only the
# surrounding gate math follows vpu_dtype.
# ---------------------------------------------------------------------------
def _erf_f32(x):
    a1, a2, a3, a4, a5 = (0.254829592, -0.284496736, 1.421413741,
                          -1.453152027, 1.061405429)
    p = 0.3275911
    ax = jnp.abs(x)
    t = pl.reciprocal(1.0 + p * ax)
    poly = ((((a5 * t + a4) * t + a3) * t + a2) * t + a1) * t
    y = 1.0 - poly * jnp.exp(-ax * ax)
    return jnp.where(x >= 0, y, -y)


def _gelu_exact(x):
    xf = x.astype(jnp.float32)
    out = 0.5 * xf * (1.0 + _erf_f32(xf * 0.7071067811865476))
    return out.astype(x.dtype)


def _shift_w(x, d):
    """Zero-fill shift along W of a (R, W, C) value."""
    R, W, C = x.shape
    z = jnp.zeros((R, 1, C), x.dtype)
    if d == -1:
        return jnp.concatenate([z, x[:, :W - 1, :]], axis=1)
    if d == 1:
        return jnp.concatenate([x[:, 1:, :], z], axis=1)
    return x


# ---------------------------------------------------------------------------
# Fused LGFF kernel: one grid step == one (batch, row-tile) block.
# ---------------------------------------------------------------------------
def lgff_kernel(x_mid_ref, x_t0_ref, x_t1_ref, x_b0_ref, x_b1_ref,
                dww_ref, dwb_ref, pww_ref, pwb_ref,
                lnw_ref, lnb_ref, ginw_ref, ginb_ref,
                gdww_ref, gdwb_ref, goutw_ref, goutb_ref,
                out_ref, h_scr, *, compute_dtype, vpu_dtype, img_h):
    cdt, vdt = compute_dtype, vpu_dtype
    f32 = jnp.float32
    _, TH, W, Cin = x_mid_ref.shape
    Cout = out_ref.shape[3]
    H2 = ginw_ref.shape[1]                 # 2 * hidden
    hidden = H2 // 2
    R2 = TH + 2                            # rows where project_in output is needed
    t = pl.program_id(1)
    nT = pl.num_programs(1)

    # ---- row-extended input tile: [2 halo | TH rows | 2 halo].  Out-of-image
    # halo rows are zeroed (== zero padding of the 3x3 convs in H); the gating
    # is a scalar*row multiply in f32 on 1-row slices (negligible cost).
    def _halo(ref, img_row):
        keep = ((img_row >= 0) & (img_row < img_h)).astype(f32)
        return (ref[0].astype(f32) * keep).astype(vdt)

    x_ext = jnp.concatenate(
        [_halo(x_t0_ref, t * TH - 2), _halo(x_t1_ref, t * TH - 1),
         x_mid_ref[0].astype(vdt),
         _halo(x_b0_ref, (t + 1) * TH), _halo(x_b1_ref, (t + 1) * TH + 1)],
        axis=0)                                            # (TH+4, W, Cin)

    # ---- project_in: depthwise 3x3 on the VPU (vertical taps first so only one
    # W-shifted partial is live at a time), then ONE 1x1 matmul on the MXU.
    dww = dww_ref[...]                                     # (9, Cin)
    accx = None
    for dj in range(3):
        vert = (x_ext[0:R2] * dww[dj]
                + x_ext[1:R2 + 1] * dww[3 + dj]
                + x_ext[2:R2 + 2] * dww[6 + dj])
        sh = _shift_w(vert, dj - 1)
        accx = sh if accx is None else accx + sh
    h0 = accx + dwb_ref[...]                               # (R2, W, Cin)

    y = jnp.dot(h0.reshape(R2 * W, Cin).astype(cdt), pww_ref[...],
                preferred_element_type=jnp.float32) + pwb_ref[...]   # (R2*W, Cout) f32

    # ---- WithBias LayerNorm over channels (single-pass f32 statistics).
    mu = jnp.mean(y, axis=-1, keepdims=True)
    ms = jnp.mean(y * y, axis=-1, keepdims=True)
    var = jnp.maximum(ms - mu * mu, 0.0)
    yn = (y - mu) * lax.rsqrt(var + 1e-5) * lnw_ref[...] + lnb_ref[...]

    # ---- GDFN project_in: both branches fused into one (Cout, 2*hidden) matmul.
    h = jnp.dot(yn.astype(cdt), ginw_ref[...],
                preferred_element_type=jnp.float32) + ginb_ref[...]  # (R2*W, 2H) f32
    h_scr[...] = h.astype(vdt).reshape(R2, W, H2)

    # Rows of h outside the image must be exactly zero (dwconv zero padding in
    # H); only boundary tiles touch anything, interior tiles skip this.
    @pl.when(t == 0)
    def _():
        h_scr[0] = jnp.zeros((W, H2), vdt)

    @pl.when(t == nT - 1)
    def _():
        h_scr[R2 - 1] = jnp.zeros((W, H2), vdt)

    # ---- GDFN depthwise 3x3 over 2*hidden channels: vertical taps accumulated
    # per W-offset straight from the scratch ref, W-shift applied once per
    # offset, so at most ~3 (TH, W, 2H) slabs are live at a time.
    w9 = gdww_ref[...]                                     # (9, 2H)
    acc = None
    for dj in range(3):
        vert = (h_scr[0:TH] * w9[dj]
                + h_scr[1:TH + 1] * w9[3 + dj]
                + h_scr[2:TH + 2] * w9[6 + dj])
        sh = _shift_w(vert, dj - 1)
        acc = sh if acc is None else acc + sh
    d = (acc + gdwb_ref[...]).reshape(TH * W, H2)

    # ---- GELU gate + project_out + residual.
    g = (_gelu_exact(d[:, :hidden]) * d[:, hidden:]).astype(cdt)
    ffn = jnp.dot(g, goutw_ref[...],
                  preferred_element_type=jnp.float32) + goutb_ref[...]  # (TH*W, Cout)
    y_out = y[W:(TH + 1) * W, :]                           # y on the TH output rows
    out_ref[0] = (y_out + ffn).reshape(TH, W, Cout).astype(out_ref.dtype)


# ---------------------------------------------------------------------------
# Parameter preparation (done once, outside the kernel).
# ---------------------------------------------------------------------------
def _prepare_weights(params, cdt, vdt):
    f32 = jnp.float32
    return [
        params['dw1_w'].astype(vdt),                                          # (9, Cin)
        params['dw1_b'].astype(vdt),                                          # (1, Cin)
        params['pw1_w'].astype(cdt),                                          # (Cin, Cout)
        params['pw1_b'].astype(f32),                                          # (1, Cout)
        params['ln_w'].astype(f32),                                           # (1, Cout)
        params['ln_b'].astype(f32),                                           # (1, Cout)
        jnp.concatenate([params['gin_w1'], params['gin_w2']], 1).astype(cdt), # (Cout, 2H)
        jnp.concatenate([params['gin_b1'], params['gin_b2']], 1).astype(f32), # (1, 2H)
        jnp.concatenate([params['gdw_w1'], params['gdw_w2']], 1).astype(vdt), # (9, 2H)
        jnp.concatenate([params['gdw_b1'], params['gdw_b2']], 1).astype(vdt), # (1, 2H)
        params['gout_w'].astype(cdt),                                         # (hidden, Cout)
        params['gout_b'].astype(f32),                                         # (1, Cout)
    ]


def _vmem_capacity_bytes():
    try:
        info = pltpu.get_tpu_info()
        cap = int(getattr(info, "vmem_capacity_bytes", 0) or 0)
        if cap > 0:
            return cap
    except Exception:
        pass
    return 64 * 1024 * 1024        # conservative (v7x-sized) fallback


def _choose_row_tile(H, W, cin, cout, hidden, *, batch, budget_bytes,
                     bw_x, bw_c, bw_v, bw_out):
    """Largest divisor of H whose rough per-step VMEM live set fits the budget."""
    H2 = 2 * hidden

    def tile_bytes(th):
        r2, rext = th + 2, th + 4
        x_part = rext * W * cin * (2 * bw_x + 3 * bw_v + bw_c)
        y_part = r2 * W * cout * (3 * 4 + bw_c)
        h_part = r2 * W * H2 * (4 + bw_v) + 3 * th * W * H2 * bw_v
        g_part = th * W * hidden * (2 * bw_v + bw_c) + th * W * cout * (4 + 2 * bw_out)
        return int(1.25 * (x_part + y_part + h_part + g_part))

    divisors = [d for d in range(1, H + 1) if H % d == 0]
    fitting = [d for d in divisors if tile_bytes(d) <= budget_bytes]
    if not fitting:
        return 1   # TODO(synk): add W / channel tiling for extreme single-row footprints
    th = max(fitting)
    # v7x megacore: keep >= 2 grid steps when batch == 1 so both TCs get work.
    if batch == 1 and th == H and len(fitting) > 1:
        th = max(d for d in fitting if d < H)
    return th


def _full_spec(a):
    nd = a.ndim
    return pl.BlockSpec(a.shape, lambda b, t, nd=nd: (0,) * nd)


# ---------------------------------------------------------------------------
# NHWC entry point (recommended: no layout transposes at the HBM boundary).
# ---------------------------------------------------------------------------
def lgff_pallas_nhwc(x, params, *, row_tile=None, compute_dtype=None, vpu_dtype=None):
    B, H, W, Cin = x.shape
    Cout = params['pw1_w'].shape[1]
    hidden = params['gdw_w1'].shape[1]
    H2 = 2 * hidden
    out_dtype = x.dtype

    cdt = jnp.dtype(compute_dtype) if compute_dtype is not None else jnp.dtype(x.dtype)
    vdt = jnp.dtype(vpu_dtype) if vpu_dtype is not None else cdt

    # Cast the input once in HBM when that narrows it (halves read traffic and
    # the halo/mid double-buffer footprint).
    if jnp.dtype(x.dtype).itemsize > vdt.itemsize:
        x = x.astype(vdt)

    weights = _prepare_weights(params, cdt, vdt)

    vmem_cap = _vmem_capacity_bytes()
    vmem_limit = (vmem_cap * 3) // 4          # ~48 MiB on v7x, ~96 MiB on v5e/v6e

    if row_tile is None:
        TH = _choose_row_tile(
            H, W, Cin, Cout, hidden, batch=B,
            budget_bytes=int(vmem_limit * 0.55),
            bw_x=jnp.dtype(x.dtype).itemsize, bw_c=cdt.itemsize,
            bw_v=vdt.itemsize, bw_out=jnp.dtype(out_dtype).itemsize)
    else:
        TH = row_tile
    assert H % TH == 0, f"row_tile={TH} must divide H={H}"
    nT = H // TH

    def row_spec(off):
        # 1-row halo block: block index == element row index (clamped in-bounds;
        # out-of-image rows are zeroed inside the kernel).
        return pl.BlockSpec(
            (1, 1, W, Cin),
            lambda b, t, off=off: (b, jnp.clip(t * TH + off, 0, H - 1), 0, 0))

    in_specs = [
        pl.BlockSpec((1, TH, W, Cin), lambda b, t: (b, t, 0, 0)),
        row_spec(-2), row_spec(-1), row_spec(TH), row_spec(TH + 1),
    ] + [_full_spec(w) for w in weights]
    # TODO(synk): weight specs are still double-buffered; pl.Buffered(1) (or a
    # one-shot DMA into scratch) would reclaim that VMEM for a larger row tile.

    kernel = functools.partial(lgff_kernel, compute_dtype=cdt, vpu_dtype=vdt, img_h=H)
    out = pl.pallas_call(
        kernel,
        grid_spec=pltpu.PrefetchScalarGridSpec(
            num_scalar_prefetch=0,
            grid=(B, nT),
            in_specs=in_specs,
            out_specs=pl.BlockSpec((1, TH, W, Cout), lambda b, t: (b, t, 0, 0)),
            scratch_shapes=[pltpu.VMEM((TH + 2, W, H2), vdt)]),
        out_shape=jax.ShapeDtypeStruct((B, H, W, Cout), out_dtype),
        compiler_params=pltpu.CompilerParams(
            dimension_semantics=("parallel", "parallel"),
            vmem_limit_bytes=int(vmem_limit)),
    )(x, x, x, x, x, *weights)
    return out


# ---------------------------------------------------------------------------
# NCHW adapter (PyTorch-module parity; prefer the NHWC entry in production).
# ---------------------------------------------------------------------------
def lgff_pallas(x_nchw, params, *, row_tile=None, compute_dtype=None, vpu_dtype=None):
    x = jnp.transpose(x_nchw, (0, 2, 3, 1))
    out = lgff_pallas_nhwc(x, params, row_tile=row_tile,
                           compute_dtype=compute_dtype, vpu_dtype=vpu_dtype)
    return jnp.transpose(out, (0, 3, 1, 2))


# ---------------------------------------------------------------------------
# Deterministic synthetic parameters (shapes follow LGFF.__init__).
# ---------------------------------------------------------------------------
def init_params(key, in_dim, out_dim, ffn_expansion_factor):
    hidden = int(out_dim * ffn_expansion_factor)
    ks = jax.random.split(key, 16)
    rnd = lambda k, shape, s=0.1: jax.random.normal(k, shape, jnp.float32) * s
    return {
        'dw1_w': rnd(ks[0], (9, in_dim)),         # project_in dwconv3x3 taps
        'dw1_b': rnd(ks[1], (1, in_dim)),
        'pw1_w': rnd(ks[2], (in_dim, out_dim)),   # project_in 1x1
        'pw1_b': rnd(ks[3], (1, out_dim)),
        'ln_w': 1.0 + rnd(ks[4], (1, out_dim)),   # WithBias LayerNorm
        'ln_b': rnd(ks[5], (1, out_dim)),
        'gin_w1': rnd(ks[6], (out_dim, hidden)),  # GDFN project_in (chunk 1 / 2)
        'gin_b1': rnd(ks[7], (1, hidden)),
        'gin_w2': rnd(ks[8], (out_dim, hidden)),
        'gin_b2': rnd(ks[9], (1, hidden)),
        'gdw_w1': rnd(ks[10], (9, hidden)),       # GDFN dwconv3x3 (chunk 1 / 2)
        'gdw_b1': rnd(ks[11], (1, hidden)),
        'gdw_w2': rnd(ks[12], (9, hidden)),
        'gdw_b2': rnd(ks[13], (1, hidden)),
        'gout_w': rnd(ks[14], (hidden, out_dim)), # GDFN project_out
        'gout_b': rnd(ks[15], (1, out_dim)),
    }


# ---------------------------------------------------------------------------
# Pure-JAX reference (unfused, same math) for correctness checking.
# ---------------------------------------------------------------------------
def lgff_reference(x_nchw, p):
    x = jnp.transpose(x_nchw, (0, 2, 3, 1)).astype(jnp.float32)
    B, H, W, Cin = x.shape
    hi = jax.lax.Precision.HIGHEST

    def dwconv(xn, w9, b):
        C = xn.shape[-1]
        xp = jnp.pad(xn, ((0, 0), (1, 1), (1, 1), (0, 0)))
        out = jnp.zeros_like(xn)
        for t in range(9):
            di, dj = divmod(t, 3)
            out = out + xp[:, di:di + H, dj:dj + W, :] * w9[t].reshape(1, 1, 1, C)
        return out + b.reshape(1, 1, 1, C)

    h0 = dwconv(x, p['dw1_w'], p['dw1_b'])
    y = jnp.einsum('bhwc,cd->bhwd', h0, p['pw1_w'], precision=hi) \
        + p['pw1_b'].reshape(1, 1, 1, -1)

    mu = jnp.mean(y, axis=-1, keepdims=True)
    var = jnp.mean((y - mu) ** 2, axis=-1, keepdims=True)
    yn = (y - mu) / jnp.sqrt(var + 1e-5) * p['ln_w'].reshape(1, 1, 1, -1) \
        + p['ln_b'].reshape(1, 1, 1, -1)

    def branch(w, b, dw, db):
        h = jnp.einsum('bhwc,cd->bhwd', yn, w, precision=hi) + b.reshape(1, 1, 1, -1)
        return dwconv(h, dw, db)

    x1 = branch(p['gin_w1'], p['gin_b1'], p['gdw_w1'], p['gdw_b1'])
    x2 = branch(p['gin_w2'], p['gin_b2'], p['gdw_w2'], p['gdw_b2'])
    g = jax.nn.gelu(x1, approximate=False) * x2
    ffn = jnp.einsum('bhwc,cd->bhwd', g, p['gout_w'], precision=hi) \
        + p['gout_b'].reshape(1, 1, 1, -1)
    return jnp.transpose(y + ffn, (0, 3, 1, 2))


if __name__ == "__main__":
    key = jax.random.PRNGKey(0)
    kx1, kp1, kx2 = jax.random.split(key, 3)

    # Config A: small channels.  f32 path with an explicit 8-row tile exercises
    # the multi-tile grid, 1-row halos and the boundary-row zeroing.
    B, in_dim, out_dim, H, W = 2, 4, 8, 16, 16
    xA = jax.random.normal(kx1, (B, in_dim, H, W), jnp.float32)
    pA = init_params(kp1, in_dim, out_dim, 2.0)
    refA = lgff_reference(xA, pA)

    outA = jax.block_until_ready(lgff_pallas(xA, pA, row_tile=8))
    assert outA.shape == (B, out_dim, H, W), outA.shape
    errA = float(jnp.max(jnp.abs(outA - refA)))
    assert errA < 5e-3, f"f32 max abs err vs reference: {errA}"

    # bf16 MXU operands + bf16 element-wise math (v6e/v7x recommendation; pass
    # vpu_dtype=jnp.float32 on v5e), auto row tile.
    outA16 = jax.block_until_ready(
        lgff_pallas(xA, pA, compute_dtype=jnp.bfloat16))
    errA16 = float(jnp.max(jnp.abs(outA16 - refA)))
    assert errA16 < 5e-2, f"bf16 max abs err vs reference: {errA16}"

    # Config B: larger Cin, 4-row tile -> exercises interior (non-boundary)
    # tiles and the wider 1x1 project_in matmul.
    in_dimB, out_dimB = 64, 8
    xB = jax.random.normal(kx2, (B, in_dimB, H, W), jnp.float32)
    pB = init_params(jax.random.fold_in(kp1, 1), in_dimB, out_dimB, 2.0)
    refB = lgff_reference(xB, pB)
    outB = jax.block_until_ready(lgff_pallas(xB, pB, row_tile=4))
    errB = float(jnp.max(jnp.abs(outB - refB)))
    assert errB < 5e-3, f"f32 (Cin=64) max abs err vs reference: {errB}"

    print("KERNEL_OK")
</pallas_src>

<mosaic_0001>
module attributes {stable_mosaic.version = 11 : i64} {
  func.func @lgff_kernel(%arg0: i32, %arg1: i32, %arg2: memref<1x8x16x4xf32, #tpu.memory_space<vmem>>, %arg3: memref<1x1x16x4xf32, #tpu.memory_space<vmem>>, %arg4: memref<1x1x16x4xf32, #tpu.memory_space<vmem>>, %arg5: memref<1x1x16x4xf32, #tpu.memory_space<vmem>>, %arg6: memref<1x1x16x4xf32, #tpu.memory_space<vmem>>, %arg7: memref<9x4xf32, #tpu.memory_space<vmem>>, %arg8: memref<1x4xf32, #tpu.memory_space<vmem>>, %arg9: memref<4x8xf32, #tpu.memory_space<vmem>>, %arg10: memref<1x8xf32, #tpu.memory_space<vmem>>, %arg11: memref<1x8xf32, #tpu.memory_space<vmem>>, %arg12: memref<1x8xf32, #tpu.memory_space<vmem>>, %arg13: memref<8x32xf32, #tpu.memory_space<vmem>>, %arg14: memref<1x32xf32, #tpu.memory_space<vmem>>, %arg15: memref<9x32xf32, #tpu.memory_space<vmem>>, %arg16: memref<1x32xf32, #tpu.memory_space<vmem>>, %arg17: memref<16x8xf32, #tpu.memory_space<vmem>>, %arg18: memref<1x8xf32, #tpu.memory_space<vmem>>, %arg19: memref<1x8x16x8xf32, #tpu.memory_space<vmem>>, %arg20: memref<10x16x32xf32, #tpu.memory_space<vmem>>) attributes {dimension_semantics = [#tpu.dimension_semantics<parallel>, #tpu.dimension_semantics<parallel>], iteration_bounds = array<i64: 2, 2>, scalar_prefetch = 0 : i64, scratch_operands = 1 : i64, tpu.core_type = #tpu.core_type<tc>, window_params = [{transform_indices = @transform_0, window_bounds = array<i64: 1, 8, 16, 4>}, {transform_indices = @transform_1, window_bounds = array<i64: 1, 1, 16, 4>}, {transform_indices = @transform_2, window_bounds = array<i64: 1, 1, 16, 4>}, {transform_indices = @transform_3, window_bounds = array<i64: 1, 1, 16, 4>}, {transform_indices = @transform_4, window_bounds = array<i64: 1, 1, 16, 4>}, {pipeline_mode = #tpu.pipeline_mode<synchronous>, transform_indices = @transform_5, window_bounds = array<i64: 9, 4>}, {pipeline_mode = #tpu.pipeline_mode<synchronous>, transform_indices = @transform_6, window_bounds = array<i64: 1, 4>}, {pipeline_mode = #tpu.pipeline_mode<synchronous>, transform_indices = @transform_7, window_bounds = array<i64: 4, 8>}, {pipeline_mode = #tpu.pipeline_mode<synchronous>, transform_indices = @transform_8, window_bounds = array<i64: 1, 8>}, {pipeline_mode = #tpu.pipeline_mode<synchronous>, transform_indices = @transform_9, window_bounds = array<i64: 1, 8>}, {pipeline_mode = #tpu.pipeline_mode<synchronous>, transform_indices = @transform_10, window_bounds = array<i64: 1, 8>}, {pipeline_mode = #tpu.pipeline_mode<synchronous>, transform_indices = @transform_11, window_bounds = array<i64: 8, 32>}, {pipeline_mode = #tpu.pipeline_mode<synchronous>, transform_indices = @transform_12, window_bounds = array<i64: 1, 32>}, {pipeline_mode = #tpu.pipeline_mode<synchronous>, transform_indices = @transform_13, window_bounds = array<i64: 9, 32>}, {pipeline_mode = #tpu.pipeline_mode<synchronous>, transform_indices = @transform_14, window_bounds = array<i64: 1, 32>}, {pipeline_mode = #tpu.pipeline_mode<synchronous>, transform_indices = @transform_15, window_bounds = array<i64: 16, 8>}, {pipeline_mode = #tpu.pipeline_mode<synchronous>, transform_indices = @transform_16, window_bounds = array<i64: 1, 8>}, {transform_indices = @transform_17, window_bounds = array<i64: 1, 8, 16, 8>}]} {
    %c8_i32 = arith.constant 8 : i32
    %0 = arith.muli %arg1, %c8_i32 : i32
    %c2_i32 = arith.constant 2 : i32
    %1 = arith.subi %0, %c2_i32 : i32
    %c0_i32 = arith.constant 0 : i32
    %2 = arith.cmpi sge, %1, %c0_i32 : i32
    %c16_i32 = arith.constant 16 : i32
    %3 = arith.cmpi slt, %1, %c16_i32 : i32
    %4 = arith.andi %2, %3 : i1
    %5 = arith.extui %4 : i1 to i32
    %6 = arith.sitofp %5 : i32 to f32
    %c0 = arith.constant 0 : index
    %c0_0 = arith.constant 0 : index
    %c0_1 = arith.constant 0 : index
    %c0_2 = arith.constant 0 : index
    %7 = vector.load %arg3[%c0, %c0_0, %c0_1, %c0_2] : memref<1x1x16x4xf32, #tpu.memory_space<vmem>>, vector<1x1x16x4xf32>
    %8 = vector.shape_cast %7 : vector<1x1x16x4xf32> to vector<1x16x4xf32>
    %9 = vector.broadcast %6 : f32 to vector<1x16x4xf32>
    %10 = arith.mulf %8, %9 : vector<1x16x4xf32>
    %c8_i32_3 = arith.constant 8 : i32
    %11 = arith.muli %arg1, %c8_i32_3 : i32
    %c1_i32 = arith.constant 1 : i32
    %12 = arith.subi %11, %c1_i32 : i32
    %c0_i32_4 = arith.constant 0 : i32
    %13 = arith.cmpi sge, %12, %c0_i32_4 : i32
    %c16_i32_5 = arith.constant 16 : i32
    %14 = arith.cmpi slt, %12, %c16_i32_5 : i32
    %15 = arith.andi %13, %14 : i1
    %16 = arith.extui %15 : i1 to i32
    %17 = arith.sitofp %16 : i32 to f32
    %c0_6 = arith.constant 0 : index
    %c0_7 = arith.constant 0 : index
    %c0_8 = arith.constant 0 : index
    %c0_9 = arith.constant 0 : index
    %18 = vector.load %arg4[%c0_6, %c0_7, %c0_8, %c0_9] : memref<1x1x16x4xf32, #tpu.memory_space<vmem>>, vector<1x1x16x4xf32>
    %19 = vector.shape_cast %18 : vector<1x1x16x4xf32> to vector<1x16x4xf32>
    %20 = vector.broadcast %17 : f32 to vector<1x16x4xf32>
    %21 = arith.mulf %19, %20 : vector<1x16x4xf32>
    %c0_10 = arith.constant 0 : index
    %c0_11 = arith.constant 0 : index
    %c0_12 = arith.constant 0 : index
    %c0_13 = arith.constant 0 : index
    %22 = vector.load %arg2[%c0_10, %c0_11, %c0_12, %c0_13] : memref<1x8x16x4xf32, #tpu.memory_space<vmem>>, vector<1x8x16x4xf32>
    %23 = vector.shape_cast %22 : vector<1x8x16x4xf32> to vector<8x16x4xf32>
    %c1_i32_14 = arith.constant 1 : i32
    %24 = arith.addi %arg1, %c1_i32_14 : i32
    %c8_i32_15 = arith.constant 8 : i32
    %25 = arith.muli %24, %c8_i32_15 : i32
    %c0_i32_16 = arith.constant 0 : i32
    %26 = arith.cmpi sge, %25, %c0_i32_16 : i32
    %c16_i32_17 = arith.constant 16 : i32
    %27 = arith.cmpi slt, %25, %c16_i32_17 : i32
    %28 = arith.andi %26, %27 : i1
    %29 = arith.extui %28 : i1 to i32
    %30 = arith.sitofp %29 : i32 to f32
    %c0_18 = arith.constant 0 : index
    %c0_19 = arith.constant 0 : index
    %c0_20 = arith.constant 0 : index
    %c0_21 = arith.constant 0 : index
    %31 = vector.load %arg5[%c0_18, %c0_19, %c0_20, %c0_21] : memref<1x1x16x4xf32, #tpu.memory_space<vmem>>, vector<1x1x16x4xf32>
    %32 = vector.shape_cast %31 : vector<1x1x16x4xf32> to vector<1x16x4xf32>
    %33 = vector.broadcast %30 : f32 to vector<1x16x4xf32>
    %34 = arith.mulf %32, %33 : vector<1x16x4xf32>
    %c1_i32_22 = arith.constant 1 : i32
    %35 = arith.addi %arg1, %c1_i32_22 : i32
    %c8_i32_23 = arith.constant 8 : i32
    %36 = arith.muli %35, %c8_i32_23 : i32
    %c1_i32_24 = arith.constant 1 : i32
    %37 = arith.addi %36, %c1_i32_24 : i32
    %c0_i32_25 = arith.constant 0 : i32
    %38 = arith.cmpi sge, %37, %c0_i32_25 : i32
    %c16_i32_26 = arith.constant 16 : i32
    %39 = arith.cmpi slt, %37, %c16_i32_26 : i32
    %40 = arith.andi %38, %39 : i1
    %41 = arith.extui %40 : i1 to i32
    %42 = arith.sitofp %41 : i32 to f32
    %c0_27 = arith.constant 0 : index
    %c0_28 = arith.constant 0 : index
    %c0_29 = arith.constant 0 : index
    %c0_30 = arith.constant 0 : index
    %43 = vector.load %arg6[%c0_27, %c0_28, %c0_29, %c0_30] : memref<1x1x16x4xf32, #tpu.memory_space<vmem>>, vector<1x1x16x4xf32>
    %44 = vector.shape_cast %43 : vector<1x1x16x4xf32> to vector<1x16x4xf32>
    %45 = vector.broadcast %42 : f32 to vector<1x16x4xf32>
    %46 = arith.mulf %44, %45 : vector<1x16x4xf32>
    %47 = tpu.concatenate %10, %21, %23, %34, %46 in 0 : vector<1x16x4xf32>, vector<1x16x4xf32>, vector<8x16x4xf32>, vector<1x16x4xf32>, vector<1x16x4xf32> -> vector<12x16x4xf32>
    %c0_31 = arith.constant 0 : index
    %c0_32 = arith.constant 0 : index
    %48 = vector.load %arg7[%c0_31, %c0_32] : memref<9x4xf32, #tpu.memory_space<vmem>>, vector<9x4xf32>
    %49 = vector.extract_strided_slice %47 {offsets = [0, 0, 0], sizes = [10, 16, 4], strides = [1, 1, 1]} : vector<12x16x4xf32> to vector<10x16x4xf32>
    %50 = vector.extract_strided_slice %48 {offsets = [0, 0], sizes = [1, 4], strides = [1, 1]} : vector<9x4xf32> to vector<1x4xf32>
    %51 = vector.shape_cast %50 : vector<1x4xf32> to vector<4xf32>
    %52 = vector.shape_cast %51 : vector<4xf32> to vector<1x1x4xf32>
    %53 = vector.broadcast %52 : vector<1x1x4xf32> to vector<10x16x4xf32>
    %54 = arith.mulf %49, %53 : vector<10x16x4xf32>
    %55 = vector.extract_strided_slice %47 {offsets = [1, 0, 0], sizes = [10, 16, 4], strides = [1, 1, 1]} : vector<12x16x4xf32> to vector<10x16x4xf32>
    %56 = vector.extract_strided_slice %48 {offsets = [3, 0], sizes = [1, 4], strides = [1, 1]} : vector<9x4xf32> to vector<1x4xf32>
    %57 = vector.shape_cast %56 : vector<1x4xf32> to vector<4xf32>
    %58 = vector.shape_cast %57 : vector<4xf32> to vector<1x1x4xf32>
    %59 = vector.broadcast %58 : vector<1x1x4xf32> to vector<10x16x4xf32>
    %60 = arith.mulf %55, %59 : vector<10x16x4xf32>
    %61 = arith.addf %54, %60 : vector<10x16x4xf32>
    %62 = vector.extract_strided_slice %47 {offsets = [2, 0, 0], sizes = [10, 16, 4], strides = [1, 1, 1]} : vector<12x16x4xf32> to vector<10x16x4xf32>
    %63 = vector.extract_strided_slice %48 {offsets = [6, 0], sizes = [1, 4], strides = [1, 1]} : vector<9x4xf32> to vector<1x4xf32>
    %64 = vector.shape_cast %63 : vector<1x4xf32> to vector<4xf32>
    %65 = vector.shape_cast %64 : vector<4xf32> to vector<1x1x4xf32>
    %66 = vector.broadcast %65 : vector<1x1x4xf32> to vector<10x16x4xf32>
    %67 = arith.mulf %62, %66 : vector<10x16x4xf32>
    %68 = arith.addf %61, %67 : vector<10x16x4xf32>
    %cst = arith.constant 0.000000e+00 : f32
    %69 = vector.broadcast %cst : f32 to vector<10x1x4xf32>
    %70 = vector.extract_strided_slice %68 {offsets = [0, 0, 0], sizes = [10, 15, 4], strides = [1, 1, 1]} : vector<10x16x4xf32> to vector<10x15x4xf32>
    %71 = tpu.concatenate %69, %70 in 1 : vector<10x1x4xf32>, vector<10x15x4xf32> -> vector<10x16x4xf32>
    %72 = vector.extract_strided_slice %47 {offsets = [0, 0, 0], sizes = [10, 16, 4], strides = [1, 1, 1]} : vector<12x16x4xf32> to vector<10x16x4xf32>
    %73 = vector.extract_strided_slice %48 {offsets = [1, 0], sizes = [1, 4], strides = [1, 1]} : vector<9x4xf32> to vector<1x4xf32>
    %74 = vector.shape_cast %73 : vector<1x4xf32> to vector<4xf32>
    %75 = vector.shape_cast %74 : vector<4xf32> to vector<1x1x4xf32>
    %76 = vector.broadcast %75 : vector<1x1x4xf32> to vector<10x16x4xf32>
    %77 = arith.mulf %72, %76 : vector<10x16x4xf32>
    %78 = vector.extract_strided_slice %47 {offsets = [1, 0, 0], sizes = [10, 16, 4], strides = [1, 1, 1]} : vector<12x16x4xf32> to vector<10x16x4xf32>
    %79 = vector.extract_strided_slice %48 {offsets = [4, 0], sizes = [1, 4], strides = [1, 1]} : vector<9x4xf32> to vector<1x4xf32>
    %80 = vector.shape_cast %79 : vector<1x4xf32> to vector<4xf32>
    %81 = vector.shape_cast %80 : vector<4xf32> to vector<1x1x4xf32>
    %82 = vector.broadcast %81 : vector<1x1x4xf32> to vector<10x16x4xf32>
    %83 = arith.mulf %78, %82 : vector<10x16x4xf32>
    %84 = arith.addf %77, %83 : vector<10x16x4xf32>
    %85 = vector.extract_strided_slice %47 {offsets = [2, 0, 0], sizes = [10, 16, 4], strides = [1, 1, 1]} : vector<12x16x4xf32> to vector<10x16x4xf32>
    %86 = vector.extract_strided_slice %48 {offsets = [7, 0], sizes = [1, 4], strides = [1, 1]} : vector<9x4xf32> to vector<1x4xf32>
    %87 = vector.shape_cast %86 : vector<1x4xf32> to vector<4xf32>
    %88 = vector.shape_cast %87 : vector<4xf32> to vector<1x1x4xf32>
    %89 = vector.broadcast %88 : vector<1x1x4xf32> to vector<10x16x4xf32>
    %90 = arith.mulf %85, %89 : vector<10x16x4xf32>
    %91 = arith.addf %84, %90 : vector<10x16x4xf32>
    %92 = arith.addf %71, %91 : vector<10x16x4xf32>
    %93 = vector.extract_strided_slice %47 {offsets = [0, 0, 0], sizes = [10, 16, 4], strides = [1, 1, 1]} : vector<12x16x4xf32> to vector<10x16x4xf32>
    %94 = vector.extract_strided_slice %48 {offsets = [2, 0], sizes = [1, 4], strides = [1, 1]} : vector<9x4xf32> to vector<1x4xf32>
    %95 = vector.shape_cast %94 : vector<1x4xf32> to vector<4xf32>
    %96 = vector.shape_cast %95 : vector<4xf32> to vector<1x1x4xf32>
    %97 = vector.broadcast %96 : vector<1x1x4xf32> to vector<10x16x4xf32>
    %98 = arith.mulf %93, %97 : vector<10x16x4xf32>
    %99 = vector.extract_strided_slice %47 {offsets = [1, 0, 0], sizes = [10, 16, 4], strides = [1, 1, 1]} : vector<12x16x4xf32> to vector<10x16x4xf32>
    %100 = vector.extract_strided_slice %48 {offsets = [5, 0], sizes = [1, 4], strides = [1, 1]} : vector<9x4xf32> to vector<1x4xf32>
    %101 = vector.shape_cast %100 : vector<1x4xf32> to vector<4xf32>
    %102 = vector.shape_cast %101 : vector<4xf32> to vector<1x1x4xf32>
    %103 = vector.broadcast %102 : vector<1x1x4xf32> to vector<10x16x4xf32>
    %104 = arith.mulf %99, %103 : vector<10x16x4xf32>
    %105 = arith.addf %98, %104 : vector<10x16x4xf32>
    %106 = vector.extract_strided_slice %47 {offsets = [2, 0, 0], sizes = [10, 16, 4], strides = [1, 1, 1]} : vector<12x16x4xf32> to vector<10x16x4xf32>
    %107 = vector.extract_strided_slice %48 {offsets = [8, 0], sizes = [1, 4], strides = [1, 1]} : vector<9x4xf32> to vector<1x4xf32>
    %108 = vector.shape_cast %107 : vector<1x4xf32> to vector<4xf32>
    %109 = vector.shape_cast %108 : vector<4xf32> to vector<1x1x4xf32>
    %110 = vector.broadcast %109 : vector<1x1x4xf32> to vector<10x16x4xf32>
    %111 = arith.mulf %106, %110 : vector<10x16x4xf32>
    %112 = arith.addf %105, %111 : vector<10x16x4xf32>
    %cst_33 = arith.constant 0.000000e+00 : f32
    %113 = vector.broadcast %cst_33 : f32 to vector<10x1x4xf32>
    %114 = vector.extract_strided_slice %112 {offsets = [0, 1, 0], sizes = [10, 15, 4], strides = [1, 1, 1]} : vector<10x16x4xf32> to vector<10x15x4xf32>
    %115 = tpu.concatenate %114, %113 in 1 : vector<10x15x4xf32>, vector<10x1x4xf32> -> vector<10x16x4xf32>
    %116 = arith.addf %92, %115 : vector<10x16x4xf32>
    %c0_34 = arith.constant 0 : index
    %c0_35 = arith.constant 0 : index
    %117 = vector.load %arg8[%c0_34, %c0_35] : memref<1x4xf32, #tpu.memory_space<vmem>>, vector<1x4xf32>
    %118 = vector.shape_cast %117 : vector<1x4xf32> to vector<1x1x4xf32>
    %119 = vector.broadcast %118 : vector<1x1x4xf32> to vector<10x16x4xf32>
    %120 = arith.addf %116, %119 : vector<10x16x4xf32>
    %121 = vector.shape_cast %120 : vector<10x16x4xf32> to vector<160x4xf32>
    %c0_36 = arith.constant 0 : index
    %c0_37 = arith.constant 0 : index
    %122 = vector.load %arg9[%c0_36, %c0_37] : memref<4x8xf32, #tpu.memory_space<vmem>>, vector<4x8xf32>
    %cst_38 = arith.constant dense<0.000000e+00> : vector<160x8xf32>
    %123 = tpu.matmul %121, %122, %cst_38 {dimension_numbers = #tpu.dot_dimension_numbers<[1], [0], [0], [1], [0, 0, 1, 1], [], []>} : vector<160x4xf32>, vector<4x8xf32>, vector<160x8xf32> -> vector<160x8xf32>
    %c0_39 = arith.constant 0 : index
    %c0_40 = arith.constant 0 : index
    %124 = vector.load %arg10[%c0_39, %c0_40] : memref<1x8xf32, #tpu.memory_space<vmem>>, vector<1x8xf32>
    %125 = vector.broadcast %124 : vector<1x8xf32> to vector<160x8xf32>
    %126 = arith.addf %123, %125 : vector<160x8xf32>
    %cst_41 = arith.constant dense<0.000000e+00> : vector<160xf32>
    %127 = vector.multi_reduction <add>, %126, %cst_41 [1] : vector<160x8xf32> to vector<160xf32>
    %128 = vector.shape_cast %127 : vector<160xf32> to vector<160x1xf32>
    %cst_42 = arith.constant 8.000000e+00 : f32
    %129 = vector.broadcast %cst_42 : f32 to vector<160x1xf32>
    %130 = arith.divf %128, %129 : vector<160x1xf32>
    %131 = arith.mulf %126, %126 : vector<160x8xf32>
    %cst_43 = arith.constant dense<0.000000e+00> : vector<160xf32>
    %132 = vector.multi_reduction <add>, %131, %cst_43 [1] : vector<160x8xf32> to vector<160xf32>
    %133 = vector.shape_cast %132 : vector<160xf32> to vector<160x1xf32>
    %cst_44 = arith.constant 8.000000e+00 : f32
    %134 = vector.broadcast %cst_44 : f32 to vector<160x1xf32>
    %135 = arith.divf %133, %134 : vector<160x1xf32>
    %136 = arith.mulf %130, %130 : vector<160x1xf32>
    %137 = arith.subf %135, %136 : vector<160x1xf32>
    %cst_45 = arith.constant 0.000000e+00 : f32
    %138 = vector.broadcast %cst_45 : f32 to vector<160x1xf32>
    %139 = arith.maximumf %137, %138 : vector<160x1xf32>
    %140 = vector.broadcast %130 : vector<160x1xf32> to vector<160x8xf32>
    %141 = arith.subf %126, %140 : vector<160x8xf32>
    %cst_46 = arith.constant 9.99999974E-6 : f32
    %142 = vector.broadcast %cst_46 : f32 to vector<160x1xf32>
    %143 = arith.addf %139, %142 : vector<160x1xf32>
    %144 = math.rsqrt %143 : vector<160x1xf32>
    %145 = vector.broadcast %144 : vector<160x1xf32> to vector<160x8xf32>
    %146 = arith.mulf %141, %145 : vector<160x8xf32>
    %c0_47 = arith.constant 0 : index
    %c0_48 = arith.constant 0 : index
    %147 = vector.load %arg11[%c0_47, %c0_48] : memref<1x8xf32, #tpu.memory_space<vmem>>, vector<1x8xf32>
    %148 = vector.broadcast %147 : vector<1x8xf32> to vector<160x8xf32>
    %149 = arith.mulf %146, %148 : vector<160x8xf32>
    %c0_49 = arith.constant 0 : index
    %c0_50 = arith.constant 0 : index
    %150 = vector.load %arg12[%c0_49, %c0_50] : memref<1x8xf32, #tpu.memory_space<vmem>>, vector<1x8xf32>
    %151 = vector.broadcast %150 : vector<1x8xf32> to vector<160x8xf32>
    %152 = arith.addf %149, %151 : vector<160x8xf32>
    %c0_51 = arith.constant 0 : index
    %c0_52 = arith.constant 0 : index
    %153 = vector.load %arg13[%c0_51, %c0_52] : memref<8x32xf32, #tpu.memory_space<vmem>>, vector<8x32xf32>
    %cst_53 = arith.constant dense<0.000000e+00> : vector<160x32xf32>
    %154 = tpu.matmul %152, %153, %cst_53 {dimension_numbers = #tpu.dot_dimension_numbers<[1], [0], [0], [1], [0, 0, 1, 1], [], []>} : vector<160x8xf32>, vector<8x32xf32>, vector<160x32xf32> -> vector<160x32xf32>
    %c0_54 = arith.constant 0 : index
    %c0_55 = arith.constant 0 : index
    %155 = vector.load %arg14[%c0_54, %c0_55] : memref<1x32xf32, #tpu.memory_space<vmem>>, vector<1x32xf32>
    %156 = vector.broadcast %155 : vector<1x32xf32> to vector<160x32xf32>
    %157 = arith.addf %154, %156 : vector<160x32xf32>
    %158 = vector.shape_cast %157 : vector<160x32xf32> to vector<10x16x32xf32>
    %c0_56 = arith.constant 0 : index
    %c0_57 = arith.constant 0 : index
    %c0_58 = arith.constant 0 : index
    %159 = vector.load %arg20[%c0_56, %c0_57, %c0_58] : memref<10x16x32xf32, #tpu.memory_space<vmem>>, vector<10x16x32xf32>
    tpu.vector_store %arg20[%c0_56, %c0_57, %c0_58], %158 {strides = array<i32>} : memref<10x16x32xf32, #tpu.memory_space<vmem>>, vector<10x16x32xf32>,
    %c0_i32_59 = arith.constant 0 : i32
    %160 = arith.cmpi eq, %arg1, %c0_i32_59 : i32
    %161 = arith.extui %160 : i1 to i32
    %c0_i32_60 = arith.constant 0 : i32
    %162 = arith.cmpi ne, %161, %c0_i32_60 : i32
    scf.if %162 {
      %cst_117 = arith.constant 0.000000e+00 : f32
      %293 = vector.broadcast %cst_117 : f32 to vector<16x32xf32>
      %c0_118 = arith.constant 0 : index
      %c0_119 = arith.constant 0 : index
      %c0_120 = arith.constant 0 : index
      %294 = vector.load %arg20[%c0_118, %c0_119, %c0_120] : memref<10x16x32xf32, #tpu.memory_space<vmem>>, vector<1x16x32xf32>
      %295 = vector.shape_cast %294 : vector<1x16x32xf32> to vector<16x32xf32>
      %296 = vector.shape_cast %293 : vector<16x32xf32> to vector<1x16x32xf32>
      tpu.vector_store %arg20[%c0_118, %c0_119, %c0_120], %296 {strides = array<i32>} : memref<10x16x32xf32, #tpu.memory_space<vmem>>, vector<1x16x32xf32>,
    } else {
    }
    %c1_i32_61 = arith.constant 1 : i32
    %163 = arith.cmpi eq, %arg1, %c1_i32_61 : i32
    %164 = arith.extui %163 : i1 to i32
    %c0_i32_62 = arith.constant 0 : i32
    %165 = arith.cmpi ne, %164, %c0_i32_62 : i32
    scf.if %165 {
      %cst_117 = arith.constant 0.000000e+00 : f32
      %293 = vector.broadcast %cst_117 : f32 to vector<16x32xf32>
      %c9 = arith.constant 9 : index
      %c0_118 = arith.constant 0 : index
      %c0_119 = arith.constant 0 : index
      %294 = vector.load %arg20[%c9, %c0_118, %c0_119] : memref<10x16x32xf32, #tpu.memory_space<vmem>>, vector<1x16x32xf32>
      %295 = vector.shape_cast %294 : vector<1x16x32xf32> to vector<16x32xf32>
      %296 = vector.shape_cast %293 : vector<16x32xf32> to vector<1x16x32xf32>
      tpu.vector_store %arg20[%c9, %c0_118, %c0_119], %296 {strides = array<i32>} : memref<10x16x32xf32, #tpu.memory_space<vmem>>, vector<1x16x32xf32>,
    } else {
    }
    %c0_63 = arith.constant 0 : index
    %c0_64 = arith.constant 0 : index
    %166 = vector.load %arg15[%c0_63, %c0_64] : memref<9x32xf32, #tpu.memory_space<vmem>>, vector<9x32xf32>
    %c0_65 = arith.constant 0 : index
    %c0_66 = arith.constant 0 : index
    %c0_67 = arith.constant 0 : index
    %167 = vector.load %arg20[%c0_65, %c0_66, %c0_67] : memref<10x16x32xf32, #tpu.memory_space<vmem>>, vector<8x16x32xf32>
    %168 = vector.extract_strided_slice %166 {offsets = [0, 0], sizes = [1, 32], strides = [1, 1]} : vector<9x32xf32> to vector<1x32xf32>
    %169 = vector.shape_cast %168 : vector<1x32xf32> to vector<32xf32>
    %170 = vector.shape_cast %169 : vector<32xf32> to vector<1x1x32xf32>
    %171 = vector.broadcast %170 : vector<1x1x32xf32> to vector<8x16x32xf32>
    %172 = arith.mulf %167, %171 : vector<8x16x32xf32>
    %c1 = arith.constant 1 : index
    %c0_68 = arith.constant 0 : index
    %c0_69 = arith.constant 0 : index
    %173 = vector.load %arg20[%c1, %c0_68, %c0_69] : memref<10x16x32xf32, #tpu.memory_space<vmem>>, vector<8x16x32xf32>
    %174 = vector.extract_strided_slice %166 {offsets = [3, 0], sizes = [1, 32], strides = [1, 1]} : vector<9x32xf32> to vector<1x32xf32>
    %175 = vector.shape_cast %174 : vector<1x32xf32> to vector<32xf32>
    %176 = vector.shape_cast %175 : vector<32xf32> to vector<1x1x32xf32>
    %177 = vector.broadcast %176 : vector<1x1x32xf32> to vector<8x16x32xf32>
    %178 = arith.mulf %173, %177 : vector<8x16x32xf32>
    %179 = arith.addf %172, %178 : vector<8x16x32xf32>
    %c2 = arith.constant 2 : index
    %c0_70 = arith.constant 0 : index
    %c0_71 = arith.constant 0 : index
    %180 = vector.load %arg20[%c2, %c0_70, %c0_71] : memref<10x16x32xf32, #tpu.memory_space<vmem>>, vector<8x16x32xf32>
    %181 = vector.extract_strided_slice %166 {offsets = [6, 0], sizes = [1, 32], strides = [1, 1]} : vector<9x32xf32> to vector<1x32xf32>
    %182 = vector.shape_cast %181 : vector<1x32xf32> to vector<32xf32>
    %183 = vector.shape_cast %182 : vector<32xf32> to vector<1x1x32xf32>
    %184 = vector.broadcast %183 : vector<1x1x32xf32> to vector<8x16x32xf32>
    %185 = arith.mulf %180, %184 : vector<8x16x32xf32>
    %186 = arith.addf %179, %185 : vector<8x16x32xf32>
    %cst_72 = arith.constant 0.000000e+00 : f32
    %187 = vector.broadcast %cst_72 : f32 to vector<8x1x32xf32>
    %188 = vector.extract_strided_slice %186 {offsets = [0, 0, 0], sizes = [8, 15, 32], strides = [1, 1, 1]} : vector<8x16x32xf32> to vector<8x15x32xf32>
    %189 = tpu.concatenate %187, %188 in 1 : vector<8x1x32xf32>, vector<8x15x32xf32> -> vector<8x16x32xf32>
    %c0_73 = arith.constant 0 : index
    %c0_74 = arith.constant 0 : index
    %c0_75 = arith.constant 0 : index
    %190 = vector.load %arg20[%c0_73, %c0_74, %c0_75] : memref<10x16x32xf32, #tpu.memory_space<vmem>>, vector<8x16x32xf32>
    %191 = vector.extract_strided_slice %166 {offsets = [1, 0], sizes = [1, 32], strides = [1, 1]} : vector<9x32xf32> to vector<1x32xf32>
    %192 = vector.shape_cast %191 : vector<1x32xf32> to vector<32xf32>
    %193 = vector.shape_cast %192 : vector<32xf32> to vector<1x1x32xf32>
    %194 = vector.broadcast %193 : vector<1x1x32xf32> to vector<8x16x32xf32>
    %195 = arith.mulf %190, %194 : vector<8x16x32xf32>
    %c1_76 = arith.constant 1 : index
    %c0_77 = arith.constant 0 : index
    %c0_78 = arith.constant 0 : index
    %196 = vector.load %arg20[%c1_76, %c0_77, %c0_78] : memref<10x16x32xf32, #tpu.memory_space<vmem>>, vector<8x16x32xf32>
    %197 = vector.extract_strided_slice %166 {offsets = [4, 0], sizes = [1, 32], strides = [1, 1]} : vector<9x32xf32> to vector<1x32xf32>
    %198 = vector.shape_cast %197 : vector<1x32xf32> to vector<32xf32>
    %199 = vector.shape_cast %198 : vector<32xf32> to vector<1x1x32xf32>
    %200 = vector.broadcast %199 : vector<1x1x32xf32> to vector<8x16x32xf32>
    %201 = arith.mulf %196, %200 : vector<8x16x32xf32>
    %202 = arith.addf %195, %201 : vector<8x16x32xf32>
    %c2_79 = arith.constant 2 : index
    %c0_80 = arith.constant 0 : index
    %c0_81 = arith.constant 0 : index
    %203 = vector.load %arg20[%c2_79, %c0_80, %c0_81] : memref<10x16x32xf32, #tpu.memory_space<vmem>>, vector<8x16x32xf32>
    %204 = vector.extract_strided_slice %166 {offsets = [7, 0], sizes = [1, 32], strides = [1, 1]} : vector<9x32xf32> to vector<1x32xf32>
    %205 = vector.shape_cast %204 : vector<1x32xf32> to vector<32xf32>
    %206 = vector.shape_cast %205 : vector<32xf32> to vector<1x1x32xf32>
    %207 = vector.broadcast %206 : vector<1x1x32xf32> to vector<8x16x32xf32>
    %208 = arith.mulf %203, %207 : vector<8x16x32xf32>
    %209 = arith.addf %202, %208 : vector<8x16x32xf32>
    %210 = arith.addf %189, %209 : vector<8x16x32xf32>
    %c0_82 = arith.constant 0 : index
    %c0_83 = arith.constant 0 : index
    %c0_84 = arith.constant 0 : index
    %211 = vector.load %arg20[%c0_82, %c0_83, %c0_84] : memref<10x16x32xf32, #tpu.memory_space<vmem>>, vector<8x16x32xf32>
    %212 = vector.extract_strided_slice %166 {offsets = [2, 0], sizes = [1, 32], strides = [1, 1]} : vector<9x32xf32> to vector<1x32xf32>
    %213 = vector.shape_cast %212 : vector<1x32xf32> to vector<32xf32>
    %214 = vector.shape_cast %213 : vector<32xf32> to vector<1x1x32xf32>
    %215 = vector.broadcast %214 : vector<1x1x32xf32> to vector<8x16x32xf32>
    %216 = arith.mulf %211, %215 : vector<8x16x32xf32>
    %c1_85 = arith.constant 1 : index
    %c0_86 = arith.constant 0 : index
    %c0_87 = arith.constant 0 : index
    %217 = vector.load %arg20[%c1_85, %c0_86, %c0_87] : memref<10x16x32xf32, #tpu.memory_space<vmem>>, vector<8x16x32xf32>
    %218 = vector.extract_strided_slice %166 {offsets = [5, 0], sizes = [1, 32], strides = [1, 1]} : vector<9x32xf32> to vector<1x32xf32>
    %219 = vector.shape_cast %218 : vector<1x32xf32> to vector<32xf32>
    %220 = vector.shape_cast %219 : vector<32xf32> to vector<1x1x32xf32>
    %221 = vector.broadcast %220 : vector<1x1x32xf32> to vector<8x16x32xf32>
    %222 = arith.mulf %217, %221 : vector<8x16x32xf32>
    %223 = arith.addf %216, %222 : vector<8x16x32xf32>
    %c2_88 = arith.constant 2 : index
    %c0_89 = arith.constant 0 : index
    %c0_90 = arith.constant 0 : index
    %224 = vector.load %arg20[%c2_88, %c0_89, %c0_90] : memref<10x16x32xf32, #tpu.memory_space<vmem>>, vector<8x16x32xf32>
    %225 = vector.extract_strided_slice %166 {offsets = [8, 0], sizes = [1, 32], strides = [1, 1]} : vector<9x32xf32> to vector<1x32xf32>
    %226 = vector.shape_cast %225 : vector<1x32xf32> to vector<32xf32>
    %227 = vector.shape_cast %226 : vector<32xf32> to vector<1x1x32xf32>
    %228 = vector.broadcast %227 : vector<1x1x32xf32> to vector<8x16x32xf32>
    %229 = arith.mulf %224, %228 : vector<8x16x32xf32>
    %230 = arith.addf %223, %229 : vector<8x16x32xf32>
    %cst_91 = arith.constant 0.000000e+00 : f32
    %231 = vector.broadcast %cst_91 : f32 to vector<8x1x32xf32>
    %232 = vector.extract_strided_slice %230 {offsets = [0, 1, 0], sizes = [8, 15, 32], strides = [1, 1, 1]} : vector<8x16x32xf32> to vector<8x15x32xf32>
    %233 = tpu.concatenate %232, %231 in 1 : vector<8x15x32xf32>, vector<8x1x32xf32> -> vector<8x16x32xf32>
    %234 = arith.addf %210, %233 : vector<8x16x32xf32>
    %c0_92 = arith.constant 0 : index
    %c0_93 = arith.constant 0 : index
    %235 = vector.load %arg16[%c0_92, %c0_93] : memref<1x32xf32, #tpu.memory_space<vmem>>, vector<1x32xf32>
    %236 = vector.shape_cast %235 : vector<1x32xf32> to vector<1x1x32xf32>
    %237 = vector.broadcast %236 : vector<1x1x32xf32> to vector<8x16x32xf32>
    %238 = arith.addf %234, %237 : vector<8x16x32xf32>
    %239 = vector.shape_cast %238 : vector<8x16x32xf32> to vector<128x32xf32>
    %240 = vector.extract_strided_slice %239 {offsets = [0, 0], sizes = [128, 16], strides = [1, 1]} : vector<128x32xf32> to vector<128x16xf32>
    %cst_94 = arith.constant 5.000000e-01 : f32
    %241 = vector.broadcast %cst_94 : f32 to vector<128x16xf32>
    %242 = arith.mulf %241, %240 : vector<128x16xf32>
    %cst_95 = arith.constant 0.707106769 : f32
    %243 = vector.broadcast %cst_95 : f32 to vector<128x16xf32>
    %244 = arith.mulf %240, %243 : vector<128x16xf32>
    %245 = math.absf %244 : vector<128x16xf32>
    %cst_96 = arith.constant 0.327591091 : f32
    %246 = vector.broadcast %cst_96 : f32 to vector<128x16xf32>
    %247 = arith.mulf %246, %245 : vector<128x16xf32>
    %cst_97 = arith.constant 1.000000e+00 : f32
    %248 = vector.broadcast %cst_97 : f32 to vector<128x16xf32>
    %249 = arith.addf %248, %247 : vector<128x16xf32>
    %250 = tpu.reciprocal %249 : vector<128x16xf32> -> vector<128x16xf32>
    %cst_98 = arith.constant 1.06140542 : f32
    %251 = vector.broadcast %cst_98 : f32 to vector<128x16xf32>
    %252 = arith.mulf %251, %250 : vector<128x16xf32>
    %cst_99 = arith.constant -1.45315206 : f32
    %253 = vector.broadcast %cst_99 : f32 to vector<128x16xf32>
    %254 = arith.addf %252, %253 : vector<128x16xf32>
    %255 = arith.mulf %254, %250 : vector<128x16xf32>
    %cst_100 = arith.constant 1.42141378 : f32
    %256 = vector.broadcast %cst_100 : f32 to vector<128x16xf32>
    %257 = arith.addf %255, %256 : vector<128x16xf32>
    %258 = arith.mulf %257, %250 : vector<128x16xf32>
    %cst_101 = arith.constant -0.284496725 : f32
    %259 = vector.broadcast %cst_101 : f32 to vector<128x16xf32>
    %260 = arith.addf %258, %259 : vector<128x16xf32>
    %261 = arith.mulf %260, %250 : vector<128x16xf32>
    %cst_102 = arith.constant 0.254829586 : f32
    %262 = vector.broadcast %cst_102 : f32 to vector<128x16xf32>
    %263 = arith.addf %261, %262 : vector<128x16xf32>
    %264 = arith.mulf %263, %250 : vector<128x16xf32>
    %cst_103 = arith.constant 0.000000e+00 : f32
    %265 = vector.broadcast %cst_103 : f32 to vector<128x16xf32>
    %266 = arith.subf %265, %245 : vector<128x16xf32>
    %267 = arith.mulf %266, %245 : vector<128x16xf32>
    %268 = math.exp %267 : vector<128x16xf32>
    %269 = arith.mulf %264, %268 : vector<128x16xf32>
    %cst_104 = arith.constant 1.000000e+00 : f32
    %270 = vector.broadcast %cst_104 : f32 to vector<128x16xf32>
    %271 = arith.subf %270, %269 : vector<128x16xf32>
    %cst_105 = arith.constant 0.000000e+00 : f32
    %272 = vector.broadcast %cst_105 : f32 to vector<128x16xf32>
    %273 = arith.cmpf oge, %244, %272 : vector<128x16xf32>
    %cst_106 = arith.constant 0.000000e+00 : f32
    %274 = vector.broadcast %cst_106 : f32 to vector<128x16xf32>
    %275 = arith.subf %274, %271 : vector<128x16xf32>
    %276 = arith.select %273, %271, %275 : vector<128x16xi1>, vector<128x16xf32>
    %cst_107 = arith.constant 1.000000e+00 : f32
    %277 = vector.broadcast %cst_107 : f32 to vector<128x16xf32>
    %278 = arith.addf %277, %276 : vector<128x16xf32>
    %279 = arith.mulf %242, %278 : vector<128x16xf32>
    %280 = vector.extract_strided_slice %239 {offsets = [0, 16], sizes = [128, 16], strides = [1, 1]} : vector<128x32xf32> to vector<128x16xf32>
    %281 = arith.mulf %279, %280 : vector<128x16xf32>
    %c0_108 = arith.constant 0 : index
    %c0_109 = arith.constant 0 : index
    %282 = vector.load %arg17[%c0_108, %c0_109] : memref<16x8xf32, #tpu.memory_space<vmem>>, vector<16x8xf32>
    %cst_110 = arith.constant dense<0.000000e+00> : vector<128x8xf32>
    %283 = tpu.matmul %281, %282, %cst_110 {dimension_numbers = #tpu.dot_dimension_numbers<[1], [0], [0], [1], [0, 0, 1, 1], [], []>} : vector<128x16xf32>, vector<16x8xf32>, vector<128x8xf32> -> vector<128x8xf32>
    %c0_111 = arith.constant 0 : index
    %c0_112 = arith.constant 0 : index
    %284 = vector.load %arg18[%c0_111, %c0_112] : memref<1x8xf32, #tpu.memory_space<vmem>>, vector<1x8xf32>
    %285 = vector.broadcast %284 : vector<1x8xf32> to vector<128x8xf32>
    %286 = arith.addf %283, %285 : vector<128x8xf32>
    %287 = vector.extract_strided_slice %126 {offsets = [16, 0], sizes = [128, 8], strides = [1, 1]} : vector<160x8xf32> to vector<128x8xf32>
    %288 = arith.addf %287, %286 : vector<128x8xf32>
    %289 = vector.shape_cast %288 : vector<128x8xf32> to vector<8x16x8xf32>
    %c0_113 = arith.constant 0 : index
    %c0_114 = arith.constant 0 : index
    %c0_115 = arith.constant 0 : index
    %c0_116 = arith.constant 0 : index
    %290 = vector.load %arg19[%c0_113, %c0_114, %c0_115, %c0_116] : memref<1x8x16x8xf32, #tpu.memory_space<vmem>>, vector<1x8x16x8xf32>
    %291 = vector.shape_cast %290 : vector<1x8x16x8xf32> to vector<8x16x8xf32>
    %292 = vector.shape_cast %289 : vector<8x16x8xf32> to vector<1x8x16x8xf32>
    tpu.vector_store %arg19[%c0_113, %c0_114, %c0_115, %c0_116], %292 {strides = array<i32>} : memref<1x8x16x8xf32, #tpu.memory_space<vmem>>, vector<1x8x16x8xf32>,
    return
  }
  func.func @transform_0(%arg0: i32, %arg1: i32) -> (i32, i32, i32, i32) {
    %c0_i32 = arith.constant 0 : i32
    %c0_i32_0 = arith.constant 0 : i32
    %c0_i32_1 = arith.constant 0 : i32
    return %arg0, %arg1, %c0_i32, %c0_i32_0 : i32, i32, i32, i32
  }
  func.func @transform_1(%arg0: i32, %arg1: i32) -> (i32, i32, i32, i32) {
    %c8_i32 = arith.constant 8 : i32
    %0 = arith.muli %arg1, %c8_i32 : i32
    %c-2_i32 = arith.constant -2 : i32
    %1 = arith.addi %0, %c-2_i32 : i32
    %c0_i32 = arith.constant 0 : i32
    %c15_i32 = arith.constant 15 : i32
    %2 = arith.maxsi %c0_i32, %1 : i32
    %3 = arith.minsi %c15_i32, %2 : i32
    %c0_i32_0 = arith.constant 0 : i32
    %c0_i32_1 = arith.constant 0 : i32
    %c0_i32_2 = arith.constant 0 : i32
    return %arg0, %3, %c0_i32_0, %c0_i32_1 : i32, i32, i32, i32
  }
  func.func @transform_2(%arg0: i32, %arg1: i32) -> (i32, i32, i32, i32) {
    %c8_i32 = arith.constant 8 : i32
    %0 = arith.muli %arg1, %c8_i32 : i32
    %c-1_i32 = arith.constant -1 : i32
    %1 = arith.addi %0, %c-1_i32 : i32
    %c0_i32 = arith.constant 0 : i32
    %c15_i32 = arith.constant 15 : i32
    %2 = arith.maxsi %c0_i32, %1 : i32
    %3 = arith.minsi %c15_i32, %2 : i32
    %c0_i32_0 = arith.constant 0 : i32
    %c0_i32_1 = arith.constant 0 : i32
    %c0_i32_2 = arith.constant 0 : i32
    return %arg0, %3, %c0_i32_0, %c0_i32_1 : i32, i32, i32, i32
  }
  func.func @transform_3(%arg0: i32, %arg1: i32) -> (i32, i32, i32, i32) {
    %c8_i32 = arith.constant 8 : i32
    %0 = arith.muli %arg1, %c8_i32 : i32
    %c8_i32_0 = arith.constant 8 : i32
    %1 = arith.addi %0, %c8_i32_0 : i32
    %c0_i32 = arith.constant 0 : i32
    %c15_i32 = arith.constant 15 : i32
    %2 = arith.maxsi %c0_i32, %1 : i32
    %3 = arith.minsi %c15_i32, %2 : i32
    %c0_i32_1 = arith.constant 0 : i32
    %c0_i32_2 = arith.constant 0 : i32
    %c0_i32_3 = arith.constant 0 : i32
    return %arg0, %3, %c0_i32_1, %c0_i32_2 : i32, i32, i32, i32
  }
  func.func @transform_4(%arg0: i32, %arg1: i32) -> (i32, i32, i32, i32) {
    %c8_i32 = arith.constant 8 : i32
    %0 = arith.muli %arg1, %c8_i32 : i32
    %c9_i32 = arith.constant 9 : i32
    %1 = arith.addi %0, %c9_i32 : i32
    %c0_i32 = arith.constant 0 : i32
    %c15_i32 = arith.constant 15 : i32
    %2 = arith.maxsi %c0_i32, %1 : i32
    %3 = arith.minsi %c15_i32, %2 : i32
    %c0_i32_0 = arith.constant 0 : i32
    %c0_i32_1 = arith.constant 0 : i32
    %c0_i32_2 = arith.constant 0 : i32
    return %arg0, %3, %c0_i32_0, %c0_i32_1 : i32, i32, i32, i32
  }
  func.func @transform_5(%arg0: i32, %arg1: i32) -> (i32, i32) {
    %c0_i32 = arith.constant 0 : i32
    %c0_i32_0 = arith.constant 0 : i32
    %c0_i32_1 = arith.constant 0 : i32
    return %c0_i32, %c0_i32_0 : i32, i32
  }
  func.func @transform_6(%arg0: i32, %arg1: i32) -> (i32, i32) {
    %c0_i32 = arith.constant 0 : i32
    %c0_i32_0 = arith.constant 0 : i32
    %c0_i32_1 = arith.constant 0 : i32
    return %c0_i32, %c0_i32_0 : i32, i32
  }
  func.func @transform_7(%arg0: i32, %arg1: i32) -> (i32, i32) {
    %c0_i32 = arith.constant 0 : i32
    %c0_i32_0 = arith.constant 0 : i32
    %c0_i32_1 = arith.constant 0 : i32
    return %c0_i32, %c0_i32_0 : i32, i32
  }
  func.func @transform_8(%arg0: i32, %arg1: i32) -> (i32, i32) {
    %c0_i32 = arith.constant 0 : i32
    %c0_i32_0 = arith.constant 0 : i32
    %c0_i32_1 = arith.constant 0 : i32
    return %c0_i32, %c0_i32_0 : i32, i32
  }
  func.func @transform_9(%arg0: i32, %arg1: i32) -> (i32, i32) {
    %c0_i32 = arith.constant 0 : i32
    %c0_i32_0 = arith.constant 0 : i32
    %c0_i32_1 = arith.constant 0 : i32
    return %c0_i32, %c0_i32_0 : i32, i32
  }
  func.func @transform_10(%arg0: i32, %arg1: i32) -> (i32, i32) {
    %c0_i32 = arith.constant 0 : i32
    %c0_i32_0 = arith.constant 0 : i32
    %c0_i32_1 = arith.constant 0 : i32
    return %c0_i32, %c0_i32_0 : i32, i32
  }
  func.func @transform_11(%arg0: i32, %arg1: i32) -> (i32, i32) {
    %c0_i32 = arith.constant 0 : i32
    %c0_i32_0 = arith.constant 0 : i32
    %c0_i32_1 = arith.constant 0 : i32
    return %c0_i32, %c0_i32_0 : i32, i32
  }
  func.func @transform_12(%arg0: i32, %arg1: i32) -> (i32, i32) {
    %c0_i32 = arith.constant 0 : i32
    %c0_i32_0 = arith.constant 0 : i32
    %c0_i32_1 = arith.constant 0 : i32
    return %c0_i32, %c0_i32_0 : i32, i32
  }
  func.func @transform_13(%arg0: i32, %arg1: i32) -> (i32, i32) {
    %c0_i32 = arith.constant 0 : i32
    %c0_i32_0 = arith.constant 0 : i32
    %c0_i32_1 = arith.constant 0 : i32
    return %c0_i32, %c0_i32_0 : i32, i32
  }
  func.func @transform_14(%arg0: i32, %arg1: i32) -> (i32, i32) {
    %c0_i32 = arith.constant 0 : i32
    %c0_i32_0 = arith.constant 0 : i32
    %c0_i32_1 = arith.constant 0 : i32
    return %c0_i32, %c0_i32_0 : i32, i32
  }
  func.func @transform_15(%arg0: i32, %arg1: i32) -> (i32, i32) {
    %c0_i32 = arith.constant 0 : i32
    %c0_i32_0 = arith.constant 0 : i32
    %c0_i32_1 = arith.constant 0 : i32
    return %c0_i32, %c0_i32_0 : i32, i32
  }
  func.func @transform_16(%arg0: i32, %arg1: i32) -> (i32, i32) {
    %c0_i32 = arith.constant 0 : i32
    %c0_i32_0 = arith.constant 0 : i32
    %c0_i32_1 = arith.constant 0 : i32
    return %c0_i32, %c0_i32_0 : i32, i32
  }
  func.func @transform_17(%arg0: i32, %arg1: i32) -> (i32, i32, i32, i32) {
    %c0_i32 = arith.constant 0 : i32
    %c0_i32_0 = arith.constant 0 : i32
    %c0_i32_1 = arith.constant 0 : i32
    return %arg0, %arg1, %c0_i32, %c0_i32_0 : i32, i32, i32, i32
  }
}

</mosaic_0001>

<llo_original>
// kernel: tpu_custom_call.1
$region0: #{tpu_custom_call.1}
  #allocation0 [shape = 'u32[]', space=smem, size = 0x4, offset = 0x4, fixed_abs, tag = 'smem constant byte address 0x4 - core index']
  #allocation1 [shape = 'u32[144,128]{1,0:T(1,128)}', space=vmem, size = 0x12000, scoped, tag = 'internal scratch']
  #allocation2 [shape = 'f32[10,16,32]{2,1,0:T(8,128)}', space=vmem, size = 0x14000, scoped, tag = 'scratch operand']
  %s0 = inlined_call_operand.vmem [shape: f32[2,16,16,4], index: 0, kind: input, shape index: {}]
  %s1 = inlined_call_operand.vmem [shape: f32[2,16,16,4], index: 1, kind: input, shape index: {}]
  %s2 = inlined_call_operand.vmem [shape: f32[2,16,16,4], index: 2, kind: input, shape index: {}]
  %s3 = inlined_call_operand.vmem [shape: f32[2,16,16,4], index: 3, kind: input, shape index: {}]
  %s4 = inlined_call_operand.vmem [shape: f32[2,16,16,4], index: 4, kind: input, shape index: {}]
  %s5 = inlined_call_operand.vmem [shape: f32[9,4], index: 5, kind: input, shape index: {}]
  %s6 = inlined_call_operand.vmem [shape: f32[1,4], index: 6, kind: input, shape index: {}]
  %s7 = inlined_call_operand.vmem [shape: f32[4,8], index: 7, kind: input, shape index: {}]
  %s8 = inlined_call_operand.vmem [shape: f32[1,8], index: 8, kind: input, shape index: {}]
  %s9 = inlined_call_operand.vmem [shape: f32[1,8], index: 9, kind: input, shape index: {}]
  %s10 = inlined_call_operand.vmem [shape: f32[1,8], index: 10, kind: input, shape index: {}]
  %s11 = inlined_call_operand.vmem [shape: f32[8,32], index: 11, kind: input, shape index: {}]
  %s12 = inlined_call_operand.vmem [shape: f32[1,32], index: 12, kind: input, shape index: {}]
  %s13 = inlined_call_operand.vmem [shape: f32[9,32], index: 13, kind: input, shape index: {}]
  %s14 = inlined_call_operand.vmem [shape: f32[1,32], index: 14, kind: input, shape index: {}]
  %s15 = inlined_call_operand.vmem [shape: f32[16,8], index: 15, kind: input, shape index: {}]
  %s16 = inlined_call_operand.vmem [shape: f32[1,8], index: 16, kind: input, shape index: {}]
  %s17 = inlined_call_operand.vmem [shape: f32[2,16,16,8], index: 17, kind: output, shape index: {}]
  %s18 = sld [smem:[#allocation0]]
  $region109: #{tpu_custom_call.1} parent=0
    _
  %s20 = ssub.s32 1, %s18
  %s21 = scalar_select 0, %s20, %s18
  loop: start=0, step=1, limit=6
  $region2: #{tpu_custom_call.1} parent=0 // loop_pre_header
    _
  $region3: #{tpu_custom_call.1} parent=0 // loop_header
    %s23 = sphi 0, %s27
    %p24 = scmp.ge.s32.totalorder %s23, 6
    %s30 = sphi 0, %s42
    %s31 = sphi 0, %s38
    %s32 = sphi 0, %s30
    %s33 = sphi 0, %s31
    %s34 = sphi 0, %s32
    %s35 = sphi 0, %s33
    %s47 = sphi 0, %s49
    %s50 = sphi 0, %s47
    %s51 = sphi 0, %s50
    %s67 = sphi 0, %s51
    %s87 = sphi 0, %s89
    %s90 = sphi 0, %s87
    %s91 = sphi 0, %s90
    %s107 = sphi 0, %s91
    %s127 = sphi 0, %s129
    %s130 = sphi 0, %s127
    %s131 = sphi 0, %s130
    %s147 = sphi 0, %s131
    %s167 = sphi 0, %s169
    %s170 = sphi 0, %s167
    %s171 = sphi 0, %s170
    %s187 = sphi 0, %s171
    %s207 = sphi 0, %s209
    %s210 = sphi 0, %s207
    %s211 = sphi 0, %s210
    %s227 = sphi 0, %s211
    %s231 = sphi 0, %s231
    %s233 = sphi 0, %s231
    %s234 = sphi 0, %s233
    %s248 = sphi 0, %s234
    %s252 = sphi 0, %s252
    %s254 = sphi 0, %s252
    %s255 = sphi 0, %s254
    %s269 = sphi 0, %s255
    %s273 = sphi 0, %s273
    %s275 = sphi 0, %s273
    %s276 = sphi 0, %s275
    %s290 = sphi 0, %s276
    %s294 = sphi 0, %s294
    %s296 = sphi 0, %s294
    %s297 = sphi 0, %s296
    %s311 = sphi 0, %s297
    %s315 = sphi 0, %s315
    %s317 = sphi 0, %s315
    %s318 = sphi 0, %s317
    %s332 = sphi 0, %s318
    %s336 = sphi 0, %s336
    %s338 = sphi 0, %s336
    %s339 = sphi 0, %s338
    %s353 = sphi 0, %s339
    %s357 = sphi 0, %s357
    %s359 = sphi 0, %s357
    %s360 = sphi 0, %s359
    %s374 = sphi 0, %s360
    %s378 = sphi 0, %s378
    %s380 = sphi 0, %s378
    %s381 = sphi 0, %s380
    %s395 = sphi 0, %s381
    %s399 = sphi 0, %s399
    %s401 = sphi 0, %s399
    %s402 = sphi 0, %s401
    %s416 = sphi 0, %s402
    %s420 = sphi 0, %s420
    %s422 = sphi 0, %s420
    %s423 = sphi 0, %s422
    %s437 = sphi 0, %s423
    %s441 = sphi 0, %s441
    %s443 = sphi 0, %s441
    %s444 = sphi 0, %s443
    %s458 = sphi 0, %s444
    %s462 = sphi 0, %s462
    %s464 = sphi 0, %s462
    %s465 = sphi 0, %s464
    %s479 = sphi 0, %s465
    %s487 = sphi 0, %s489
    %s490 = sphi 0, %s487
    %s491 = sphi 0, %s490
    %s507 = sphi 0, %s491
  $region4: #{tpu_custom_call.1} parent=0 // loop_header_branch
    %26 = sbr.rel (%p24) target = $region8
  $region5: #{tpu_custom_call.1} parent=0 // loop_body
    %s28 = ssub.s32 %s23, 1
    %s29 = ssub.s32 %s23, 2
    %s36 = sadd.s32 1, %s31
    %p37 = scmp.ge.s32.totalorder %s36, 2
    %s38 = scalar_select %p37, 0, %s36
    %s39 = sadd.s32 1, %s30
    %s40 = scalar_select %p37, %s39, %s30
    %p41 = scmp.ge.s32.totalorder %s40, 2
    %s42 = scalar_select %p41, 0, %s40
    %s43 = ssub.s32 %s30, %s42
    %s44 = ssub.s32 %s31, %s38
    %s45 = sor.u32 %s43, %s44
    %p46 = scmp.eq.s32.totalorder %s45, 0
    %s48 = sadd.s32 %s47, 1
    %s49 = scalar_select %p46, %s47, %s48
    %p52 = pneg %p46
    %p53 = scmp.eq.s32.totalorder %s23, 3
    %p54 = por %p52, %p53
    %p55 = scmp.ne.s32.totalorder %s47, %s50
    %p56 = scmp.eq.s32.totalorder %s23, 0
    %p57 = por %p55, %p56
    %p58 = scmp.ne.s32.totalorder %s47, %s50
    %p59 = scmp.eq.s32.totalorder %s28, 3
    %p60 = por %p58, %p59
    %p61 = scmp.ne.s32.totalorder %s50, %s51
    %p62 = scmp.eq.s32.totalorder %s28, 0
    %p63 = por %p61, %p62
    %p64 = scmp.ne.s32.totalorder %s50, %s51
    %p65 = scmp.eq.s32.totalorder %s29, 3
    %p66 = por %p64, %p65
    %p68 = scmp.ne.s32.totalorder %s51, %s67
    %p69 = scmp.eq.s32.totalorder %s29, 0
    %p70 = por %p68, %p69
    %s71 = smul.u32 %s31, 8
    %s72 = sadd.s32 %s71, 4294967294
    %p73 = scmp.gt.s32.totalorder %s72, 0
    %s74 = scalar_select %p73, %s72, 0
    %p75 = scmp.lt.s32.totalorder %s74, 15
    %s76 = scalar_select %p75, %s74, 15
    %s77 = smul.u32 %s38, 8
    %s78 = sadd.s32 %s77, 4294967294
    %p79 = scmp.gt.s32.totalorder %s78, 0
    %s80 = scalar_select %p79, %s78, 0
    %p81 = scmp.lt.s32.totalorder %s80, 15
    %s82 = scalar_select %p81, %s80, 15
    %s83 = ssub.s32 %s30, %s42
    %s84 = ssub.s32 %s76, %s82
    %s85 = sor.u32 %s83, %s84
    %p86 = scmp.eq.s32.totalorder %s85, 0
    %s88 = sadd.s32 %s87, 1
    %s89 = scalar_select %p86, %s87, %s88
    %p92 = pneg %p86
    %p93 = scmp.eq.s32.totalorder %s23, 3
    %p94 = por %p92, %p93
    %p95 = scmp.ne.s32.totalorder %s87, %s90
    %p96 = scmp.eq.s32.totalorder %s23, 0
    %p97 = por %p95, %p96
    %p98 = scmp.ne.s32.totalorder %s87, %s90
    %p99 = scmp.eq.s32.totalorder %s28, 3
    %p100 = por %p98, %p99
    %p101 = scmp.ne.s32.totalorder %s90, %s91
    %p102 = scmp.eq.s32.totalorder %s28, 0
    %p103 = por %p101, %p102
    %p104 = scmp.ne.s32.totalorder %s90, %s91
    %p105 = scmp.eq.s32.totalorder %s29, 3
    %p106 = por %p104, %p105
    %p108 = scmp.ne.s32.totalorder %s91, %s107
    %p109 = scmp.eq.s32.totalorder %s29, 0
    %p110 = por %p108, %p109
    %s111 = smul.u32 %s31, 8
    %s112 = sadd.s32 %s111, 4294967295
    %p113 = scmp.gt.s32.totalorder %s112, 0
    %s114 = scalar_select %p113, %s112, 0
    %p115 = scmp.lt.s32.totalorder %s114, 15
    %s116 = scalar_select %p115, %s114, 15
    %s117 = smul.u32 %s38, 8
    %s118 = sadd.s32 %s117, 4294967295
    %p119 = scmp.gt.s32.totalorder %s118, 0
    %s120 = scalar_select %p119, %s118, 0
    %p121 = scmp.lt.s32.totalorder %s120, 15
    %s122 = scalar_select %p121, %s120, 15
    %s123 = ssub.s32 %s30, %s42
    %s124 = ssub.s32 %s116, %s122
    %s125 = sor.u32 %s123, %s124
    %p126 = scmp.eq.s32.totalorder %s125, 0
    %s128 = sadd.s32 %s127, 1
    %s129 = scalar_select %p126, %s127, %s128
    %p132 = pneg %p126
    %p133 = scmp.eq.s32.totalorder %s23, 3
    %p134 = por %p132, %p133
    %p135 = scmp.ne.s32.totalorder %s127, %s130
    %p136 = scmp.eq.s32.totalorder %s23, 0
    %p137 = por %p135, %p136
    %p138 = scmp.ne.s32.totalorder %s127, %s130
    %p139 = scmp.eq.s32.totalorder %s28, 3
    %p140 = por %p138, %p139
    %p141 = scmp.ne.s32.totalorder %s130, %s131
    %p142 = scmp.eq.s32.totalorder %s28, 0
    %p143 = por %p141, %p142
    %p144 = scmp.ne.s32.totalorder %s130, %s131
    %p145 = scmp.eq.s32.totalorder %s29, 3
    %p146 = por %p144, %p145
    %p148 = scmp.ne.s32.totalorder %s131, %s147
    %p149 = scmp.eq.s32.totalorder %s29, 0
    %p150 = por %p148, %p149
    %s151 = smul.u32 %s31, 8
    %s152 = sadd.s32 %s151, 8
    %p153 = scmp.gt.s32.totalorder %s152, 0
    %s154 = scalar_select %p153, %s152, 0
    %p155 = scmp.lt.s32.totalorder %s154, 15
    %s156 = scalar_select %p155, %s154, 15
    %s157 = smul.u32 %s38, 8
    %s158 = sadd.s32 %s157, 8
    %p159 = scmp.gt.s32.totalorder %s158, 0
    %s160 = scalar_select %p159, %s158, 0
    %p161 = scmp.lt.s32.totalorder %s160, 15
    %s162 = scalar_select %p161, %s160, 15
    %s163 = ssub.s32 %s30, %s42
    %s164 = ssub.s32 %s156, %s162
    %s165 = sor.u32 %s163, %s164
    %p166 = scmp.eq.s32.totalorder %s165, 0
    %s168 = sadd.s32 %s167, 1
    %s169 = scalar_select %p166, %s167, %s168
    %p172 = pneg %p166
    %p173 = scmp.eq.s32.totalorder %s23, 3
    %p174 = por %p172, %p173
    %p175 = scmp.ne.s32.totalorder %s167, %s170
    %p176 = scmp.eq.s32.totalorder %s23, 0
    %p177 = por %p175, %p176
    %p178 = scmp.ne.s32.totalorder %s167, %s170
    %p179 = scmp.eq.s32.totalorder %s28, 3
    %p180 = por %p178, %p179
    %p181 = scmp.ne.s32.totalorder %s170, %s171
    %p182 = scmp.eq.s32.totalorder %s28, 0
    %p183 = por %p181, %p182
    %p184 = scmp.ne.s32.totalorder %s170, %s171
    %p185 = scmp.eq.s32.totalorder %s29, 3
    %p186 = por %p184, %p185
    %p188 = scmp.ne.s32.totalorder %s171, %s187
    %p189 = scmp.eq.s32.totalorder %s29, 0
    %p190 = por %p188, %p189
    %s191 = smul.u32 %s31, 8
    %s192 = sadd.s32 %s191, 9
    %p193 = scmp.gt.s32.totalorder %s192, 0
    %s194 = scalar_select %p193, %s192, 0
    %p195 = scmp.lt.s32.totalorder %s194, 15
    %s196 = scalar_select %p195, %s194, 15
    %s197 = smul.u32 %s38, 8
    %s198 = sadd.s32 %s197, 9
    %p199 = scmp.gt.s32.totalorder %s198, 0
    %s200 = scalar_select %p199, %s198, 0
    %p201 = scmp.lt.s32.totalorder %s200, 15
    %s202 = scalar_select %p201, %s200, 15
    %s203 = ssub.s32 %s30, %s42
    %s204 = ssub.s32 %s196, %s202
    %s205 = sor.u32 %s203, %s204
    %p206 = scmp.eq.s32.totalorder %s205, 0
    %s208 = sadd.s32 %s207, 1
    %s209 = scalar_select %p206, %s207, %s208
    %p212 = pneg %p206
    %p213 = scmp.eq.s32.totalorder %s23, 3
    %p214 = por %p212, %p213
    %p215 = scmp.ne.s32.totalorder %s207, %s210
    %p216 = scmp.eq.s32.totalorder %s23, 0
    %p217 = por %p215, %p216
    %p218 = scmp.ne.s32.totalorder %s207, %s210
    %p219 = scmp.eq.s32.totalorder %s28, 3
    %p220 = por %p218, %p219
    %p221 = scmp.ne.s32.totalorder %s210, %s211
    %p222 = scmp.eq.s32.totalorder %s28, 0
    %p223 = por %p221, %p222
    %p224 = scmp.ne.s32.totalorder %s210, %s211
    %p225 = scmp.eq.s32.totalorder %s29, 3
    %p226 = por %p224, %p225
    %p228 = scmp.ne.s32.totalorder %s211, %s227
    %p229 = scmp.eq.s32.totalorder %s29, 0
    %p230 = por %p228, %p229
    %s232 = sadd.s32 %s231, 1
    %p235 = scmp.eq.s32.totalorder %s23, 3
    %p236 = scmp.ne.s32.totalorder %s231, %s233
    %p237 = scmp.eq.s32.totalorder %s23, 0
    %p238 = por %p236, %p237
    %p239 = scmp.ne.s32.totalorder %s231, %s233
    %p240 = scmp.eq.s32.totalorder %s28, 3
    %p241 = por %p239, %p240
    %p242 = scmp.ne.s32.totalorder %s233, %s234
    %p243 = scmp.eq.s32.totalorder %s28, 0
    %p244 = por %p242, %p243
    %p245 = scmp.ne.s32.totalorder %s233, %s234
    %p246 = scmp.eq.s32.totalorder %s29, 3
    %p247 = por %p245, %p246
    %p249 = scmp.ne.s32.totalorder %s234, %s248
    %p250 = scmp.eq.s32.totalorder %s29, 0
    %p251 = por %p249, %p250
    %s253 = sadd.s32 %s252, 1
    %p256 = scmp.eq.s32.totalorder %s23, 3
    %p257 = scmp.ne.s32.totalorder %s252, %s254
    %p258 = scmp.eq.s32.totalorder %s23, 0
    %p259 = por %p257, %p258
    %p260 = scmp.ne.s32.totalorder %s252, %s254
    %p261 = scmp.eq.s32.totalorder %s28, 3
    %p262 = por %p260, %p261
    %p263 = scmp.ne.s32.totalorder %s254, %s255
    %p264 = scmp.eq.s32.totalorder %s28, 0
    %p265 = por %p263, %p264
    %p266 = scmp.ne.s32.totalorder %s254, %s255
    %p267 = scmp.eq.s32.totalorder %s29, 3
    %p268 = por %p266, %p267
    %p270 = scmp.ne.s32.totalorder %s255, %s269
    %p271 = scmp.eq.s32.totalorder %s29, 0
    %p272 = por %p270, %p271
    %s274 = sadd.s32 %s273, 1
    %p277 = scmp.eq.s32.totalorder %s23, 3
    %p278 = scmp.ne.s32.totalorder %s273, %s275
    %p279 = scmp.eq.s32.totalorder %s23, 0
    %p280 = por %p278, %p279
    %p281 = scmp.ne.s32.totalorder %s273, %s275
    %p282 = scmp.eq.s32.totalorder %s28, 3
    %p283 = por %p281, %p282
    %p284 = scmp.ne.s32.totalorder %s275, %s276
    %p285 = scmp.eq.s32.totalorder %s28, 0
    %p286 = por %p284, %p285
    %p287 = scmp.ne.s32.totalorder %s275, %s276
    %p288 = scmp.eq.s32.totalorder %s29, 3
    %p289 = por %p287, %p288
    %p291 = scmp.ne.s32.totalorder %s276, %s290
    %p292 = scmp.eq.s32.totalorder %s29, 0
    %p293 = por %p291, %p292
    %s295 = sadd.s32 %s294, 1
    %p298 = scmp.eq.s32.totalorder %s23, 3
    %p299 = scmp.ne.s32.totalorder %s294, %s296
    %p300 = scmp.eq.s32.totalorder %s23, 0
    %p301 = por %p299, %p300
    %p302 = scmp.ne.s32.totalorder %s294, %s296
    %p303 = scmp.eq.s32.totalorder %s28, 3
    %p304 = por %p302, %p303
    %p305 = scmp.ne.s32.totalorder %s296, %s297
    %p306 = scmp.eq.s32.totalorder %s28, 0
    %p307 = por %p305, %p306
    %p308 = scmp.ne.s32.totalorder %s296, %s297
    %p309 = scmp.eq.s32.totalorder %s29, 3
    %p310 = por %p308, %p309
    %p312 = scmp.ne.s32.totalorder %s297, %s311
    %p313 = scmp.eq.s32.totalorder %s29, 0
    %p314 = por %p312, %p313
    %s316 = sadd.s32 %s315, 1
    %p319 = scmp.eq.s32.totalorder %s23, 3
    %p320 = scmp.ne.s32.totalorder %s315, %s317
    %p321 = scmp.eq.s32.totalorder %s23, 0
    %p322 = por %p320, %p321
    %p323 = scmp.ne.s32.totalorder %s315, %s317
    %p324 = scmp.eq.s32.totalorder %s28, 3
    %p325 = por %p323, %p324
    %p326 = scmp.ne.s32.totalorder %s317, %s318
    %p327 = scmp.eq.s32.totalorder %s28, 0
    %p328 = por %p326, %p327
    %p329 = scmp.ne.s32.totalorder %s317, %s318
    %p330 = scmp.eq.s32.totalorder %s29, 3
    %p331 = por %p329, %p330
    %p333 = scmp.ne.s32.totalorder %s318, %s332
    %p334 = scmp.eq.s32.totalorder %s29, 0
    %p335 = por %p333, %p334
    %s337 = sadd.s32 %s336, 1
    %p340 = scmp.eq.s32.totalorder %s23, 3
    %p341 = scmp.ne.s32.totalorder %s336, %s338
    %p342 = scmp.eq.s32.totalorder %s23, 0
    %p343 = por %p341, %p342
    %p344 = scmp.ne.s32.totalorder %s336, %s338
    %p345 = scmp.eq.s32.totalorder %s28, 3
    %p346 = por %p344, %p345
    %p347 = scmp.ne.s32.totalorder %s338, %s339
    %p348 = scmp.eq.s32.totalorder %s28, 0
    %p349 = por %p347, %p348
    %p350 = scmp.ne.s32.totalorder %s338, %s339
    %p351 = scmp.eq.s32.totalorder %s29, 3
    %p352 = por %p350, %p351
    %p354 = scmp.ne.s32.totalorder %s339, %s353
    %p355 = scmp.eq.s32.totalorder %s29, 0
    %p356 = por %p354, %p355
    %s358 = sadd.s32 %s357, 1
    %p361 = scmp.eq.s32.totalorder %s23, 3
    %p362 = scmp.ne.s32.totalorder %s357, %s359
    %p363 = scmp.eq.s32.totalorder %s23, 0
    %p364 = por %p362, %p363
    %p365 = scmp.ne.s32.totalorder %s357, %s359
    %p366 = scmp.eq.s32.totalorder %s28, 3
    %p367 = por %p365, %p366
    %p368 = scmp.ne.s32.totalorder %s359, %s360
    %p369 = scmp.eq.s32.totalorder %s28, 0
    %p370 = por %p368, %p369
    %p371 = scmp.ne.s32.totalorder %s359, %s360
    %p372 = scmp.eq.s32.totalorder %s29, 3
    %p373 = por %p371, %p372
    %p375 = scmp.ne.s32.totalorder %s360, %s374
    %p376 = scmp.eq.s32.totalorder %s29, 0
    %p377 = por %p375, %p376
    %s379 = sadd.s32 %s378, 1
    %p382 = scmp.eq.s32.totalorder %s23, 3
    %p383 = scmp.ne.s32.totalorder %s378, %s380
    %p384 = scmp.eq.s32.totalorder %s23, 0
    %p385 = por %p383, %p384
    %p386 = scmp.ne.s32.totalorder %s378, %s380
    %p387 = scmp.eq.s32.totalorder %s28, 3
    %p388 = por %p386, %p387
    %p389 = scmp.ne.s32.totalorder %s380, %s381
    %p390 = scmp.eq.s32.totalorder %s28, 0
    %p391 = por %p389, %p390
    %p392 = scmp.ne.s32.totalorder %s380, %s381
    %p393 = scmp.eq.s32.totalorder %s29, 3
    %p394 = por %p392, %p393
    %p396 = scmp.ne.s32.totalorder %s381, %s395
    %p397 = scmp.eq.s32.totalorder %s29, 0
    %p398 = por %p396, %p397
    %s400 = sadd.s32 %s399, 1
    %p403 = scmp.eq.s32.totalorder %s23, 3
    %p404 = scmp.ne.s32.totalorder %s399, %s401
    %p405 = scmp.eq.s32.totalorder %s23, 0
    %p406 = por %p404, %p405
    %p407 = scmp.ne.s32.totalorder %s399, %s401
    %p408 = scmp.eq.s32.totalorder %s28, 3
    %p409 = por %p407, %p408
    %p410 = scmp.ne.s32.totalorder %s401, %s402
    %p411 = scmp.eq.s32.totalorder %s28, 0
    %p412 = por %p410, %p411
    %p413 = scmp.ne.s32.totalorder %s401, %s402
    %p414 = scmp.eq.s32.totalorder %s29, 3
    %p415 = por %p413, %p414
    %p417 = scmp.ne.s32.totalorder %s402, %s416
    %p418 = scmp.eq.s32.totalorder %s29, 0
    %p419 = por %p417, %p418
    %s421 = sadd.s32 %s420, 1
    %p424 = scmp.eq.s32.totalorder %s23, 3
    %p425 = scmp.ne.s32.totalorder %s420, %s422
    %p426 = scmp.eq.s32.totalorder %s23, 0
    %p427 = por %p425, %p426
    %p428 = scmp.ne.s32.totalorder %s420, %s422
    %p429 = scmp.eq.s32.totalorder %s28, 3
    %p430 = por %p428, %p429
    %p431 = scmp.ne.s32.totalorder %s422, %s423
    %p432 = scmp.eq.s32.totalorder %s28, 0
    %p433 = por %p431, %p432
    %p434 = scmp.ne.s32.totalorder %s422, %s423
    %p435 = scmp.eq.s32.totalorder %s29, 3
    %p436 = por %p434, %p435
    %p438 = scmp.ne.s32.totalorder %s423, %s437
    %p439 = scmp.eq.s32.totalorder %s29, 0
    %p440 = por %p438, %p439
    %s442 = sadd.s32 %s441, 1
    %p445 = scmp.eq.s32.totalorder %s23, 3
    %p446 = scmp.ne.s32.totalorder %s441, %s443
    %p447 = scmp.eq.s32.totalorder %s23, 0
    %p448 = por %p446, %p447
    %p449 = scmp.ne.s32.totalorder %s441, %s443
    %p450 = scmp.eq.s32.totalorder %s28, 3
    %p451 = por %p449, %p450
    %p452 = scmp.ne.s32.totalorder %s443, %s444
    %p453 = scmp.eq.s32.totalorder %s28, 0
    %p454 = por %p452, %p453
    %p455 = scmp.ne.s32.totalorder %s443, %s444
    %p456 = scmp.eq.s32.totalorder %s29, 3
    %p457 = por %p455, %p456
    %p459 = scmp.ne.s32.totalorder %s444, %s458
    %p460 = scmp.eq.s32.totalorder %s29, 0
    %p461 = por %p459, %p460
    %s463 = sadd.s32 %s462, 1
    %p466 = scmp.eq.s32.totalorder %s23, 3
    %p467 = scmp.ne.s32.totalorder %s462, %s464
    %p468 = scmp.eq.s32.totalorder %s23, 0
    %p469 = por %p467, %p468
    %p470 = scmp.ne.s32.totalorder %s462, %s464
    %p471 = scmp.eq.s32.totalorder %s28, 3
    %p472 = por %p470, %p471
    %p473 = scmp.ne.s32.totalorder %s464, %s465
    %p474 = scmp.eq.s32.totalorder %s28, 0
    %p475 = por %p473, %p474
    %p476 = scmp.ne.s32.totalorder %s464, %s465
    %p477 = scmp.eq.s32.totalorder %s29, 3
    %p478 = por %p476, %p477
    %p480 = scmp.ne.s32.totalorder %s465, %s479
    %p481 = scmp.eq.s32.totalorder %s29, 0
    %p482 = por %p480, %p481
    %s483 = ssub.s32 %s30, %s42
    %s484 = ssub.s32 %s31, %s38
    %s485 = sor.u32 %s483, %s484
    %p486 = scmp.eq.s32.totalorder %s485, 0
    %s488 = sadd.s32 %s487, 1
    %s489 = scalar_select %p486, %s487, %s488
    %p492 = pneg %p486
    %p493 = scmp.eq.s32.totalorder %s23, 3
    %p494 = por %p492, %p493
    %p495 = scmp.ne.s32.totalorder %s487, %s490
    %p496 = scmp.eq.s32.totalorder %s23, 0
    %p497 = por %p495, %p496
    %p498 = scmp.ne.s32.totalorder %s487, %s490
    %p499 = scmp.eq.s32.totalorder %s28, 3
    %p500 = por %p498, %p499
    %p501 = scmp.ne.s32.totalorder %s490, %s491
    %p502 = scmp.eq.s32.totalorder %s28, 0
    %p503 = por %p501, %p502
    %p504 = scmp.ne.s32.totalorder %s490, %s491
    %p505 = scmp.eq.s32.totalorder %s29, 3
    %p506 = por %p504, %p505
    %p508 = scmp.ne.s32.totalorder %s491, %s507
    %p509 = scmp.eq.s32.totalorder %s29, 0
    %p510 = por %p508, %p509
    %p511 = scmp.le.s32.totalorder 1, %s23
    %p512 = scmp.lt.s32.totalorder %s23, 5
    %p513 = pnand %p511, %p512
    %p514 = pneg %p513
    // Predicated region
    $region9: #{tpu_custom_call.1} parent=5 // pred_check
      _
    $region10: #{tpu_custom_call.1} parent=5 // pred_check_branch
      %516 = sbr.rel (%p513) target = $region12
    $region11: #{tpu_custom_call.1} parent=5 // pred_region
      %s517 = ssub.s32 %s23, 1
      // Predicated region
      $region13: #{tpu_custom_call.1} parent=11 // pred_check
        %p518 = pneg %p244
      $region14: #{tpu_custom_call.1} parent=11 // pred_check_branch
        %520 = sbr.rel (%p518) target = $region16
      $region15: #{tpu_custom_call.1} parent=11 // pred_region
        _
      $region16: #{tpu_custom_call.1} parent=11 // pred_fallthru
        _
      // Predicated region
      $region17: #{tpu_custom_call.1} parent=11 // pred_check
        %p521 = pneg %p265
      $region18: #{tpu_custom_call.1} parent=11 // pred_check_branch
        %523 = sbr.rel (%p521) target = $region20
      $region19: #{tpu_custom_call.1} parent=11 // pred_region
        _
      $region20: #{tpu_custom_call.1} parent=11 // pred_fallthru
        _
      // Predicated region
      $region21: #{tpu_custom_call.1} parent=11 // pred_check
        %p524 = pneg %p286
      $region22: #{tpu_custom_call.1} parent=11 // pred_check_branch
        %526 = sbr.rel (%p524) target = $region24
      $region23: #{tpu_custom_call.1} parent=11 // pred_region
        _
      $region24: #{tpu_custom_call.1} parent=11 // pred_fallthru
        _
      // Predicated region
      $region25: #{tpu_custom_call.1} parent=11 // pred_check
        %p527 = pneg %p307
      $region26: #{tpu_custom_call.1} parent=11 // pred_check_branch
        %529 = sbr.rel (%p527) target = $region28
      $region27: #{tpu_custom_call.1} parent=11 // pred_region
        _
      $region28: #{tpu_custom_call.1} parent=11 // pred_fallthru
        _
      // Predicated region
      $region29: #{tpu_custom_call.1} parent=11 // pred_check
        %p530 = pneg %p328
      $region30: #{tpu_custom_call.1} parent=11 // pred_check_branch
        %532 = sbr.rel (%p530) target = $region32
      $region31: #{tpu_custom_call.1} parent=11 // pred_region
        _
      $region32: #{tpu_custom_call.1} parent=11 // pred_fallthru
        _
      // Predicated region
      $region33: #{tpu_custom_call.1} parent=11 // pred_check
        %p533 = pneg %p349
      $region34: #{tpu_custom_call.1} parent=11 // pred_check_branch
        %535 = sbr.rel (%p533) target = $region36
      $region35: #{tpu_custom_call.1} parent=11 // pred_region
        _
      $region36: #{tpu_custom_call.1} parent=11 // pred_fallthru
        _
      // Predicated region
      $region37: #{tpu_custom_call.1} parent=11 // pred_check
        %p536 = pneg %p370
      $region38: #{tpu_custom_call.1} parent=11 // pred_check_branch
        %538 = sbr.rel (%p536) target = $region40
      $region39: #{tpu_custom_call.1} parent=11 // pred_region
        _
      $region40: #{tpu_custom_call.1} parent=11 // pred_fallthru
        _
      // Predicated region
      $region41: #{tpu_custom_call.1} parent=11 // pred_check
        %p539 = pneg %p391
      $region42: #{tpu_custom_call.1} parent=11 // pred_check_branch
        %541 = sbr.rel (%p539) target = $region44
      $region43: #{tpu_custom_call.1} parent=11 // pred_region
        _
      $region44: #{tpu_custom_call.1} parent=11 // pred_fallthru
        _
      // Predicated region
      $region45: #{tpu_custom_call.1} parent=11 // pred_check
        %p542 = pneg %p412
      $region46: #{tpu_custom_call.1} parent=11 // pred_check_branch
        %544 = sbr.rel (%p542) target = $region48
      $region47: #{tpu_custom_call.1} parent=11 // pred_region
        _
      $region48: #{tpu_custom_call.1} parent=11 // pred_fallthru
        _
      // Predicated region
      $region49: #{tpu_custom_call.1} parent=11 // pred_check
        %p545 = pneg %p433
      $region50: #{tpu_custom_call.1} parent=11 // pred_check_branch
        %547 = sbr.rel (%p545) target = $region52
      $region51: #{tpu_custom_call.1} parent=11 // pred_region
        _
      $region52: #{tpu_custom_call.1} parent=11 // pred_fallthru
        _
      // Predicated region
      $region53: #{tpu_custom_call.1} parent=11 // pred_check
        %p548 = pneg %p454
      $region54: #{tpu_custom_call.1} parent=11 // pred_check_branch
        %550 = sbr.rel (%p548) target = $region56
      $region55: #{tpu_custom_call.1} parent=11 // pred_region
        _
      $region56: #{tpu_custom_call.1} parent=11 // pred_fallthru
        _
      // Predicated region
      $region57: #{tpu_custom_call.1} parent=11 // pred_check
        %p551 = pneg %p475
      $region58: #{tpu_custom_call.1} parent=11 // pred_check_branch
        %553 = sbr.rel (%p551) target = $region60
      $region59: #{tpu_custom_call.1} parent=11 // pred_region
        _
      $region60: #{tpu_custom_call.1} parent=11 // pred_fallthru
        _
    $region12: #{tpu_custom_call.1} parent=5 // pred_fallthru
      _
    %p554 = scmp.lt.s32.totalorder %s23, 4
    // Predicated region
    $region61: #{tpu_custom_call.1} parent=5 // pred_check
      %p555 = pneg %p554
    $region62: #{tpu_custom_call.1} parent=5 // pred_check_branch
      %557 = sbr.rel (%p555) target = $region64
    $region63: #{tpu_custom_call.1} parent=5 // pred_region
      // Predicated region
      $region65: #{tpu_custom_call.1} parent=63 // pred_check
        %p558 = pneg %p57
      $region66: #{tpu_custom_call.1} parent=63 // pred_check_branch
        %560 = sbr.rel (%p558) target = $region68
      $region67: #{tpu_custom_call.1} parent=63 // pred_region
        %s561 = smul.u32 8, %s31
        %p562 = scmp.lt.s32.totalorder %s30, 1
        %s563 = scalar_select %p562, %s30, 1
        %p564 = scmp.lt.s32.totalorder %s561, 15
        %s565 = scalar_select %p564, %s561, 15
        %s566 = smul.addr %s565, 2
        %s567 = smul.addr %s563, 32
        %s568 = sadd.s32 %s566, %s567
        %s569 = smul.addr %s568, 8
        %s570 = scalar_lea.vmem %s0, %s569
        %s571 = smul.u32 8, %s31
      $region68: #{tpu_custom_call.1} parent=63 // pred_fallthru
        _
      // Predicated region
      $region69: #{tpu_custom_call.1} parent=63 // pred_check
        %p572 = pneg %p97
      $region70: #{tpu_custom_call.1} parent=63 // pred_check_branch
        %574 = sbr.rel (%p572) target = $region72
      $region71: #{tpu_custom_call.1} parent=63 // pred_region
        %s575 = smul.u32 %s31, 8
        %s576 = sadd.s32 %s575, 4294967294
        %p577 = scmp.gt.s32.totalorder %s576, 0
        %s578 = scalar_select %p577, %s576, 0
        %p579 = scmp.lt.s32.totalorder %s578, 15
        %s580 = scalar_select %p579, %s578, 15
        %p581 = scmp.lt.s32.totalorder %s30, 1
        %s582 = scalar_select %p581, %s30, 1
        %p583 = scmp.lt.s32.totalorder %s580, 15
        %s584 = scalar_select %p583, %s580, 15
        %s585 = smul.addr %s584, 2
        %s586 = smul.addr %s582, 32
        %s587 = sadd.s32 %s585, %s586
        %s588 = smul.addr %s587, 8
        %s589 = scalar_lea.vmem %s1, %s588
        %s590 = smul.u32 %s31, 8
        %s591 = sadd.s32 %s590, 4294967294
        %p592 = scmp.gt.s32.totalorder %s591, 0
        %s593 = scalar_select %p592, %s591, 0
        %p594 = scmp.lt.s32.totalorder %s593, 15
        %s595 = scalar_select %p594, %s593, 15
      $region72: #{tpu_custom_call.1} parent=63 // pred_fallthru
        _
      // Predicated region
      $region73: #{tpu_custom_call.1} parent=63 // pred_check
        %p596 = pneg %p137
      $region74: #{tpu_custom_call.1} parent=63 // pred_check_branch
        %598 = sbr.rel (%p596) target = $region76
      $region75: #{tpu_custom_call.1} parent=63 // pred_region
        %s599 = smul.u32 %s31, 8
        %s600 = sadd.s32 %s599, 4294967295
        %p601 = scmp.gt.s32.totalorder %s600, 0
        %s602 = scalar_select %p601, %s600, 0
        %p603 = scmp.lt.s32.totalorder %s602, 15
        %s604 = scalar_select %p603, %s602, 15
        %p605 = scmp.lt.s32.totalorder %s30, 1
        %s606 = scalar_select %p605, %s30, 1
        %p607 = scmp.lt.s32.totalorder %s604, 15
        %s608 = scalar_select %p607, %s604, 15
        %s609 = smul.addr %s608, 2
        %s610 = smul.addr %s606, 32
        %s611 = sadd.s32 %s609, %s610
        %s612 = smul.addr %s611, 8
        %s613 = scalar_lea.vmem %s2, %s612
        %s614 = smul.u32 %s31, 8
        %s615 = sadd.s32 %s614, 4294967295
        %p616 = scmp.gt.s32.totalorder %s615, 0
        %s617 = scalar_select %p616, %s615, 0
        %p618 = scmp.lt.s32.totalorder %s617, 15
        %s619 = scalar_select %p618, %s617, 15
      $region76: #{tpu_custom_call.1} parent=63 // pred_fallthru
        _
      // Predicated region
      $region77: #{tpu_custom_call.1} parent=63 // pred_check
        %p620 = pneg %p177
      $region78: #{tpu_custom_call.1} parent=63 // pred_check_branch
        %622 = sbr.rel (%p620) target = $region80
      $region79: #{tpu_custom_call.1} parent=63 // pred_region
        %s623 = smul.u32 %s31, 8
        %s624 = sadd.s32 %s623, 8
        %p625 = scmp.gt.s32.totalorder %s624, 0
        %s626 = scalar_select %p625, %s624, 0
        %p627 = scmp.lt.s32.totalorder %s626, 15
        %s628 = scalar_select %p627, %s626, 15
        %p629 = scmp.lt.s32.totalorder %s30, 1
        %s630 = scalar_select %p629, %s30, 1
        %p631 = scmp.lt.s32.totalorder %s628, 15
        %s632 = scalar_select %p631, %s628, 15
        %s633 = smul.addr %s632, 2
        %s634 = smul.addr %s630, 32
        %s635 = sadd.s32 %s633, %s634
        %s636 = smul.addr %s635, 8
        %s637 = scalar_lea.vmem %s3, %s636
        %s638 = smul.u32 %s31, 8
        %s639 = sadd.s32 %s638, 8
        %p640 = scmp.gt.s32.totalorder %s639, 0
        %s641 = scalar_select %p640, %s639, 0
        %p642 = scmp.lt.s32.totalorder %s641, 15
        %s643 = scalar_select %p642, %s641, 15
      $region80: #{tpu_custom_call.1} parent=63 // pred_fallthru
        _
      // Predicated region
      $region81: #{tpu_custom_call.1} parent=63 // pred_check
        %p644 = pneg %p217
      $region82: #{tpu_custom_call.1} parent=63 // pred_check_branch
        %646 = sbr.rel (%p644) target = $region84
      $region83: #{tpu_custom_call.1} parent=63 // pred_region
        %s647 = smul.u32 %s31, 8
        %s648 = sadd.s32 %s647, 9
        %p649 = scmp.gt.s32.totalorder %s648, 0
        %s650 = scalar_select %p649, %s648, 0
        %p651 = scmp.lt.s32.totalorder %s650, 15
        %s652 = scalar_select %p651, %s650, 15
        %p653 = scmp.lt.s32.totalorder %s30, 1
        %s654 = scalar_select %p653, %s30, 1
        %p655 = scmp.lt.s32.totalorder %s652, 15
        %s656 = scalar_select %p655, %s652, 15
        %s657 = smul.addr %s656, 2
        %s658 = smul.addr %s654, 32
        %s659 = sadd.s32 %s657, %s658
        %s660 = smul.addr %s659, 8
        %s661 = scalar_lea.vmem %s4, %s660
        %s662 = smul.u32 %s31, 8
        %s663 = sadd.s32 %s662, 9
        %p664 = scmp.gt.s32.totalorder %s663, 0
        %s665 = scalar_select %p664, %s663, 0
        %p666 = scmp.lt.s32.totalorder %s665, 15
        %s667 = scalar_select %p666, %s665, 15
      $region84: #{tpu_custom_call.1} parent=63 // pred_fallthru
        _
    $region64: #{tpu_custom_call.1} parent=5 // pred_fallthru
      _
    %p668 = scmp.le.s32.totalorder 1, %s23
    %p669 = scmp.lt.s32.totalorder %s23, 5
    %p670 = pnand %p668, %p669
    %p671 = pneg %p670
    // Predicated region
    $region85: #{tpu_custom_call.1} parent=5 // pred_check
      _
    $region86: #{tpu_custom_call.1} parent=5 // pred_check_branch
      %673 = sbr.rel (%p670) target = $region88
    $region87: #{tpu_custom_call.1} parent=5 // pred_region
      %s674 = ssub.s32 %s23, 1
      %s675 = smul.u32 8, %s33
      %p676 = scmp.lt.s32.totalorder %s32, 1
      %s677 = scalar_select %p676, %s32, 1
      %p678 = scmp.lt.s32.totalorder %s675, 15
      %s679 = scalar_select %p678, %s675, 15
      %s680 = smul.addr %s679, 2
      %s681 = smul.addr %s677, 32
      %s682 = sadd.s32 %s680, %s681
      %s683 = smul.addr %s682, 8
      %s684 = scalar_lea.vmem %s0, %s683
      %p685 = pneg %p63
      %p686 = pneg %p60
      %s687 = smul.u32 %s33, 8
      %s688 = sadd.s32 %s687, 4294967294
      %p689 = scmp.gt.s32.totalorder %s688, 0
      %s690 = scalar_select %p689, %s688, 0
      %p691 = scmp.lt.s32.totalorder %s690, 15
      %s692 = scalar_select %p691, %s690, 15
      %p693 = scmp.lt.s32.totalorder %s32, 1
      %s694 = scalar_select %p693, %s32, 1
      %p695 = scmp.lt.s32.totalorder %s692, 15
      %s696 = scalar_select %p695, %s692, 15
      %s697 = smul.addr %s696, 2
      %s698 = smul.addr %s694, 32
      %s699 = sadd.s32 %s697, %s698
      %s700 = smul.addr %s699, 8
      %s701 = scalar_lea.vmem %s1, %s700
      %p702 = pneg %p103
      %p703 = pneg %p100
      %s704 = smul.u32 %s33, 8
      %s705 = sadd.s32 %s704, 4294967295
      %p706 = scmp.gt.s32.totalorder %s705, 0
      %s707 = scalar_select %p706, %s705, 0
      %p708 = scmp.lt.s32.totalorder %s707, 15
      %s709 = scalar_select %p708, %s707, 15
      %p710 = scmp.lt.s32.totalorder %s32, 1
      %s711 = scalar_select %p710, %s32, 1
      %p712 = scmp.lt.s32.totalorder %s709, 15
      %s713 = scalar_select %p712, %s709, 15
      %s714 = smul.addr %s713, 2
      %s715 = smul.addr %s711, 32
      %s716 = sadd.s32 %s714, %s715
      %s717 = smul.addr %s716, 8
      %s718 = scalar_lea.vmem %s2, %s717
      %p719 = pneg %p143
      %p720 = pneg %p140
      %s721 = smul.u32 %s33, 8
      %s722 = sadd.s32 %s721, 8
      %p723 = scmp.gt.s32.totalorder %s722, 0
      %s724 = scalar_select %p723, %s722, 0
      %p725 = scmp.lt.s32.totalorder %s724, 15
      %s726 = scalar_select %p725, %s724, 15
      %p727 = scmp.lt.s32.totalorder %s32, 1
      %s728 = scalar_select %p727, %s32, 1
      %p729 = scmp.lt.s32.totalorder %s726, 15
      %s730 = scalar_select %p729, %s726, 15
      %s731 = smul.addr %s730, 2
      %s732 = smul.addr %s728, 32
      %s733 = sadd.s32 %s731, %s732
      %s734 = smul.addr %s733, 8
      %s735 = scalar_lea.vmem %s3, %s734
      %p736 = pneg %p183
      %p737 = pneg %p180
      %s738 = smul.u32 %s33, 8
      %s739 = sadd.s32 %s738, 9
      %p740 = scmp.gt.s32.totalorder %s739, 0
      %s741 = scalar_select %p740, %s739, 0
      %p742 = scmp.lt.s32.totalorder %s741, 15
      %s743 = scalar_select %p742, %s741, 15
      %p744 = scmp.lt.s32.totalorder %s32, 1
      %s745 = scalar_select %p744, %s32, 1
      %p746 = scmp.lt.s32.totalorder %s743, 15
      %s747 = scalar_select %p746, %s743, 15
      %s748 = smul.addr %s747, 2
      %s749 = smul.addr %s745, 32
      %s750 = sadd.s32 %s748, %s749
      %s751 = smul.addr %s750, 8
      %s752 = scalar_lea.vmem %s4, %s751
      %p753 = pneg %p223
      %p754 = pneg %p220
      %p755 = pneg %p244
      %p756 = pneg %p241
      %p757 = pneg %p265
      %p758 = pneg %p262
      %p759 = pneg %p286
      %p760 = pneg %p283
      %p761 = pneg %p307
      %p762 = pneg %p304
      %p763 = pneg %p328
      %p764 = pneg %p325
      %p765 = pneg %p349
      %p766 = pneg %p346
      %p767 = pneg %p370
      %p768 = pneg %p367
      %p769 = pneg %p391
      %p770 = pneg %p388
      %p771 = pneg %p412
      %p772 = pneg %p409
      %p773 = pneg %p433
      %p774 = pneg %p430
      %p775 = pneg %p454
      %p776 = pneg %p451
      %p777 = pneg %p475
      %p778 = pneg %p472
      %p779 = pneg %p503
      %p780 = pneg %p500
      %s781 = smul.u32 8, %s33
      %p782 = scmp.lt.s32.totalorder %s32, 1
      %s783 = scalar_select %p782, %s32, 1
      %p784 = scmp.lt.s32.totalorder %s781, 15
      %s785 = scalar_select %p784, %s781, 15
      %s786 = smul.addr %s785, 2
      %s787 = smul.addr %s783, 32
      %s788 = sadd.s32 %s786, %s787
      %s789 = smul.addr %s788, 8
      %s790 = scalar_lea.vmem %s17, %s789
      %s791 = smul.u32 8, %s33
      %p792 = scmp.lt.s32.totalorder %s32, 1
      %s793 = scalar_select %p792, %s32, 1
      %p794 = scmp.lt.s32.totalorder %s791, 15
      %s795 = scalar_select %p794, %s791, 15
      %s796 = smul.addr %s795, 2
      %s797 = smul.addr %s793, 32
      %s798 = sadd.s32 %s796, %s797
      %s799 = smul.addr %s798, 8
      %s800 = scalar_lea.vmem %s0, %s799
      %s801 = smul.u32 8, %s33
      %s802 = smul.u32 %s33, 8
      %s803 = sadd.s32 %s802, 4294967294
      %p804 = scmp.gt.s32.totalorder %s803, 0
      %s805 = scalar_select %p804, %s803, 0
      %p806 = scmp.lt.s32.totalorder %s805, 15
      %s807 = scalar_select %p806, %s805, 15
      %p808 = scmp.lt.s32.totalorder %s32, 1
      %s809 = scalar_select %p808, %s32, 1
      %p810 = scmp.lt.s32.totalorder %s807, 15
      %s811 = scalar_select %p810, %s807, 15
      %s812 = smul.addr %s811, 2
      %s813 = smul.addr %s809, 32
      %s814 = sadd.s32 %s812, %s813
      %s815 = smul.addr %s814, 8
      %s816 = scalar_lea.vmem %s1, %s815
      %s817 = smul.u32 %s33, 8
      %s818 = sadd.s32 %s817, 4294967294
      %p819 = scmp.gt.s32.totalorder %s818, 0
      %s820 = scalar_select %p819, %s818, 0
      %p821 = scmp.lt.s32.totalorder %s820, 15
      %s822 = scalar_select %p821, %s820, 15
      %s823 = smul.u32 %s33, 8
      %s824 = sadd.s32 %s823, 4294967295
      %p825 = scmp.gt.s32.totalorder %s824, 0
      %s826 = scalar_select %p825, %s824, 0
      %p827 = scmp.lt.s32.totalorder %s826, 15
      %s828 = scalar_select %p827, %s826, 15
      %p829 = scmp.lt.s32.totalorder %s32, 1
      %s830 = scalar_select %p829, %s32, 1
      %p831 = scmp.lt.s32.totalorder %s828, 15
      %s832 = scalar_select %p831, %s828, 15
      %s833 = smul.addr %s832, 2
      %s834 = smul.addr %s830, 32
      %s835 = sadd.s32 %s833, %s834
      %s836 = smul.addr %s835, 8
      %s837 = scalar_lea.vmem %s2, %s836
      %s838 = smul.u32 %s33, 8
      %s839 = sadd.s32 %s838, 4294967295
      %p840 = scmp.gt.s32.totalorder %s839, 0
      %s841 = scalar_select %p840, %s839, 0
      %p842 = scmp.lt.s32.totalorder %s841, 15
      %s843 = scalar_select %p842, %s841, 15
      %s844 = smul.u32 %s33, 8
      %s845 = sadd.s32 %s844, 8
      %p846 = scmp.gt.s32.totalorder %s845, 0
      %s847 = scalar_select %p846, %s845, 0
      %p848 = scmp.lt.s32.totalorder %s847, 15
      %s849 = scalar_select %p848, %s847, 15
      %p850 = scmp.lt.s32.totalorder %s32, 1
      %s851 = scalar_select %p850, %s32, 1
      %p852 = scmp.lt.s32.totalorder %s849, 15
      %s853 = scalar_select %p852, %s849, 15
      %s854 = smul.addr %s853, 2
      %s855 = smul.addr %s851, 32
      %s856 = sadd.s32 %s854, %s855
      %s857 = smul.addr %s856, 8
      %s858 = scalar_lea.vmem %s3, %s857
      %s859 = smul.u32 %s33, 8
      %s860 = sadd.s32 %s859, 8
      %p861 = scmp.gt.s32.totalorder %s860, 0
      %s862 = scalar_select %p861, %s860, 0
      %p863 = scmp.lt.s32.totalorder %s862, 15
      %s864 = scalar_select %p863, %s862, 15
      %s865 = smul.u32 %s33, 8
      %s866 = sadd.s32 %s865, 9
      %p867 = scmp.gt.s32.totalorder %s866, 0
      %s868 = scalar_select %p867, %s866, 0
      %p869 = scmp.lt.s32.totalorder %s868, 15
      %s870 = scalar_select %p869, %s868, 15
      %p871 = scmp.lt.s32.totalorder %s32, 1
      %s872 = scalar_select %p871, %s32, 1
      %p873 = scmp.lt.s32.totalorder %s870, 15
      %s874 = scalar_select %p873, %s870, 15
      %s875 = smul.addr %s874, 2
      %s876 = smul.addr %s872, 32
      %s877 = sadd.s32 %s875, %s876
      %s878 = smul.addr %s877, 8
      %s879 = scalar_lea.vmem %s4, %s878
      %s880 = smul.u32 %s33, 8
      %s881 = sadd.s32 %s880, 9
      %p882 = scmp.gt.s32.totalorder %s881, 0
      %s883 = scalar_select %p882, %s881, 0
      %p884 = scmp.lt.s32.totalorder %s883, 15
      %s885 = scalar_select %p884, %s883, 15
      %s886 = smul.u32 8, %s33
      %p887 = scmp.lt.s32.totalorder %s32, 1
      %s888 = scalar_select %p887, %s32, 1
      %p889 = scmp.lt.s32.totalorder %s886, 15
      %s890 = scalar_select %p889, %s886, 15
      %s891 = smul.addr %s890, 2
      %s892 = smul.addr %s888, 32
      %s893 = sadd.s32 %s891, %s892
      %s894 = smul.addr %s893, 8
      %s895 = scalar_lea.vmem %s17, %s894
      %s896 = smul.u32 8, %s33
      %s897 = smul.u32 %s33, 8
      %s898 = ssub.s32 %s897, 2
      %p899 = scmp.ge.s32.totalorder %s898, 0
      %p900 = scmp.lt.s32.totalorder %s898, 16
      %p901 = pnand %p899, %p900
      %p902 = pneg %p901
      %s903 = scalar_select %p902, 1, 0
      %s904 = scvt.s32.f32 %s903
      %v905 = vld [vmem:[%s816] sm:$0xff]
      %v906 = vld [vmem:[%s816 + $0x8] sm:$0xff]
      %v907 = vstv %s904
      %v908 = vmul.f32 %v905, %v907
      %v909 = vmul.f32 %v906, %v907
      %s910 = ssub.s32 %s897, 1
      %p911 = scmp.ge.s32.totalorder %s910, 0
      %p912 = scmp.lt.s32.totalorder %s910, 16
      %p913 = pnand %p911, %p912
      %p914 = pneg %p913
      %s915 = scalar_select %p914, 1, 0
      %s916 = scvt.s32.f32 %s915
      %v917 = vld [vmem:[%s837] sm:$0xff]
      %v918 = vld [vmem:[%s837 + $0x8] sm:$0xff]
      %v919 = vstv %s916
      %v920 = vmul.f32 %v917, %v919
      %v921 = vmul.f32 %v918, %v919
      %v922 = vld [vmem:[%s800] sm:$0xff]
      %v923 = vld [vmem:[%s800 + $0x8] sm:$0xff]
      %v924 = vld [vmem:[%s800 + $0x10] sm:$0xff]
      %v925 = vld [vmem:[%s800 + $0x18] sm:$0xff]
      %v926 = vld [vmem:[%s800 + $0x20] sm:$0xff]
      %v927 = vld [vmem:[%s800 + $0x28] sm:$0xff]
      %v928 = vld [vmem:[%s800 + $0x30] sm:$0xff]
      %v929 = vld [vmem:[%s800 + $0x38] sm:$0xff]
      %v930 = vld [vmem:[%s800 + $0x40] sm:$0xff]
      %v931 = vld [vmem:[%s800 + $0x48] sm:$0xff]
      %v932 = vld [vmem:[%s800 + $0x50] sm:$0xff]
      %v933 = vld [vmem:[%s800 + $0x58] sm:$0xff]
      %v934 = vld [vmem:[%s800 + $0x60] sm:$0xff]
      %v935 = vld [vmem:[%s800 + $0x68] sm:$0xff]
      %v936 = vld [vmem:[%s800 + $0x70] sm:$0xff]
      %v937 = vld [vmem:[%s800 + $0x78] sm:$0xff]
      %s938 = sadd.s32 %s33, 1
      %s939 = smul.u32 %s938, 8
      %p940 = scmp.ge.s32.totalorder %s939, 0
      %p941 = scmp.lt.s32.totalorder %s939, 16
      %p942 = pnand %p940, %p941
      %p943 = pneg %p942
      %s944 = scalar_select %p943, 1, 0
      %s945 = scvt.s32.f32 %s944
      %v946 = vld [vmem:[%s858] sm:$0xff]
      %v947 = vld [vmem:[%s858 + $0x8] sm:$0xff]
      %v948 = vstv %s945
      %v949 = vmul.f32 %v946, %v948
      %v950 = vmul.f32 %v947, %v948
      %s951 = sadd.s32 %s939, 1
      %p952 = scmp.ge.s32.totalorder %s951, 0
      %p953 = scmp.lt.s32.totalorder %s951, 16
      %p954 = pnand %p952, %p953
      %p955 = pneg %p954
      %s956 = scalar_select %p955, 1, 0
      %s957 = scvt.s32.f32 %s956
      %v958 = vld [vmem:[%s879] sm:$0xff]
      %v959 = vld [vmem:[%s879 + $0x8] sm:$0xff]
      %v960 = vstv %s957
      %v961 = vmul.f32 %v958, %v960
      %v962 = vmul.f32 %v959, %v960
      %v963 = vld [vmem:[%s5] sm:$0xff]
      %v964 = vld [vmem:[%s5 + $0x8] sm:$0x1]
      %v965 = vlaneseq
      %v966 = vshrl.u32 %v965, 7
      %v967 = vsub.s32 0, %v966
      %v968 = vrot.slane %v963, %v967
      %v969 = vmul.f32 %v908, %v968
      %v970 = vmul.f32 %v909, %v968
      %v971 = vmul.f32 %v920, %v968
      %v972 = vmul.f32 %v921, %v968
      %v973 = vmul.f32 %v922, %v968
      %v974 = vmul.f32 %v923, %v968
      %v975 = vmul.f32 %v924, %v968
      %v976 = vmul.f32 %v925, %v968
      %v977 = vmul.f32 %v926, %v968
      %v978 = vmul.f32 %v927, %v968
      %v979 = vmul.f32 %v928, %v968
      %v980 = vmul.f32 %v929, %v968
      %v981 = vmul.f32 %v930, %v968
      %v982 = vmul.f32 %v931, %v968
      %v983 = vmul.f32 %v932, %v968
      %v984 = vmul.f32 %v933, %v968
      %v985 = vmul.f32 %v934, %v968
      %v986 = vmul.f32 %v935, %v968
      %v987 = vmul.f32 %v936, %v968
      %v988 = vmul.f32 %v937, %v968
      %v989 = vlaneseq
      %v990 = vshrl.u32 %v989, 7
      %v991 = vsub.s32 3, %v990
      %v992 = vrot.slane %v963, %v991
      %v993 = vmul.f32 %v920, %v992
      %v994 = vmul.f32 %v921, %v992
      %v995 = vmul.f32 %v922, %v992
      %v996 = vmul.f32 %v923, %v992
      %v997 = vmul.f32 %v924, %v992
      %v998 = vmul.f32 %v925, %v992
      %v999 = vmul.f32 %v926, %v992
      %v1000 = vmul.f32 %v927, %v992
      %v1001 = vmul.f32 %v928, %v992
      %v1002 = vmul.f32 %v929, %v992
      %v1003 = vmul.f32 %v930, %v992
      %v1004 = vmul.f32 %v931, %v992
      %v1005 = vmul.f32 %v932, %v992
      %v1006 = vmul.f32 %v933, %v992
      %v1007 = vmul.f32 %v934, %v992
      %v1008 = vmul.f32 %v935, %v992
      %v1009 = vmul.f32 %v936, %v992
      %v1010 = vmul.f32 %v937, %v992
      %v1011 = vmul.f32 %v949, %v992
      %v1012 = vmul.f32 %v950, %v992
      %v1013 = vadd.f32 %v969, %v993
      %v1014 = vadd.f32 %v970, %v994
      %v1015 = vadd.f32 %v971, %v995
      %v1016 = vadd.f32 %v972, %v996
      %v1017 = vadd.f32 %v973, %v997
      %v1018 = vadd.f32 %v974, %v998
      %v1019 = vadd.f32 %v975, %v999
      %v1020 = vadd.f32 %v976, %v1000
      %v1021 = vadd.f32 %v977, %v1001
      %v1022 = vadd.f32 %v978, %v1002
      %v1023 = vadd.f32 %v979, %v1003
      %v1024 = vadd.f32 %v980, %v1004
      %v1025 = vadd.f32 %v981, %v1005
      %v1026 = vadd.f32 %v982, %v1006
      %v1027 = vadd.f32 %v983, %v1007
      %v1028 = vadd.f32 %v984, %v1008
      %v1029 = vadd.f32 %v985, %v1009
      %v1030 = vadd.f32 %v986, %v1010
      %v1031 = vadd.f32 %v987, %v1011
      %v1032 = vadd.f32 %v988, %v1012
      %v1033 = vlaneseq
      %v1034 = vshrl.u32 %v1033, 7
      %v1035 = vsub.s32 6, %v1034
      %v1036 = vrot.slane %v963, %v1035
      %v1037 = vmul.f32 %v922, %v1036
      %v1038 = vmul.f32 %v923, %v1036
      %v1039 = vmul.f32 %v924, %v1036
      %v1040 = vmul.f32 %v925, %v1036
      %v1041 = vmul.f32 %v926, %v1036
      %v1042 = vmul.f32 %v927, %v1036
      %v1043 = vmul.f32 %v928, %v1036
      %v1044 = vmul.f32 %v929, %v1036
      %v1045 = vmul.f32 %v930, %v1036
      %v1046 = vmul.f32 %v931, %v1036
      %v1047 = vmul.f32 %v932, %v1036
      %v1048 = vmul.f32 %v933, %v1036
      %v1049 = vmul.f32 %v934, %v1036
      %v1050 = vmul.f32 %v935, %v1036
      %v1051 = vmul.f32 %v936, %v1036
      %v1052 = vmul.f32 %v937, %v1036
      %v1053 = vmul.f32 %v949, %v1036
      %v1054 = vmul.f32 %v950, %v1036
      %v1055 = vmul.f32 %v961, %v1036
      %v1056 = vmul.f32 %v962, %v1036
      %v1057 = vadd.f32 %v1013, %v1037
      %v1058 = vadd.f32 %v1014, %v1038
      %v1059 = vadd.f32 %v1015, %v1039
      %v1060 = vadd.f32 %v1016, %v1040
      %v1061 = vadd.f32 %v1017, %v1041
      %v1062 = vadd.f32 %v1018, %v1042
      %v1063 = vadd.f32 %v1019, %v1043
      %v1064 = vadd.f32 %v1020, %v1044
      %v1065 = vadd.f32 %v1021, %v1045
      %v1066 = vadd.f32 %v1022, %v1046
      %v1067 = vadd.f32 %v1023, %v1047
      %v1068 = vadd.f32 %v1024, %v1048
      %v1069 = vadd.f32 %v1025, %v1049
      %v1070 = vadd.f32 %v1026, %v1050
      %v1071 = vadd.f32 %v1027, %v1051
      %v1072 = vadd.f32 %v1028, %v1052
      %v1073 = vadd.f32 %v1029, %v1053
      %v1074 = vadd.f32 %v1030, %v1054
      %v1075 = vadd.f32 %v1031, %v1055
      %v1076 = vadd.f32 %v1032, %v1056
      %vm1097 = vcmask 1040384
      %v1098 = vrot.slane %v1057, 7
      %v1099 = vrot.slane %v1058, 7
      %v1100 = vsel %vm1097, %v1098, %v1099
      %v1101 = vrot.slane %v1059, 7
      %v1102 = vrot.slane %v1060, 7
      %v1103 = vsel %vm1097, %v1101, %v1102
      %v1104 = vrot.slane %v1061, 7
      %v1105 = vrot.slane %v1062, 7
      %v1106 = vsel %vm1097, %v1104, %v1105
      %v1107 = vrot.slane %v1063, 7
      %v1108 = vrot.slane %v1064, 7
      %v1109 = vsel %vm1097, %v1107, %v1108
      %v1110 = vrot.slane %v1065, 7
      %v1111 = vrot.slane %v1066, 7
      %v1112 = vsel %vm1097, %v1110, %v1111
      %v1113 = vrot.slane %v1067, 7
      %v1114 = vrot.slane %v1068, 7
      %v1115 = vsel %vm1097, %v1113, %v1114
      %v1116 = vrot.slane %v1069, 7
      %v1117 = vrot.slane %v1070, 7
      %v1118 = vsel %vm1097, %v1116, %v1117
      %v1119 = vrot.slane %v1071, 7
      %v1120 = vrot.slane %v1072, 7
      %v1121 = vsel %vm1097, %v1119, %v1120
      %v1122 = vrot.slane %v1073, 7
      %v1123 = vrot.slane %v1074, 7
      %v1124 = vsel %vm1097, %v1122, %v1123
      %v1125 = vrot.slane %v1075, 7
      %v1126 = vrot.slane %v1076, 7
      %v1127 = vsel %vm1097, %v1125, %v1126
      %v1148 = vsel %vm1097, 0.0, %v1098
      %v1149 = vsel %vm1097, 0.0, %v1101
      %v1150 = vsel %vm1097, 0.0, %v1104
      %v1151 = vsel %vm1097, 0.0, %v1107
      %v1152 = vsel %vm1097, 0.0, %v1110
      %v1153 = vsel %vm1097, 0.0, %v1113
      %v1154 = vsel %vm1097, 0.0, %v1116
      %v1155 = vsel %vm1097, 0.0, %v1119
      %v1156 = vsel %vm1097, 0.0, %v1122
      %v1157 = vsel %vm1097, 0.0, %v1125
      %v1158 = vlaneseq
      %v1159 = vshrl.u32 %v1158, 7
      %v1160 = vsub.s32 1, %v1159
      %v1161 = vrot.slane %v963, %v1160
      %v1162 = vmul.f32 %v908, %v1161
      %v1163 = vmul.f32 %v909, %v1161
      %v1164 = vmul.f32 %v920, %v1161
      %v1165 = vmul.f32 %v921, %v1161
      %v1166 = vmul.f32 %v922, %v1161
      %v1167 = vmul.f32 %v923, %v1161
      %v1168 = vmul.f32 %v924, %v1161
      %v1169 = vmul.f32 %v925, %v1161
      %v1170 = vmul.f32 %v926, %v1161
      %v1171 = vmul.f32 %v927, %v1161
      %v1172 = vmul.f32 %v928, %v1161
      %v1173 = vmul.f32 %v929, %v1161
      %v1174 = vmul.f32 %v930, %v1161
      %v1175 = vmul.f32 %v931, %v1161
      %v1176 = vmul.f32 %v932, %v1161
      %v1177 = vmul.f32 %v933, %v1161
      %v1178 = vmul.f32 %v934, %v1161
      %v1179 = vmul.f32 %v935, %v1161
      %v1180 = vmul.f32 %v936, %v1161
      %v1181 = vmul.f32 %v937, %v1161
      %v1182 = vlaneseq
      %v1183 = vshrl.u32 %v1182, 7
      %v1184 = vsub.s32 4, %v1183
      %v1185 = vrot.slane %v963, %v1184
      %v1186 = vmul.f32 %v920, %v1185
      %v1187 = vmul.f32 %v921, %v1185
      %v1188 = vmul.f32 %v922, %v1185
      %v1189 = vmul.f32 %v923, %v1185
      %v1190 = vmul.f32 %v924, %v1185
      %v1191 = vmul.f32 %v925, %v1185
      %v1192 = vmul.f32 %v926, %v1185
      %v1193 = vmul.f32 %v927, %v1185
      %v1194 = vmul.f32 %v928, %v1185
      %v1195 = vmul.f32 %v929, %v1185
      %v1196 = vmul.f32 %v930, %v1185
      %v1197 = vmul.f32 %v931, %v1185
      %v1198 = vmul.f32 %v932, %v1185
      %v1199 = vmul.f32 %v933, %v1185
      %v1200 = vmul.f32 %v934, %v1185
      %v1201 = vmul.f32 %v935, %v1185
      %v1202 = vmul.f32 %v936, %v1185
      %v1203 = vmul.f32 %v937, %v1185
      %v1204 = vmul.f32 %v949, %v1185
      %v1205 = vmul.f32 %v950, %v1185
      %v1206 = vadd.f32 %v1162, %v1186
      %v1207 = vadd.f32 %v1163, %v1187
      %v1208 = vadd.f32 %v1164, %v1188
      %v1209 = vadd.f32 %v1165, %v1189
      %v1210 = vadd.f32 %v1166, %v1190
      %v1211 = vadd.f32 %v1167, %v1191
      %v1212 = vadd.f32 %v1168, %v1192
      %v1213 = vadd.f32 %v1169, %v1193
      %v1214 = vadd.f32 %v1170, %v1194
      %v1215 = vadd.f32 %v1171, %v1195
      %v1216 = vadd.f32 %v1172, %v1196
      %v1217 = vadd.f32 %v1173, %v1197
      %v1218 = vadd.f32 %v1174, %v1198
      %v1219 = vadd.f32 %v1175, %v1199
      %v1220 = vadd.f32 %v1176, %v1200
      %v1221 = vadd.f32 %v1177, %v1201
      %v1222 = vadd.f32 %v1178, %v1202
      %v1223 = vadd.f32 %v1179, %v1203
      %v1224 = vadd.f32 %v1180, %v1204
      %v1225 = vadd.f32 %v1181, %v1205
      %v1226 = vlaneseq
      %v1227 = vshrl.u32 %v1226, 7
      %v1228 = vsub.s32 7, %v1227
      %v1229 = vrot.slane %v963, %v1228
      %v1230 = vmul.f32 %v922, %v1229
      %v1231 = vmul.f32 %v923, %v1229
      %v1232 = vmul.f32 %v924, %v1229
      %v1233 = vmul.f32 %v925, %v1229
      %v1234 = vmul.f32 %v926, %v1229
      %v1235 = vmul.f32 %v927, %v1229
      %v1236 = vmul.f32 %v928, %v1229
      %v1237 = vmul.f32 %v929, %v1229
      %v1238 = vmul.f32 %v930, %v1229
      %v1239 = vmul.f32 %v931, %v1229
      %v1240 = vmul.f32 %v932, %v1229
      %v1241 = vmul.f32 %v933, %v1229
      %v1242 = vmul.f32 %v934, %v1229
      %v1243 = vmul.f32 %v935, %v1229
      %v1244 = vmul.f32 %v936, %v1229
      %v1245 = vmul.f32 %v937, %v1229
      %v1246 = vmul.f32 %v949, %v1229
      %v1247 = vmul.f32 %v950, %v1229
      %v1248 = vmul.f32 %v961, %v1229
      %v1249 = vmul.f32 %v962, %v1229
      %v1250 = vadd.f32 %v1206, %v1230
      %v1251 = vadd.f32 %v1207, %v1231
      %v1252 = vadd.f32 %v1208, %v1232
      %v1253 = vadd.f32 %v1209, %v1233
      %v1254 = vadd.f32 %v1210, %v1234
      %v1255 = vadd.f32 %v1211, %v1235
      %v1256 = vadd.f32 %v1212, %v1236
      %v1257 = vadd.f32 %v1213, %v1237
      %v1258 = vadd.f32 %v1214, %v1238
      %v1259 = vadd.f32 %v1215, %v1239
      %v1260 = vadd.f32 %v1216, %v1240
      %v1261 = vadd.f32 %v1217, %v1241
      %v1262 = vadd.f32 %v1218, %v1242
      %v1263 = vadd.f32 %v1219, %v1243
      %v1264 = vadd.f32 %v1220, %v1244
      %v1265 = vadd.f32 %v1221, %v1245
      %v1266 = vadd.f32 %v1222, %v1246
      %v1267 = vadd.f32 %v1223, %v1247
      %v1268 = vadd.f32 %v1224, %v1248
      %v1269 = vadd.f32 %v1225, %v1249
      %v1270 = vadd.f32 %v1148, %v1250
      %v1271 = vadd.f32 %v1100, %v1251
      %v1272 = vadd.f32 %v1149, %v1252
      %v1273 = vadd.f32 %v1103, %v1253
      %v1274 = vadd.f32 %v1150, %v1254
      %v1275 = vadd.f32 %v1106, %v1255
      %v1276 = vadd.f32 %v1151, %v1256
      %v1277 = vadd.f32 %v1109, %v1257
      %v1278 = vadd.f32 %v1152, %v1258
      %v1279 = vadd.f32 %v1112, %v1259
      %v1280 = vadd.f32 %v1153, %v1260
      %v1281 = vadd.f32 %v1115, %v1261
      %v1282 = vadd.f32 %v1154, %v1262
      %v1283 = vadd.f32 %v1118, %v1263
      %v1284 = vadd.f32 %v1155, %v1264
      %v1285 = vadd.f32 %v1121, %v1265
      %v1286 = vadd.f32 %v1156, %v1266
      %v1287 = vadd.f32 %v1124, %v1267
      %v1288 = vadd.f32 %v1157, %v1268
      %v1289 = vadd.f32 %v1127, %v1269
      %v1290 = vlaneseq
      %v1291 = vshrl.u32 %v1290, 7
      %v1292 = vsub.s32 2, %v1291
      %v1293 = vrot.slane %v963, %v1292
      %v1294 = vmul.f32 %v908, %v1293
      %v1295 = vmul.f32 %v909, %v1293
      %v1296 = vmul.f32 %v920, %v1293
      %v1297 = vmul.f32 %v921, %v1293
      %v1298 = vmul.f32 %v922, %v1293
      %v1299 = vmul.f32 %v923, %v1293
      %v1300 = vmul.f32 %v924, %v1293
      %v1301 = vmul.f32 %v925, %v1293
      %v1302 = vmul.f32 %v926, %v1293
      %v1303 = vmul.f32 %v927, %v1293
      %v1304 = vmul.f32 %v928, %v1293
      %v1305 = vmul.f32 %v929, %v1293
      %v1306 = vmul.f32 %v930, %v1293
      %v1307 = vmul.f32 %v931, %v1293
      %v1308 = vmul.f32 %v932, %v1293
      %v1309 = vmul.f32 %v933, %v1293
      %v1310 = vmul.f32 %v934, %v1293
      %v1311 = vmul.f32 %v935, %v1293
      %v1312 = vmul.f32 %v936, %v1293
      %v1313 = vmul.f32 %v937, %v1293
      %v1314 = vlaneseq
      %v1315 = vshrl.u32 %v1314, 7
      %v1316 = vsub.s32 5, %v1315
      %v1317 = vrot.slane %v963, %v1316
      %v1318 = vmul.f32 %v920, %v1317
      %v1319 = vmul.f32 %v921, %v1317
      %v1320 = vmul.f32 %v922, %v1317
      %v1321 = vmul.f32 %v923, %v1317
      %v1322 = vmul.f32 %v924, %v1317
      %v1323 = vmul.f32 %v925, %v1317
      %v1324 = vmul.f32 %v926, %v1317
      %v1325 = vmul.f32 %v927, %v1317
      %v1326 = vmul.f32 %v928, %v1317
      %v1327 = vmul.f32 %v929, %v1317
      %v1328 = vmul.f32 %v930, %v1317
      %v1329 = vmul.f32 %v931, %v1317
      %v1330 = vmul.f32 %v932, %v1317
      %v1331 = vmul.f32 %v933, %v1317
      %v1332 = vmul.f32 %v934, %v1317
      %v1333 = vmul.f32 %v935, %v1317
      %v1334 = vmul.f32 %v936, %v1317
      %v1335 = vmul.f32 %v937, %v1317
      %v1336 = vmul.f32 %v949, %v1317
      %v1337 = vmul.f32 %v950, %v1317
      %v1338 = vadd.f32 %v1294, %v1318
      %v1339 = vadd.f32 %v1295, %v1319
      %v1340 = vadd.f32 %v1296, %v1320
      %v1341 = vadd.f32 %v1297, %v1321
      %v1342 = vadd.f32 %v1298, %v1322
      %v1343 = vadd.f32 %v1299, %v1323
      %v1344 = vadd.f32 %v1300, %v1324
      %v1345 = vadd.f32 %v1301, %v1325
      %v1346 = vadd.f32 %v1302, %v1326
      %v1347 = vadd.f32 %v1303, %v1327
      %v1348 = vadd.f32 %v1304, %v1328
      %v1349 = vadd.f32 %v1305, %v1329
      %v1350 = vadd.f32 %v1306, %v1330
      %v1351 = vadd.f32 %v1307, %v1331
      %v1352 = vadd.f32 %v1308, %v1332
      %v1353 = vadd.f32 %v1309, %v1333
      %v1354 = vadd.f32 %v1310, %v1334
      %v1355 = vadd.f32 %v1311, %v1335
      %v1356 = vadd.f32 %v1312, %v1336
      %v1357 = vadd.f32 %v1313, %v1337
      %v1358 = vlaneseq
      %v1359 = vshrl.u32 %v1358, 7
      %v1360 = vsub.s32 0, %v1359
      %v1361 = vrot.slane %v964, %v1360
      %v1362 = vmul.f32 %v922, %v1361
      %v1363 = vmul.f32 %v923, %v1361
      %v1364 = vmul.f32 %v924, %v1361
      %v1365 = vmul.f32 %v925, %v1361
      %v1366 = vmul.f32 %v926, %v1361
      %v1367 = vmul.f32 %v927, %v1361
      %v1368 = vmul.f32 %v928, %v1361
      %v1369 = vmul.f32 %v929, %v1361
      %v1370 = vmul.f32 %v930, %v1361
      %v1371 = vmul.f32 %v931, %v1361
      %v1372 = vmul.f32 %v932, %v1361
      %v1373 = vmul.f32 %v933, %v1361
      %v1374 = vmul.f32 %v934, %v1361
      %v1375 = vmul.f32 %v935, %v1361
      %v1376 = vmul.f32 %v936, %v1361
      %v1377 = vmul.f32 %v937, %v1361
      %v1378 = vmul.f32 %v949, %v1361
      %v1379 = vmul.f32 %v950, %v1361
      %v1380 = vmul.f32 %v961, %v1361
      %v1381 = vmul.f32 %v962, %v1361
      %v1382 = vadd.f32 %v1338, %v1362
      %v1383 = vadd.f32 %v1339, %v1363
      %v1384 = vadd.f32 %v1340, %v1364
      %v1385 = vadd.f32 %v1341, %v1365
      %v1386 = vadd.f32 %v1342, %v1366
      %v1387 = vadd.f32 %v1343, %v1367
      %v1388 = vadd.f32 %v1344, %v1368
      %v1389 = vadd.f32 %v1345, %v1369
      %v1390 = vadd.f32 %v1346, %v1370
      %v1391 = vadd.f32 %v1347, %v1371
      %v1392 = vadd.f32 %v1348, %v1372
      %v1393 = vadd.f32 %v1349, %v1373
      %v1394 = vadd.f32 %v1350, %v1374
      %v1395 = vadd.f32 %v1351, %v1375
      %v1396 = vadd.f32 %v1352, %v1376
      %v1397 = vadd.f32 %v1353, %v1377
      %v1398 = vadd.f32 %v1354, %v1378
      %v1399 = vadd.f32 %v1355, %v1379
      %v1400 = vadd.f32 %v1356, %v1380
      %v1401 = vadd.f32 %v1357, %v1381
      %vm1422 = vcmask 1046528
      %v1423 = vrot.slane %v1382, 1
      %v1424 = vrot.slane %v1383, 1
      %v1425 = vsel %vm1422, %v1423, %v1424
      %v1426 = vrot.slane %v1384, 1
      %v1427 = vrot.slane %v1385, 1
      %v1428 = vsel %vm1422, %v1426, %v1427
      %v1429 = vrot.slane %v1386, 1
      %v1430 = vrot.slane %v1387, 1
      %v1431 = vsel %vm1422, %v1429, %v1430
      %v1432 = vrot.slane %v1388, 1
      %v1433 = vrot.slane %v1389, 1
      %v1434 = vsel %vm1422, %v1432, %v1433
      %v1435 = vrot.slane %v1390, 1
      %v1436 = vrot.slane %v1391, 1
      %v1437 = vsel %vm1422, %v1435, %v1436
      %v1438 = vrot.slane %v1392, 1
      %v1439 = vrot.slane %v1393, 1
      %v1440 = vsel %vm1422, %v1438, %v1439
      %v1441 = vrot.slane %v1394, 1
      %v1442 = vrot.slane %v1395, 1
      %v1443 = vsel %vm1422, %v1441, %v1442
      %v1444 = vrot.slane %v1396, 1
      %v1445 = vrot.slane %v1397, 1
      %v1446 = vsel %vm1422, %v1444, %v1445
      %v1447 = vrot.slane %v1398, 1
      %v1448 = vrot.slane %v1399, 1
      %v1449 = vsel %vm1422, %v1447, %v1448
      %v1450 = vrot.slane %v1400, 1
      %v1451 = vrot.slane %v1401, 1
      %v1452 = vsel %vm1422, %v1450, %v1451
      %v1473 = vsel %vm1422, %v1424, 0.0
      %v1474 = vsel %vm1422, %v1427, 0.0
      %v1475 = vsel %vm1422, %v1430, 0.0
      %v1476 = vsel %vm1422, %v1433, 0.0
      %v1477 = vsel %vm1422, %v1436, 0.0
      %v1478 = vsel %vm1422, %v1439, 0.0
      %v1479 = vsel %vm1422, %v1442, 0.0
      %v1480 = vsel %vm1422, %v1445, 0.0
      %v1481 = vsel %vm1422, %v1448, 0.0
      %v1482 = vsel %vm1422, %v1451, 0.0
      %v1483 = vadd.f32 %v1270, %v1425
      %v1484 = vadd.f32 %v1271, %v1473
      %v1485 = vadd.f32 %v1272, %v1428
      %v1486 = vadd.f32 %v1273, %v1474
      %v1487 = vadd.f32 %v1274, %v1431
      %v1488 = vadd.f32 %v1275, %v1475
      %v1489 = vadd.f32 %v1276, %v1434
      %v1490 = vadd.f32 %v1277, %v1476
      %v1491 = vadd.f32 %v1278, %v1437
      %v1492 = vadd.f32 %v1279, %v1477
      %v1493 = vadd.f32 %v1280, %v1440
      %v1494 = vadd.f32 %v1281, %v1478
      %v1495 = vadd.f32 %v1282, %v1443
      %v1496 = vadd.f32 %v1283, %v1479
      %v1497 = vadd.f32 %v1284, %v1446
      %v1498 = vadd.f32 %v1285, %v1480
      %v1499 = vadd.f32 %v1286, %v1449
      %v1500 = vadd.f32 %v1287, %v1481
      %v1501 = vadd.f32 %v1288, %v1452
      %v1502 = vadd.f32 %v1289, %v1482
      %v1503 = vld [vmem:[%s6] sm:$0x1]
      %v1505 = vlaneseq
      %v1506 = vshrl.u32 %v1505, 7
      %v1507 = vsub.s32 0, %v1506
      %v1508 = vrot.slane %v1503, %v1507
      %v1510 = vadd.f32 %v1483, %v1508
      %v1511 = vadd.f32 %v1484, %v1508
      %v1512 = vadd.f32 %v1485, %v1508
      %v1513 = vadd.f32 %v1486, %v1508
      %v1514 = vadd.f32 %v1487, %v1508
      %v1515 = vadd.f32 %v1488, %v1508
      %v1516 = vadd.f32 %v1489, %v1508
      %v1517 = vadd.f32 %v1490, %v1508
      %v1518 = vadd.f32 %v1491, %v1508
      %v1519 = vadd.f32 %v1492, %v1508
      %v1520 = vadd.f32 %v1493, %v1508
      %v1521 = vadd.f32 %v1494, %v1508
      %v1522 = vadd.f32 %v1495, %v1508
      %v1523 = vadd.f32 %v1496, %v1508
      %v1524 = vadd.f32 %v1497, %v1508
      %v1525 = vadd.f32 %v1498, %v1508
      %v1526 = vadd.f32 %v1499, %v1508
      %v1527 = vadd.f32 %v1500, %v1508
      %v1528 = vadd.f32 %v1501, %v1508
      %v1529 = vadd.f32 %v1502, %v1508
      %v1530 = vld [vmem:[%s7] sm:$0xf]
      %v1531 = vld [vmem:[%s8] sm:$0x1]
      %v1533 = vlaneseq
      %v1534 = vshrl.u32 %v1533, 7
      %v1535 = vsub.s32 0, %v1534
      %v1536 = vrot.slane %v1531, %v1535
      %vm1538 = vcmask 31744
      %v1540 = vsel %vm1538, %v1510, 0
      %v1543 = vsel %vm1538, %v1511, 0
      %v1546 = vsel %vm1538, %v1512, 0
      %v1549 = vsel %vm1538, %v1513, 0
      %v1552 = vsel %vm1538, %v1514, 0
      %v1555 = vsel %vm1538, %v1515, 0
      %v1558 = vsel %vm1538, %v1516, 0
      %v1561 = vsel %vm1538, %v1517, 0
      %v1564 = vsel %vm1538, %v1518, 0
      %v1567 = vsel %vm1538, %v1519, 0
      %v1570 = vsel %vm1538, %v1520, 0
      %v1573 = vsel %vm1538, %v1521, 0
      %v1576 = vsel %vm1538, %v1522, 0
      %v1579 = vsel %vm1538, %v1523, 0
      %v1582 = vsel %vm1538, %v1524, 0
      %v1585 = vsel %vm1538, %v1525, 0
      %v1588 = vsel %vm1538, %v1526, 0
      %v1591 = vsel %vm1538, %v1527, 0
      %v1594 = vsel %vm1538, %v1528, 0
      %v1597 = vsel %vm1538, %v1529, 0
      %vm1599 = vcmask 1043456
      %v1601 = vsel %vm1599, %v1530, 0
      %1603 = vmatprep.subr.mxu0 0.0
      %1604 = vmatpush1.msra.mxu0 %v1601
      %1605 = vmatprep.subr.mxu0 0.0
      %1606 = vmatpush1.msra.mxu0 0.0
      %1607 = vmatprep.subr.mxu0 0.0
      %1608 = vmatpush1.msra.mxu0 0.0
      %1609 = vmatprep.subr.mxu0 0.0
      %1610 = vmatpush1.msra.mxu0 0.0
      %1611 = vmatprep.subr.mxu0 0.0
      %1612 = vmatpush1.msra.mxu0 0.0
      %1613 = vmatprep.subr.mxu0 0.0
      %1614 = vmatpush1.msra.mxu0 0.0
      %1615 = vmatprep.subr.mxu0 0.0
      %1616 = vmatpush1.msra.mxu0 0.0
      %1617 = vmatprep.subr.mxu0 0.0
      %1618 = vmatpush1.msra.mxu0 0.0
      %1619 = vmatprep.subr.mxu0 0.0
      %1620 = vmatpush1.msra.mxu0 0.0
      %1621 = vmatprep.subr.mxu0 0.0
      %1622 = vmatpush1.msra.mxu0 0.0
      %1623 = vmatprep.subr.mxu0 0.0
      %1624 = vmatpush1.msra.mxu0 0.0
      %1625 = vmatprep.subr.mxu0 0.0
      %1626 = vmatpush1.msra.mxu0 0.0
      %1627 = vmatprep.subr.mxu0 0.0
      %1628 = vmatpush1.msra.mxu0 0.0
      %1629 = vmatprep.subr.mxu0 0.0
      %1630 = vmatpush1.msra.mxu0 0.0
      %1631 = vmatprep.subr.mxu0 0.0
      %1632 = vmatpush1.msra.mxu0 0.0
      %1633 = vmatprep.subr.mxu0 0.0
      %1634 = vmatpush1.msra.mxu0 0.0
      %1635 = vmatprep.subr.mxu0 0.0
      %1636 = vmatpush1.msra.mxu0 0.0
      %1637 = vmatprep.subr.mxu0 0.0
      %1638 = vmatpush1.msra.mxu0 0.0
      %1639 = vmatprep.subr.mxu0 0.0
      %1640 = vmatpush1.msra.mxu0 0.0
      %1641 = vmatprep.subr.mxu0 0.0
      %1642 = vmatpush1.msra.mxu0 0.0
      %1643 = vmatprep.subr.mxu0 0.0
      %1644 = vmatpush1.msra.mxu0 0.0
      %1645 = vmatprep.subr.mxu0 0.0
      %1646 = vmatpush1.msra.mxu0 0.0
      %1647 = vmatprep.subr.mxu0 0.0
      %1648 = vmatpush1.msra.mxu0 0.0
      %1649 = vmatprep.subr.mxu0 0.0
      %1650 = vmatpush1.msra.mxu0 0.0
      %1651 = vmatprep.subr.mxu0 0.0
      %1652 = vmatpush1.msra.mxu0 0.0
      %1653 = vmatprep.subr.mxu0 0.0
      %1654 = vmatpush1.msra.mxu0 0.0
      %1655 = vmatprep.subr.mxu0 0.0
      %1656 = vmatpush1.msra.mxu0 0.0
      %1657 = vmatprep.subr.mxu0 0.0
      %1658 = vmatpush1.msra.mxu0 0.0
      %1659 = vmatprep.subr.mxu0 0.0
      %1660 = vmatpush1.msra.mxu0 0.0
      %1661 = vmatprep.subr.mxu0 0.0
      %1662 = vmatpush1.msra.mxu0 0.0
      %1663 = vmatprep.subr.mxu0 0.0
      %1664 = vmatpush1.msra.mxu0 0.0
      %1665 = vmatprep.subr.mxu0 0.0
      %1666 = vmatpush1.msra.mxu0 0.0
      %1667 = vmatprep.mubr.f32.mxu0 0.0
      %1668 = vmatmul.mubr.f32.gmra.mrb[0].mxu0 %v1540
      %v1669 = vpop.f32.mrb[0].mxu0
      %v1670 = vadd.f32 %v1536, %v1669
      %v1671 = vpop.f32.mrb[0].mxu0
      %1672 = vmatprep.mubr.f32.mxu0 0.0
      %1673 = vmatmul.mubr.f32.gmra.mrb[0].mxu0 %v1543
      %v1674 = vpop.f32.mrb[0].mxu0
      %v1675 = vadd.f32 %v1536, %v1674
      %v1676 = vpop.f32.mrb[0].mxu0
      %1677 = vmatprep.mubr.f32.mxu0 0.0
      %1678 = vmatmul.mubr.f32.gmra.mrb[0].mxu0 %v1546
      %v1679 = vpop.f32.mrb[0].mxu0
      %v1680 = vadd.f32 %v1536, %v1679
      %v1681 = vpop.f32.mrb[0].mxu0
      %1682 = vmatprep.mubr.f32.mxu0 0.0
      %1683 = vmatmul.mubr.f32.gmra.mrb[0].mxu0 %v1549
      %v1684 = vpop.f32.mrb[0].mxu0
      %v1685 = vadd.f32 %v1536, %v1684
      %v1686 = vpop.f32.mrb[0].mxu0
      %1687 = vmatprep.mubr.f32.mxu0 0.0
      %1688 = vmatmul.mubr.f32.gmra.mrb[0].mxu0 %v1552
      %v1689 = vpop.f32.mrb[0].mxu0
      %v1690 = vadd.f32 %v1536, %v1689
      %v1691 = vpop.f32.mrb[0].mxu0
      %1692 = vmatprep.mubr.f32.mxu0 0.0
      %1693 = vmatmul.mubr.f32.gmra.mrb[0].mxu0 %v1555
      %v1694 = vpop.f32.mrb[0].mxu0
      %v1695 = vadd.f32 %v1536, %v1694
      %v1696 = vpop.f32.mrb[0].mxu0
      %1697 = vmatprep.mubr.f32.mxu0 0.0
      %1698 = vmatmul.mubr.f32.gmra.mrb[0].mxu0 %v1558
      %v1699 = vpop.f32.mrb[0].mxu0
      %v1700 = vadd.f32 %v1536, %v1699
      %v1701 = vpop.f32.mrb[0].mxu0
      %1702 = vmatprep.mubr.f32.mxu0 0.0
      %1703 = vmatmul.mubr.f32.gmra.mrb[0].mxu0 %v1561
      %v1704 = vpop.f32.mrb[0].mxu0
      %v1705 = vadd.f32 %v1536, %v1704
      %v1706 = vpop.f32.mrb[0].mxu0
      %1707 = vmatprep.mubr.f32.mxu0 0.0
      %1708 = vmatmul.mubr.f32.gmra.mrb[0].mxu0 %v1564
      %v1709 = vpop.f32.mrb[0].mxu0
      %v1710 = vadd.f32 %v1536, %v1709
      %v1711 = vpop.f32.mrb[0].mxu0
      %1712 = vmatprep.mubr.f32.mxu0 0.0
      %1713 = vmatmul.mubr.f32.gmra.mrb[0].mxu0 %v1567
      %v1714 = vpop.f32.mrb[0].mxu0
      %v1715 = vadd.f32 %v1536, %v1714
      %v1716 = vpop.f32.mrb[0].mxu0
      %1717 = vmatprep.mubr.f32.mxu0 0.0
      %1718 = vmatmul.mubr.f32.gmra.mrb[0].mxu0 %v1570
      %v1719 = vpop.f32.mrb[0].mxu0
      %v1720 = vadd.f32 %v1536, %v1719
      %v1721 = vpop.f32.mrb[0].mxu0
      %1722 = vmatprep.mubr.f32.mxu0 0.0
      %1723 = vmatmul.mubr.f32.gmra.mrb[0].mxu0 %v1573
      %v1724 = vpop.f32.mrb[0].mxu0
      %v1725 = vadd.f32 %v1536, %v1724
      %v1726 = vpop.f32.mrb[0].mxu0
      %1727 = vmatprep.mubr.f32.mxu0 0.0
      %1728 = vmatmul.mubr.f32.gmra.mrb[0].mxu0 %v1576
      %v1729 = vpop.f32.mrb[0].mxu0
      %v1730 = vadd.f32 %v1536, %v1729
      %v1731 = vpop.f32.mrb[0].mxu0
      %1732 = vmatprep.mubr.f32.mxu0 0.0
      %1733 = vmatmul.mubr.f32.gmra.mrb[0].mxu0 %v1579
      %v1734 = vpop.f32.mrb[0].mxu0
      %v1735 = vadd.f32 %v1536, %v1734
      %v1736 = vpop.f32.mrb[0].mxu0
      %1737 = vmatprep.mubr.f32.mxu0 0.0
      %1738 = vmatmul.mubr.f32.gmra.mrb[0].mxu0 %v1582
      %v1739 = vpop.f32.mrb[0].mxu0
      %v1740 = vadd.f32 %v1536, %v1739
      %v1741 = vpop.f32.mrb[0].mxu0
      %1742 = vmatprep.mubr.f32.mxu0 0.0
      %1743 = vmatmul.mubr.f32.gmra.mrb[0].mxu0 %v1585
      %v1744 = vpop.f32.mrb[0].mxu0
      %v1745 = vadd.f32 %v1536, %v1744
      %v1746 = vpop.f32.mrb[0].mxu0
      %1747 = vmatprep.mubr.f32.mxu0 0.0
      %1748 = vmatmul.mubr.f32.gmra.mrb[0].mxu0 %v1588
      %v1749 = vpop.f32.mrb[0].mxu0
      %v1750 = vadd.f32 %v1536, %v1749
      %v1751 = vpop.f32.mrb[0].mxu0
      %1752 = vmatprep.mubr.f32.mxu0 0.0
      %1753 = vmatmul.mubr.f32.gmra.mrb[0].mxu0 %v1591
      %v1754 = vpop.f32.mrb[0].mxu0
      %v1755 = vadd.f32 %v1536, %v1754
      %v1756 = vpop.f32.mrb[0].mxu0
      %1757 = vmatprep.mubr.f32.mxu0 0.0
      %1758 = vmatmul.mubr.f32.gmra.mrb[0].mxu0 %v1594
      %v1759 = vpop.f32.mrb[0].mxu0
      %v1760 = vadd.f32 %v1536, %v1759
      %v1761 = vpop.f32.mrb[0].mxu0
      %1762 = vmatprep.mubr.f32.mxu0 0.0
      %1763 = vmatmul.mubr.f32.gmra.mrb[0].mxu0 %v1597
      %v1764 = vpop.f32.mrb[0].mxu0
      %v1765 = vadd.f32 %v1536, %v1764
      %v1766 = vpop.f32.mrb[0].mxu0
      %1767 = vdwg.mxu0
      %vm1768 = vcmask 64512
      %v1769 = vsel %vm1768, %v1670, 0.0
      %1770 = vadd.xlane.f32.xlu0 %v1769
      %v1771 = vpop.xlane.xlu0 %1770
      %v1772 = vsel %vm1768, %v1675, 0.0
      %1773 = vadd.xlane.f32.xlu0 %v1772
      %v1774 = vpop.xlane.xlu0 %1773
      %v1775 = vsel %vm1768, %v1680, 0.0
      %1776 = vadd.xlane.f32.xlu0 %v1775
      %v1777 = vpop.xlane.xlu0 %1776
      %v1778 = vsel %vm1768, %v1685, 0.0
      %1779 = vadd.xlane.f32.xlu0 %v1778
      %v1780 = vpop.xlane.xlu0 %1779
      %v1781 = vsel %vm1768, %v1690, 0.0
      %1782 = vadd.xlane.f32.xlu0 %v1781
      %v1783 = vpop.xlane.xlu0 %1782
      %v1784 = vsel %vm1768, %v1695, 0.0
      %1785 = vadd.xlane.f32.xlu0 %v1784
      %v1786 = vpop.xlane.xlu0 %1785
      %v1787 = vsel %vm1768, %v1700, 0.0
      %1788 = vadd.xlane.f32.xlu0 %v1787
      %v1789 = vpop.xlane.xlu0 %1788
      %v1790 = vsel %vm1768, %v1705, 0.0
      %1791 = vadd.xlane.f32.xlu0 %v1790
      %v1792 = vpop.xlane.xlu0 %1791
      %v1793 = vsel %vm1768, %v1710, 0.0
      %1794 = vadd.xlane.f32.xlu0 %v1793
      %v1795 = vpop.xlane.xlu0 %1794
      %v1796 = vsel %vm1768, %v1715, 0.0
      %1797 = vadd.xlane.f32.xlu0 %v1796
      %v1798 = vpop.xlane.xlu0 %1797
      %v1799 = vsel %vm1768, %v1720, 0.0
      %1800 = vadd.xlane.f32.xlu0 %v1799
      %v1801 = vpop.xlane.xlu0 %1800
      %v1802 = vsel %vm1768, %v1725, 0.0
      %1803 = vadd.xlane.f32.xlu0 %v1802
      %v1804 = vpop.xlane.xlu0 %1803
      %v1805 = vsel %vm1768, %v1730, 0.0
      %1806 = vadd.xlane.f32.xlu0 %v1805
      %v1807 = vpop.xlane.xlu0 %1806
      %v1808 = vsel %vm1768, %v1735, 0.0
      %1809 = vadd.xlane.f32.xlu0 %v1808
      %v1810 = vpop.xlane.xlu0 %1809
      %v1811 = vsel %vm1768, %v1740, 0.0
      %1812 = vadd.xlane.f32.xlu0 %v1811
      %v1813 = vpop.xlane.xlu0 %1812
      %v1814 = vsel %vm1768, %v1745, 0.0
      %1815 = vadd.xlane.f32.xlu0 %v1814
      %v1816 = vpop.xlane.xlu0 %1815
      %v1817 = vsel %vm1768, %v1750, 0.0
      %1818 = vadd.xlane.f32.xlu0 %v1817
      %v1819 = vpop.xlane.xlu0 %1818
      %v1820 = vsel %vm1768, %v1755, 0.0
      %1821 = vadd.xlane.f32.xlu0 %v1820
      %v1822 = vpop.xlane.xlu0 %1821
      %v1823 = vsel %vm1768, %v1760, 0.0
      %1824 = vadd.xlane.f32.xlu0 %v1823
      %v1825 = vpop.xlane.xlu0 %1824
      %v1826 = vsel %vm1768, %v1765, 0.0
      %1827 = vadd.xlane.f32.xlu0 %v1826
      %v1828 = vpop.xlane.xlu0 %1827
      %v1829 = vrcp.pop 8.0
      %v1830 = vmul.f32 %v1771, %v1829
      %v1831 = vmul.f32 %v1774, %v1829
      %v1832 = vmul.f32 %v1777, %v1829
      %v1833 = vmul.f32 %v1780, %v1829
      %v1834 = vmul.f32 %v1783, %v1829
      %v1835 = vmul.f32 %v1786, %v1829
      %v1836 = vmul.f32 %v1789, %v1829
      %v1837 = vmul.f32 %v1792, %v1829
      %v1838 = vmul.f32 %v1795, %v1829
      %v1839 = vmul.f32 %v1798, %v1829
      %v1840 = vmul.f32 %v1801, %v1829
      %v1841 = vmul.f32 %v1804, %v1829
      %v1842 = vmul.f32 %v1807, %v1829
      %v1843 = vmul.f32 %v1810, %v1829
      %v1844 = vmul.f32 %v1813, %v1829
      %v1845 = vmul.f32 %v1816, %v1829
      %v1846 = vmul.f32 %v1819, %v1829
      %v1847 = vmul.f32 %v1822, %v1829
      %v1848 = vmul.f32 %v1825, %v1829
      %v1849 = vmul.f32 %v1828, %v1829
      %v1850 = vmul.f32 %v1670, %v1670
      %v1851 = vmul.f32 %v1675, %v1675
      %v1852 = vmul.f32 %v1680, %v1680
      %v1853 = vmul.f32 %v1685, %v1685
      %v1854 = vmul.f32 %v1690, %v1690
      %v1855 = vmul.f32 %v1695, %v1695
      %v1856 = vmul.f32 %v1700, %v1700
      %v1857 = vmul.f32 %v1705, %v1705
      %v1858 = vmul.f32 %v1710, %v1710
      %v1859 = vmul.f32 %v1715, %v1715
      %v1860 = vmul.f32 %v1720, %v1720
      %v1861 = vmul.f32 %v1725, %v1725
      %v1862 = vmul.f32 %v1730, %v1730
      %v1863 = vmul.f32 %v1735, %v1735
      %v1864 = vmul.f32 %v1740, %v1740
      %v1865 = vmul.f32 %v1745, %v1745
      %v1866 = vmul.f32 %v1750, %v1750
      %v1867 = vmul.f32 %v1755, %v1755
      %v1868 = vmul.f32 %v1760, %v1760
      %v1869 = vmul.f32 %v1765, %v1765
      %v1870 = vsel %vm1768, %v1850, 0.0
      %1871 = vadd.xlane.f32.xlu0 %v1870
      %v1872 = vpop.xlane.xlu0 %1871
      %v1873 = vsel %vm1768, %v1851, 0.0
      %1874 = vadd.xlane.f32.xlu0 %v1873
      %v1875 = vpop.xlane.xlu0 %1874
      %v1876 = vsel %vm1768, %v1852, 0.0
      %1877 = vadd.xlane.f32.xlu0 %v1876
      %v1878 = vpop.xlane.xlu0 %1877
      %v1879 = vsel %vm1768, %v1853, 0.0
      %1880 = vadd.xlane.f32.xlu0 %v1879
      %v1881 = vpop.xlane.xlu0 %1880
      %v1882 = vsel %vm1768, %v1854, 0.0
      %1883 = vadd.xlane.f32.xlu0 %v1882
      %v1884 = vpop.xlane.xlu0 %1883
      %v1885 = vsel %vm1768, %v1855, 0.0
      %1886 = vadd.xlane.f32.xlu0 %v1885
      %v1887 = vpop.xlane.xlu0 %1886
      %v1888 = vsel %vm1768, %v1856, 0.0
      %1889 = vadd.xlane.f32.xlu0 %v1888
      %v1890 = vpop.xlane.xlu0 %1889
      %v1891 = vsel %vm1768, %v1857, 0.0
      %1892 = vadd.xlane.f32.xlu0 %v1891
      %v1893 = vpop.xlane.xlu0 %1892
      %v1894 = vsel %vm1768, %v1858, 0.0
      %1895 = vadd.xlane.f32.xlu0 %v1894
      %v1896 = vpop.xlane.xlu0 %1895
      %v1897 = vsel %vm1768, %v1859, 0.0
      %1898 = vadd.xlane.f32.xlu0 %v1897
      %v1899 = vpop.xlane.xlu0 %1898
      %v1900 = vsel %vm1768, %v1860, 0.0
      %1901 = vadd.xlane.f32.xlu0 %v1900
      %v1902 = vpop.xlane.xlu0 %1901
      %v1903 = vsel %vm1768, %v1861, 0.0
      %1904 = vadd.xlane.f32.xlu0 %v1903
      %v1905 = vpop.xlane.xlu0 %1904
      %v1906 = vsel %vm1768, %v1862, 0.0
      %1907 = vadd.xlane.f32.xlu0 %v1906
      %v1908 = vpop.xlane.xlu0 %1907
      %v1909 = vsel %vm1768, %v1863, 0.0
      %1910 = vadd.xlane.f32.xlu0 %v1909
      %v1911 = vpop.xlane.xlu0 %1910
      %v1912 = vsel %vm1768, %v1864, 0.0
      %1913 = vadd.xlane.f32.xlu0 %v1912
      %v1914 = vpop.xlane.xlu0 %1913
      %v1915 = vsel %vm1768, %v1865, 0.0
      %1916 = vadd.xlane.f32.xlu0 %v1915
      %v1917 = vpop.xlane.xlu0 %1916
      %v1918 = vsel %vm1768, %v1866, 0.0
      %1919 = vadd.xlane.f32.xlu0 %v1918
      %v1920 = vpop.xlane.xlu0 %1919
      %v1921 = vsel %vm1768, %v1867, 0.0
      %1922 = vadd.xlane.f32.xlu0 %v1921
      %v1923 = vpop.xlane.xlu0 %1922
      %v1924 = vsel %vm1768, %v1868, 0.0
      %1925 = vadd.xlane.f32.xlu0 %v1924
      %v1926 = vpop.xlane.xlu0 %1925
      %v1927 = vsel %vm1768, %v1869, 0.0
      %1928 = vadd.xlane.f32.xlu0 %v1927
      %v1929 = vpop.xlane.xlu0 %1928
      %v1930 = vmul.f32 %v1872, %v1829
      %v1931 = vmul.f32 %v1875, %v1829
      %v1932 = vmul.f32 %v1878, %v1829
      %v1933 = vmul.f32 %v1881, %v1829
      %v1934 = vmul.f32 %v1884, %v1829
      %v1935 = vmul.f32 %v1887, %v1829
      %v1936 = vmul.f32 %v1890, %v1829
      %v1937 = vmul.f32 %v1893, %v1829
      %v1938 = vmul.f32 %v1896, %v1829
      %v1939 = vmul.f32 %v1899, %v1829
      %v1940 = vmul.f32 %v1902, %v1829
      %v1941 = vmul.f32 %v1905, %v1829
      %v1942 = vmul.f32 %v1908, %v1829
      %v1943 = vmul.f32 %v1911, %v1829
      %v1944 = vmul.f32 %v1914, %v1829
      %v1945 = vmul.f32 %v1917, %v1829
      %v1946 = vmul.f32 %v1920, %v1829
      %v1947 = vmul.f32 %v1923, %v1829
      %v1948 = vmul.f32 %v1926, %v1829
      %v1949 = vmul.f32 %v1929, %v1829
      %v1950 = vmul.f32 %v1830, %v1830
      %v1951 = vmul.f32 %v1831, %v1831
      %v1952 = vmul.f32 %v1832, %v1832
      %v1953 = vmul.f32 %v1833, %v1833
      %v1954 = vmul.f32 %v1834, %v1834
      %v1955 = vmul.f32 %v1835, %v1835
      %v1956 = vmul.f32 %v1836, %v1836
      %v1957 = vmul.f32 %v1837, %v1837
      %v1958 = vmul.f32 %v1838, %v1838
      %v1959 = vmul.f32 %v1839, %v1839
      %v1960 = vmul.f32 %v1840, %v1840
      %v1961 = vmul.f32 %v1841, %v1841
      %v1962 = vmul.f32 %v1842, %v1842
      %v1963 = vmul.f32 %v1843, %v1843
      %v1964 = vmul.f32 %v1844, %v1844
      %v1965 = vmul.f32 %v1845, %v1845
      %v1966 = vmul.f32 %v1846, %v1846
      %v1967 = vmul.f32 %v1847, %v1847
      %v1968 = vmul.f32 %v1848, %v1848
      %v1969 = vmul.f32 %v1849, %v1849
      %v1970 = vsub.f32 %v1930, %v1950
      %v1971 = vsub.f32 %v1931, %v1951
      %v1972 = vsub.f32 %v1932, %v1952
      %v1973 = vsub.f32 %v1933, %v1953
      %v1974 = vsub.f32 %v1934, %v1954
      %v1975 = vsub.f32 %v1935, %v1955
      %v1976 = vsub.f32 %v1936, %v1956
      %v1977 = vsub.f32 %v1937, %v1957
      %v1978 = vsub.f32 %v1938, %v1958
      %v1979 = vsub.f32 %v1939, %v1959
      %v1980 = vsub.f32 %v1940, %v1960
      %v1981 = vsub.f32 %v1941, %v1961
      %v1982 = vsub.f32 %v1942, %v1962
      %v1983 = vsub.f32 %v1943, %v1963
      %v1984 = vsub.f32 %v1944, %v1964
      %v1985 = vsub.f32 %v1945, %v1965
      %v1986 = vsub.f32 %v1946, %v1966
      %v1987 = vsub.f32 %v1947, %v1967
      %v1988 = vsub.f32 %v1948, %v1968
      %v1989 = vsub.f32 %v1949, %v1969
      %v1990 = vmax.f32 %v1970, 0.0
      %v1991 = vmax.f32 %v1971, 0.0
      %v1992 = vmax.f32 %v1972, 0.0
      %v1993 = vmax.f32 %v1973, 0.0
      %v1994 = vmax.f32 %v1974, 0.0
      %v1995 = vmax.f32 %v1975, 0.0
      %v1996 = vmax.f32 %v1976, 0.0
      %v1997 = vmax.f32 %v1977, 0.0
      %v1998 = vmax.f32 %v1978, 0.0
      %v1999 = vmax.f32 %v1979, 0.0
      %v2000 = vmax.f32 %v1980, 0.0
      %v2001 = vmax.f32 %v1981, 0.0
      %v2002 = vmax.f32 %v1982, 0.0
      %v2003 = vmax.f32 %v1983, 0.0
      %v2004 = vmax.f32 %v1984, 0.0
      %v2005 = vmax.f32 %v1985, 0.0
      %v2006 = vmax.f32 %v1986, 0.0
      %v2007 = vmax.f32 %v1987, 0.0
      %v2008 = vmax.f32 %v1988, 0.0
      %v2009 = vmax.f32 %v1989, 0.0
      %v2010 = vsub.f32 %v1670, %v1830
      %v2011 = vsub.f32 %v1675, %v1831
      %v2012 = vsub.f32 %v1680, %v1832
      %v2013 = vsub.f32 %v1685, %v1833
      %v2014 = vsub.f32 %v1690, %v1834
      %v2015 = vsub.f32 %v1695, %v1835
      %v2016 = vsub.f32 %v1700, %v1836
      %v2017 = vsub.f32 %v1705, %v1837
      %v2018 = vsub.f32 %v1710, %v1838
      %v2019 = vsub.f32 %v1715, %v1839
      %v2020 = vsub.f32 %v1720, %v1840
      %v2021 = vsub.f32 %v1725, %v1841
      %v2022 = vsub.f32 %v1730, %v1842
      %v2023 = vsub.f32 %v1735, %v1843
      %v2024 = vsub.f32 %v1740, %v1844
      %v2025 = vsub.f32 %v1745, %v1845
      %v2026 = vsub.f32 %v1750, %v1846
      %v2027 = vsub.f32 %v1755, %v1847
      %v2028 = vsub.f32 %v1760, %v1848
      %v2029 = vsub.f32 %v1765, %v1849
      %v2030 = vadd.f32 %v1990, 1e-05
      %v2031 = vadd.f32 %v1991, 1e-05
      %v2032 = vadd.f32 %v1992, 1e-05
      %v2033 = vadd.f32 %v1993, 1e-05
      %v2034 = vadd.f32 %v1994, 1e-05
      %v2035 = vadd.f32 %v1995, 1e-05
      %v2036 = vadd.f32 %v1996, 1e-05
      %v2037 = vadd.f32 %v1997, 1e-05
      %v2038 = vadd.f32 %v1998, 1e-05
      %v2039 = vadd.f32 %v1999, 1e-05
      %v2040 = vadd.f32 %v2000, 1e-05
      %v2041 = vadd.f32 %v2001, 1e-05
      %v2042 = vadd.f32 %v2002, 1e-05
      %v2043 = vadd.f32 %v2003, 1e-05
      %v2044 = vadd.f32 %v2004, 1e-05
      %v2045 = vadd.f32 %v2005, 1e-05
      %v2046 = vadd.f32 %v2006, 1e-05
      %v2047 = vadd.f32 %v2007, 1e-05
      %v2048 = vadd.f32 %v2008, 1e-05
      %v2049 = vadd.f32 %v2009, 1e-05
      %v2050 = vrsqrt.pop %v2030
      %v2051 = vrsqrt.pop %v2031
      %v2052 = vrsqrt.pop %v2032
      %v2053 = vrsqrt.pop %v2033
      %v2054 = vrsqrt.pop %v2034
      %v2055 = vrsqrt.pop %v2035
      %v2056 = vrsqrt.pop %v2036
      %v2057 = vrsqrt.pop %v2037
      %v2058 = vrsqrt.pop %v2038
      %v2059 = vrsqrt.pop %v2039
      %v2060 = vrsqrt.pop %v2040
      %v2061 = vrsqrt.pop %v2041
      %v2062 = vrsqrt.pop %v2042
      %v2063 = vrsqrt.pop %v2043
      %v2064 = vrsqrt.pop %v2044
      %v2065 = vrsqrt.pop %v2045
      %v2066 = vrsqrt.pop %v2046
      %v2067 = vrsqrt.pop %v2047
      %v2068 = vrsqrt.pop %v2048
      %v2069 = vrsqrt.pop %v2049
      %v2070 = vmul.f32 %v2010, %v2050
      %v2071 = vmul.f32 %v2011, %v2051
      %v2072 = vmul.f32 %v2012, %v2052
      %v2073 = vmul.f32 %v2013, %v2053
      %v2074 = vmul.f32 %v2014, %v2054
      %v2075 = vmul.f32 %v2015, %v2055
      %v2076 = vmul.f32 %v2016, %v2056
      %v2077 = vmul.f32 %v2017, %v2057
      %v2078 = vmul.f32 %v2018, %v2058
      %v2079 = vmul.f32 %v2019, %v2059
      %v2080 = vmul.f32 %v2020, %v2060
      %v2081 = vmul.f32 %v2021, %v2061
      %v2082 = vmul.f32 %v2022, %v2062
      %v2083 = vmul.f32 %v2023, %v2063
      %v2084 = vmul.f32 %v2024, %v2064
      %v2085 = vmul.f32 %v2025, %v2065
      %v2086 = vmul.f32 %v2026, %v2066
      %v2087 = vmul.f32 %v2027, %v2067
      %v2088 = vmul.f32 %v2028, %v2068
      %v2089 = vmul.f32 %v2029, %v2069
      %v2090 = vld [vmem:[%s9] sm:$0x1]
      %v2092 = vlaneseq
      %v2093 = vshrl.u32 %v2092, 7
      %v2094 = vsub.s32 0, %v2093
      %v2095 = vrot.slane %v2090, %v2094
      %v2097 = vmul.f32 %v2070, %v2095
      %v2098 = vmul.f32 %v2071, %v2095
      %v2099 = vmul.f32 %v2072, %v2095
      %v2100 = vmul.f32 %v2073, %v2095
      %v2101 = vmul.f32 %v2074, %v2095
      %v2102 = vmul.f32 %v2075, %v2095
      %v2103 = vmul.f32 %v2076, %v2095
      %v2104 = vmul.f32 %v2077, %v2095
      %v2105 = vmul.f32 %v2078, %v2095
      %v2106 = vmul.f32 %v2079, %v2095
      %v2107 = vmul.f32 %v2080, %v2095
      %v2108 = vmul.f32 %v2081, %v2095
      %v2109 = vmul.f32 %v2082, %v2095
      %v2110 = vmul.f32 %v2083, %v2095
      %v2111 = vmul.f32 %v2084, %v2095
      %v2112 = vmul.f32 %v2085, %v2095
      %v2113 = vmul.f32 %v2086, %v2095
      %v2114 = vmul.f32 %v2087, %v2095
      %v2115 = vmul.f32 %v2088, %v2095
      %v2116 = vmul.f32 %v2089, %v2095
      %v2117 = vld [vmem:[%s10] sm:$0x1]
      %v2119 = vlaneseq
      %v2120 = vshrl.u32 %v2119, 7
      %v2121 = vsub.s32 0, %v2120
      %v2122 = vrot.slane %v2117, %v2121
      %v2124 = vadd.f32 %v2097, %v2122
      %v2125 = vadd.f32 %v2098, %v2122
      %v2126 = vadd.f32 %v2099, %v2122
      %v2127 = vadd.f32 %v2100, %v2122
      %v2128 = vadd.f32 %v2101, %v2122
      %v2129 = vadd.f32 %v2102, %v2122
      %v2130 = vadd.f32 %v2103, %v2122
      %v2131 = vadd.f32 %v2104, %v2122
      %v2132 = vadd.f32 %v2105, %v2122
      %v2133 = vadd.f32 %v2106, %v2122
      %v2134 = vadd.f32 %v2107, %v2122
      %v2135 = vadd.f32 %v2108, %v2122
      %v2136 = vadd.f32 %v2109, %v2122
      %v2137 = vadd.f32 %v2110, %v2122
      %v2138 = vadd.f32 %v2111, %v2122
      %v2139 = vadd.f32 %v2112, %v2122
      %v2140 = vadd.f32 %v2113, %v2122
      %v2141 = vadd.f32 %v2114, %v2122
      %v2142 = vadd.f32 %v2115, %v2122
      %v2143 = vadd.f32 %v2116, %v2122
      %v2144 = vld [vmem:[%s11] sm:$0xff]
      %v2145 = vld [vmem:[%s12] sm:$0x1]
      %v2147 = vlaneseq
      %v2148 = vshrl.u32 %v2147, 7
      %v2149 = vsub.s32 0, %v2148
      %v2150 = vrot.slane %v2145, %v2149
      %v2153 = vsel %vm1768, %v2124, 0
      %v2156 = vsel %vm1768, %v2125, 0
      %v2159 = vsel %vm1768, %v2126, 0
      %v2162 = vsel %vm1768, %v2127, 0
      %v2165 = vsel %vm1768, %v2128, 0
      %v2168 = vsel %vm1768, %v2129, 0
      %v2171 = vsel %vm1768, %v2130, 0
      %v2174 = vsel %vm1768, %v2131, 0
      %v2177 = vsel %vm1768, %v2132, 0
      %v2180 = vsel %vm1768, %v2133, 0
      %v2183 = vsel %vm1768, %v2134, 0
      %v2186 = vsel %vm1768, %v2135, 0
      %v2189 = vsel %vm1768, %v2136, 0
      %v2192 = vsel %vm1768, %v2137, 0
      %v2195 = vsel %vm1768, %v2138, 0
      %v2198 = vsel %vm1768, %v2139, 0
      %v2201 = vsel %vm1768, %v2140, 0
      %v2204 = vsel %vm1768, %v2141, 0
      %v2207 = vsel %vm1768, %v2142, 0
      %v2210 = vsel %vm1768, %v2143, 0
      %2212 = vmatprep.subr.mxu0 0.0
      %2213 = vmatpush1.msra.mxu0 %v2144
      %2214 = vmatprep.subr.mxu0 0.0
      %2215 = vmatpush1.msra.mxu0 0.0
      %2216 = vmatprep.subr.mxu0 0.0
      %2217 = vmatpush1.msra.mxu0 0.0
      %2218 = vmatprep.subr.mxu0 0.0
      %2219 = vmatpush1.msra.mxu0 0.0
      %2220 = vmatprep.subr.mxu0 0.0
      %2221 = vmatpush1.msra.mxu0 0.0
      %2222 = vmatprep.subr.mxu0 0.0
      %2223 = vmatpush1.msra.mxu0 0.0
      %2224 = vmatprep.subr.mxu0 0.0
      %2225 = vmatpush1.msra.mxu0 0.0
      %2226 = vmatprep.subr.mxu0 0.0
      %2227 = vmatpush1.msra.mxu0 0.0
      %2228 = vmatprep.subr.mxu0 0.0
      %2229 = vmatpush1.msra.mxu0 0.0
      %2230 = vmatprep.subr.mxu0 0.0
      %2231 = vmatpush1.msra.mxu0 0.0
      %2232 = vmatprep.subr.mxu0 0.0
      %2233 = vmatpush1.msra.mxu0 0.0
      %2234 = vmatprep.subr.mxu0 0.0
      %2235 = vmatpush1.msra.mxu0 0.0
      %2236 = vmatprep.subr.mxu0 0.0
      %2237 = vmatpush1.msra.mxu0 0.0
      %2238 = vmatprep.subr.mxu0 0.0
      %2239 = vmatpush1.msra.mxu0 0.0
      %2240 = vmatprep.subr.mxu0 0.0
      %2241 = vmatpush1.msra.mxu0 0.0
      %2242 = vmatprep.subr.mxu0 0.0
      %2243 = vmatpush1.msra.mxu0 0.0
      %2244 = vmatprep.subr.mxu0 0.0
      %2245 = vmatpush1.msra.mxu0 0.0
      %2246 = vmatprep.subr.mxu0 0.0
      %2247 = vmatpush1.msra.mxu0 0.0
      %2248 = vmatprep.subr.mxu0 0.0
      %2249 = vmatpush1.msra.mxu0 0.0
      %2250 = vmatprep.subr.mxu0 0.0
      %2251 = vmatpush1.msra.mxu0 0.0
      %2252 = vmatprep.subr.mxu0 0.0
      %2253 = vmatpush1.msra.mxu0 0.0
      %2254 = vmatprep.subr.mxu0 0.0
      %2255 = vmatpush1.msra.mxu0 0.0
      %2256 = vmatprep.subr.mxu0 0.0
      %2257 = vmatpush1.msra.mxu0 0.0
      %2258 = vmatprep.subr.mxu0 0.0
      %2259 = vmatpush1.msra.mxu0 0.0
      %2260 = vmatprep.subr.mxu0 0.0
      %2261 = vmatpush1.msra.mxu0 0.0
      %2262 = vmatprep.subr.mxu0 0.0
      %2263 = vmatpush1.msra.mxu0 0.0
      %2264 = vmatprep.subr.mxu0 0.0
      %2265 = vmatpush1.msra.mxu0 0.0
      %2266 = vmatprep.subr.mxu0 0.0
      %2267 = vmatpush1.msra.mxu0 0.0
      %2268 = vmatprep.subr.mxu0 0.0
      %2269 = vmatpush1.msra.mxu0 0.0
      %2270 = vmatprep.subr.mxu0 0.0
      %2271 = vmatpush1.msra.mxu0 0.0
      %2272 = vmatprep.subr.mxu0 0.0
      %2273 = vmatpush1.msra.mxu0 0.0
      %2274 = vmatprep.subr.mxu0 0.0
      %2275 = vmatpush1.msra.mxu0 0.0
      %2276 = vmatprep.mubr.f32.mxu0 0.0
      %2277 = vmatmul.mubr.f32.gmra.mrb[0].mxu0 %v2153
      %v2278 = vpop.f32.mrb[0].mxu0
      %v2279 = vadd.f32 %v2150, %v2278
      %v2280 = vpop.f32.mrb[0].mxu0
      %2281 = vmatprep.mubr.f32.mxu0 0.0
      %2282 = vmatmul.mubr.f32.gmra.mrb[0].mxu0 %v2156
      %v2283 = vpop.f32.mrb[0].mxu0
      %v2284 = vadd.f32 %v2150, %v2283
      %v2285 = vpop.f32.mrb[0].mxu0
      %2286 = vmatprep.mubr.f32.mxu0 0.0
      %2287 = vmatmul.mubr.f32.gmra.mrb[0].mxu0 %v2159
      %v2288 = vpop.f32.mrb[0].mxu0
      %v2289 = vadd.f32 %v2150, %v2288
      %v2290 = vpop.f32.mrb[0].mxu0
      %2291 = vmatprep.mubr.f32.mxu0 0.0
      %2292 = vmatmul.mubr.f32.gmra.mrb[0].mxu0 %v2162
      %v2293 = vpop.f32.mrb[0].mxu0
      %v2294 = vadd.f32 %v2150, %v2293
      %v2295 = vpop.f32.mrb[0].mxu0
      %2296 = vmatprep.mubr.f32.mxu0 0.0
      %2297 = vmatmul.mubr.f32.gmra.mrb[0].mxu0 %v2165
      %v2298 = vpop.f32.mrb[0].mxu0
      %v2299 = vadd.f32 %v2150, %v2298
      %v2300 = vpop.f32.mrb[0].mxu0
      %2301 = vmatprep.mubr.f32.mxu0 0.0
      %2302 = vmatmul.mubr.f32.gmra.mrb[0].mxu0 %v2168
      %v2303 = vpop.f32.mrb[0].mxu0
      %v2304 = vadd.f32 %v2150, %v2303
      %v2305 = vpop.f32.mrb[0].mxu0
      %2306 = vmatprep.mubr.f32.mxu0 0.0
      %2307 = vmatmul.mubr.f32.gmra.mrb[0].mxu0 %v2171
      %v2308 = vpop.f32.mrb[0].mxu0
      %v2309 = vadd.f32 %v2150, %v2308
      %v2310 = vpop.f32.mrb[0].mxu0
      %2311 = vmatprep.mubr.f32.mxu0 0.0
      %2312 = vmatmul.mubr.f32.gmra.mrb[0].mxu0 %v2174
      %v2313 = vpop.f32.mrb[0].mxu0
      %v2314 = vadd.f32 %v2150, %v2313
      %v2315 = vpop.f32.mrb[0].mxu0
      %2316 = vmatprep.mubr.f32.mxu0 0.0
      %2317 = vmatmul.mubr.f32.gmra.mrb[0].mxu0 %v2177
      %v2318 = vpop.f32.mrb[0].mxu0
      %v2319 = vadd.f32 %v2150, %v2318
      %v2320 = vpop.f32.mrb[0].mxu0
      %2321 = vmatprep.mubr.f32.mxu0 0.0
      %2322 = vmatmul.mubr.f32.gmra.mrb[0].mxu0 %v2180
      %v2323 = vpop.f32.mrb[0].mxu0
      %v2324 = vadd.f32 %v2150, %v2323
      %v2325 = vpop.f32.mrb[0].mxu0
      %2326 = vmatprep.mubr.f32.mxu0 0.0
      %2327 = vmatmul.mubr.f32.gmra.mrb[0].mxu0 %v2183
      %v2328 = vpop.f32.mrb[0].mxu0
      %v2329 = vadd.f32 %v2150, %v2328
      %v2330 = vpop.f32.mrb[0].mxu0
      %2331 = vmatprep.mubr.f32.mxu0 0.0
      %2332 = vmatmul.mubr.f32.gmra.mrb[0].mxu0 %v2186
      %v2333 = vpop.f32.mrb[0].mxu0
      %v2334 = vadd.f32 %v2150, %v2333
      %v2335 = vpop.f32.mrb[0].mxu0
      %2336 = vmatprep.mubr.f32.mxu0 0.0
      %2337 = vmatmul.mubr.f32.gmra.mrb[0].mxu0 %v2189
      %v2338 = vpop.f32.mrb[0].mxu0
      %v2339 = vadd.f32 %v2150, %v2338
      %v2340 = vpop.f32.mrb[0].mxu0
      %2341 = vmatprep.mubr.f32.mxu0 0.0
      %2342 = vmatmul.mubr.f32.gmra.mrb[0].mxu0 %v2192
      %v2343 = vpop.f32.mrb[0].mxu0
      %v2344 = vadd.f32 %v2150, %v2343
      %v2345 = vpop.f32.mrb[0].mxu0
      %2346 = vmatprep.mubr.f32.mxu0 0.0
      %2347 = vmatmul.mubr.f32.gmra.mrb[0].mxu0 %v2195
      %v2348 = vpop.f32.mrb[0].mxu0
      %v2349 = vadd.f32 %v2150, %v2348
      %v2350 = vpop.f32.mrb[0].mxu0
      %2351 = vmatprep.mubr.f32.mxu0 0.0
      %2352 = vmatmul.mubr.f32.gmra.mrb[0].mxu0 %v2198
      %v2353 = vpop.f32.mrb[0].mxu0
      %v2354 = vadd.f32 %v2150, %v2353
      %v2355 = vpop.f32.mrb[0].mxu0
      %2356 = vmatprep.mubr.f32.mxu0 0.0
      %2357 = vmatmul.mubr.f32.gmra.mrb[0].mxu0 %v2201
      %v2358 = vpop.f32.mrb[0].mxu0
      %v2359 = vadd.f32 %v2150, %v2358
      %v2360 = vpop.f32.mrb[0].mxu0
      %2361 = vmatprep.mubr.f32.mxu0 0.0
      %2362 = vmatmul.mubr.f32.gmra.mrb[0].mxu0 %v2204
      %v2363 = vpop.f32.mrb[0].mxu0
      %v2364 = vadd.f32 %v2150, %v2363
      %v2365 = vpop.f32.mrb[0].mxu0
      %2366 = vmatprep.mubr.f32.mxu0 0.0
      %2367 = vmatmul.mubr.f32.gmra.mrb[0].mxu0 %v2207
      %v2368 = vpop.f32.mrb[0].mxu0
      %v2369 = vadd.f32 %v2150, %v2368
      %v2370 = vpop.f32.mrb[0].mxu0
      %2371 = vmatprep.mubr.f32.mxu0 0.0
      %2372 = vmatmul.mubr.f32.gmra.mrb[0].mxu0 %v2210
      %v2373 = vpop.f32.mrb[0].mxu0
      %v2374 = vadd.f32 %v2150, %v2373
      %v2375 = vpop.f32.mrb[0].mxu0
      %2376 = vdwg.mxu0
      %vm2377 = vcmask 261120
      %2378 = vst.msk [vmem:[#allocation2] sm:$0xff] %vm2377, %v2279
      %2379 = vst.msk [vmem:[#allocation2 + $0x8] sm:$0xff] %vm2377, %v2284
      %2380 = vst.msk [vmem:[#allocation2 + $0x10] sm:$0xff] %vm2377, %v2289
      %2381 = vst.msk [vmem:[#allocation2 + $0x18] sm:$0xff] %vm2377, %v2294
      %2382 = vst.msk [vmem:[#allocation2 + $0x20] sm:$0xff] %vm2377, %v2299
      %2383 = vst.msk [vmem:[#allocation2 + $0x28] sm:$0xff] %vm2377, %v2304
      %2384 = vst.msk [vmem:[#allocation2 + $0x30] sm:$0xff] %vm2377, %v2309
      %2385 = vst.msk [vmem:[#allocation2 + $0x38] sm:$0xff] %vm2377, %v2314
      %2386 = vst.msk [vmem:[#allocation2 + $0x40] sm:$0xff] %vm2377, %v2319
      %2387 = vst.msk [vmem:[#allocation2 + $0x48] sm:$0xff] %vm2377, %v2324
      %2388 = vst.msk [vmem:[#allocation2 + $0x50] sm:$0xff] %vm2377, %v2329
      %2389 = vst.msk [vmem:[#allocation2 + $0x58] sm:$0xff] %vm2377, %v2334
      %2390 = vst.msk [vmem:[#allocation2 + $0x60] sm:$0xff] %vm2377, %v2339
      %2391 = vst.msk [vmem:[#allocation2 + $0x68] sm:$0xff] %vm2377, %v2344
      %2392 = vst.msk [vmem:[#allocation2 + $0x70] sm:$0xff] %vm2377, %v2349
      %2393 = vst.msk [vmem:[#allocation2 + $0x78] sm:$0xff] %vm2377, %v2354
      %2394 = vst.msk [vmem:[#allocation2 + $0x80] sm:$0xff] %vm2377, %v2359
      %2395 = vst.msk [vmem:[#allocation2 + $0x88] sm:$0xff] %vm2377, %v2364
      %2396 = vst.msk [vmem:[#allocation2 + $0x90] sm:$0xff] %vm2377, %v2369
      %2397 = vst.msk [vmem:[#allocation2 + $0x98] sm:$0xff] %vm2377, %v2374
      %p2398 = scmp.eq.s32.totalorder %s33, 0
      // Predicated region
      $region89: #{tpu_custom_call.1} parent=87 // pred_check
        %p2399 = pneg %p2398
      $region90: #{tpu_custom_call.1} parent=87 // pred_check_branch
        %2401 = sbr.rel (%p2399) target = $region92
      $region91: #{tpu_custom_call.1} parent=87 // pred_region
        %2402 = vst.msk [vmem:[#allocation2] sm:$0xff] %vm2377, 0.0
        %2403 = vst.msk [vmem:[#allocation2 + $0x8] sm:$0xff] %vm2377, 0.0
      $region92: #{tpu_custom_call.1} parent=87 // pred_fallthru
        _
      %p2404 = scmp.eq.s32.totalorder %s33, 1
      // Predicated region
      $region93: #{tpu_custom_call.1} parent=87 // pred_check
        %p2405 = pneg %p2404
      $region94: #{tpu_custom_call.1} parent=87 // pred_check_branch
        %2407 = sbr.rel (%p2405) target = $region96
      $region95: #{tpu_custom_call.1} parent=87 // pred_region
        %s2408 = scalar_lea.vmem [#allocation2], 144
        %2409 = vst.msk [vmem:[%s2408] sm:$0xff] %vm2377, 0.0
        %2410 = vst.msk [vmem:[%s2408 + $0x8] sm:$0xff] %vm2377, 0.0
      $region96: #{tpu_custom_call.1} parent=87 // pred_fallthru
        _
      %v2411 = vld [vmem:[%s13] sm:$0xff]
      %v2412 = vld [vmem:[%s13 + $0x8] sm:$0x1]
      %v2413 = vld [vmem:[#allocation2] sm:$0xff]
      %v2414 = vld [vmem:[#allocation2 + $0x8] sm:$0xff]
      %v2415 = vld [vmem:[#allocation2 + $0x10] sm:$0xff]
      %v2416 = vld [vmem:[#allocation2 + $0x18] sm:$0xff]
      %v2417 = vld [vmem:[#allocation2 + $0x20] sm:$0xff]
      %v2418 = vld [vmem:[#allocation2 + $0x28] sm:$0xff]
      %v2419 = vld [vmem:[#allocation2 + $0x30] sm:$0xff]
      %v2420 = vld [vmem:[#allocation2 + $0x38] sm:$0xff]
      %v2421 = vld [vmem:[#allocation2 + $0x40] sm:$0xff]
      %v2422 = vld [vmem:[#allocation2 + $0x48] sm:$0xff]
      %v2423 = vld [vmem:[#allocation2 + $0x50] sm:$0xff]
      %v2424 = vld [vmem:[#allocation2 + $0x58] sm:$0xff]
      %v2425 = vld [vmem:[#allocation2 + $0x60] sm:$0xff]
      %v2426 = vld [vmem:[#allocation2 + $0x68] sm:$0xff]
      %v2427 = vld [vmem:[#allocation2 + $0x70] sm:$0xff]
      %v2428 = vld [vmem:[#allocation2 + $0x78] sm:$0xff]
      %v2429 = vlaneseq
      %v2430 = vshrl.u32 %v2429, 7
      %v2431 = vsub.s32 0, %v2430
      %v2432 = vrot.slane %v2411, %v2431
      %v2433 = vmul.f32 %v2413, %v2432
      %v2434 = vmul.f32 %v2414, %v2432
      %v2435 = vmul.f32 %v2415, %v2432
      %v2436 = vmul.f32 %v2416, %v2432
      %v2437 = vmul.f32 %v2417, %v2432
      %v2438 = vmul.f32 %v2418, %v2432
      %v2439 = vmul.f32 %v2419, %v2432
      %v2440 = vmul.f32 %v2420, %v2432
      %v2441 = vmul.f32 %v2421, %v2432
      %v2442 = vmul.f32 %v2422, %v2432
      %v2443 = vmul.f32 %v2423, %v2432
      %v2444 = vmul.f32 %v2424, %v2432
      %v2445 = vmul.f32 %v2425, %v2432
      %v2446 = vmul.f32 %v2426, %v2432
      %v2447 = vmul.f32 %v2427, %v2432
      %v2448 = vmul.f32 %v2428, %v2432
      %s2449 = scalar_lea.vmem [#allocation2], 16
      %v2450 = vld [vmem:[%s2449] sm:$0xff]
      %v2451 = vld [vmem:[%s2449 + $0x8] sm:$0xff]
      %v2452 = vld [vmem:[%s2449 + $0x10] sm:$0xff]
      %v2453 = vld [vmem:[%s2449 + $0x18] sm:$0xff]
      %v2454 = vld [vmem:[%s2449 + $0x20] sm:$0xff]
      %v2455 = vld [vmem:[%s2449 + $0x28] sm:$0xff]
      %v2456 = vld [vmem:[%s2449 + $0x30] sm:$0xff]
      %v2457 = vld [vmem:[%s2449 + $0x38] sm:$0xff]
      %v2458 = vld [vmem:[%s2449 + $0x40] sm:$0xff]
      %v2459 = vld [vmem:[%s2449 + $0x48] sm:$0xff]
      %v2460 = vld [vmem:[%s2449 + $0x50] sm:$0xff]
      %v2461 = vld [vmem:[%s2449 + $0x58] sm:$0xff]
      %v2462 = vld [vmem:[%s2449 + $0x60] sm:$0xff]
      %v2463 = vld [vmem:[%s2449 + $0x68] sm:$0xff]
      %v2464 = vld [vmem:[%s2449 + $0x70] sm:$0xff]
      %v2465 = vld [vmem:[%s2449 + $0x78] sm:$0xff]
      %v2466 = vlaneseq
      %v2467 = vshrl.u32 %v2466, 7
      %v2468 = vsub.s32 3, %v2467
      %v2469 = vrot.slane %v2411, %v2468
      %v2470 = vmul.f32 %v2450, %v2469
      %v2471 = vmul.f32 %v2451, %v2469
      %v2472 = vmul.f32 %v2452, %v2469
      %v2473 = vmul.f32 %v2453, %v2469
      %v2474 = vmul.f32 %v2454, %v2469
      %v2475 = vmul.f32 %v2455, %v2469
      %v2476 = vmul.f32 %v2456, %v2469
      %v2477 = vmul.f32 %v2457, %v2469
      %v2478 = vmul.f32 %v2458, %v2469
      %v2479 = vmul.f32 %v2459, %v2469
      %v2480 = vmul.f32 %v2460, %v2469
      %v2481 = vmul.f32 %v2461, %v2469
      %v2482 = vmul.f32 %v2462, %v2469
      %v2483 = vmul.f32 %v2463, %v2469
      %v2484 = vmul.f32 %v2464, %v2469
      %v2485 = vmul.f32 %v2465, %v2469
      %v2486 = vadd.f32 %v2433, %v2470
      %v2487 = vadd.f32 %v2434, %v2471
      %v2488 = vadd.f32 %v2435, %v2472
      %v2489 = vadd.f32 %v2436, %v2473
      %v2490 = vadd.f32 %v2437, %v2474
      %v2491 = vadd.f32 %v2438, %v2475
      %v2492 = vadd.f32 %v2439, %v2476
      %v2493 = vadd.f32 %v2440, %v2477
      %v2494 = vadd.f32 %v2441, %v2478
      %v2495 = vadd.f32 %v2442, %v2479
      %v2496 = vadd.f32 %v2443, %v2480
      %v2497 = vadd.f32 %v2444, %v2481
      %v2498 = vadd.f32 %v2445, %v2482
      %v2499 = vadd.f32 %v2446, %v2483
      %v2500 = vadd.f32 %v2447, %v2484
      %v2501 = vadd.f32 %v2448, %v2485
      %s2502 = scalar_lea.vmem [#allocation2], 32
      %v2503 = vld [vmem:[%s2502] sm:$0xff]
      %v2504 = vld [vmem:[%s2502 + $0x8] sm:$0xff]
      %v2505 = vld [vmem:[%s2502 + $0x10] sm:$0xff]
      %v2506 = vld [vmem:[%s2502 + $0x18] sm:$0xff]
      %v2507 = vld [vmem:[%s2502 + $0x20] sm:$0xff]
      %v2508 = vld [vmem:[%s2502 + $0x28] sm:$0xff]
      %v2509 = vld [vmem:[%s2502 + $0x30] sm:$0xff]
      %v2510 = vld [vmem:[%s2502 + $0x38] sm:$0xff]
      %v2511 = vld [vmem:[%s2502 + $0x40] sm:$0xff]
      %v2512 = vld [vmem:[%s2502 + $0x48] sm:$0xff]
      %v2513 = vld [vmem:[%s2502 + $0x50] sm:$0xff]
      %v2514 = vld [vmem:[%s2502 + $0x58] sm:$0xff]
      %v2515 = vld [vmem:[%s2502 + $0x60] sm:$0xff]
      %v2516 = vld [vmem:[%s2502 + $0x68] sm:$0xff]
      %v2517 = vld [vmem:[%s2502 + $0x70] sm:$0xff]
      %v2518 = vld [vmem:[%s2502 + $0x78] sm:$0xff]
      %v2519 = vlaneseq
      %v2520 = vshrl.u32 %v2519, 7
      %v2521 = vsub.s32 6, %v2520
      %v2522 = vrot.slane %v2411, %v2521
      %v2523 = vmul.f32 %v2503, %v2522
      %v2524 = vmul.f32 %v2504, %v2522
      %v2525 = vmul.f32 %v2505, %v2522
      %v2526 = vmul.f32 %v2506, %v2522
      %v2527 = vmul.f32 %v2507, %v2522
      %v2528 = vmul.f32 %v2508, %v2522
      %v2529 = vmul.f32 %v2509, %v2522
      %v2530 = vmul.f32 %v2510, %v2522
      %v2531 = vmul.f32 %v2511, %v2522
      %v2532 = vmul.f32 %v2512, %v2522
      %v2533 = vmul.f32 %v2513, %v2522
      %v2534 = vmul.f32 %v2514, %v2522
      %v2535 = vmul.f32 %v2515, %v2522
      %v2536 = vmul.f32 %v2516, %v2522
      %v2537 = vmul.f32 %v2517, %v2522
      %v2538 = vmul.f32 %v2518, %v2522
      %v2539 = vadd.f32 %v2486, %v2523
      %v2540 = vadd.f32 %v2487, %v2524
      %v2541 = vadd.f32 %v2488, %v2525
      %v2542 = vadd.f32 %v2489, %v2526
      %v2543 = vadd.f32 %v2490, %v2527
      %v2544 = vadd.f32 %v2491, %v2528
      %v2545 = vadd.f32 %v2492, %v2529
      %v2546 = vadd.f32 %v2493, %v2530
      %v2547 = vadd.f32 %v2494, %v2531
      %v2548 = vadd.f32 %v2495, %v2532
      %v2549 = vadd.f32 %v2496, %v2533
      %v2550 = vadd.f32 %v2497, %v2534
      %v2551 = vadd.f32 %v2498, %v2535
      %v2552 = vadd.f32 %v2499, %v2536
      %v2553 = vadd.f32 %v2500, %v2537
      %v2554 = vadd.f32 %v2501, %v2538
      %v2571 = vrot.slane %v2539, 7
      %v2572 = vrot.slane %v2540, 7
      %v2573 = vsel %vm1097, %v2571, %v2572
      %v2574 = vrot.slane %v2541, 7
      %v2575 = vrot.slane %v2542, 7
      %v2576 = vsel %vm1097, %v2574, %v2575
      %v2577 = vrot.slane %v2543, 7
      %v2578 = vrot.slane %v2544, 7
      %v2579 = vsel %vm1097, %v2577, %v2578
      %v2580 = vrot.slane %v2545, 7
      %v2581 = vrot.slane %v2546, 7
      %v2582 = vsel %vm1097, %v2580, %v2581
      %v2583 = vrot.slane %v2547, 7
      %v2584 = vrot.slane %v2548, 7
      %v2585 = vsel %vm1097, %v2583, %v2584
      %v2586 = vrot.slane %v2549, 7
      %v2587 = vrot.slane %v2550, 7
      %v2588 = vsel %vm1097, %v2586, %v2587
      %v2589 = vrot.slane %v2551, 7
      %v2590 = vrot.slane %v2552, 7
      %v2591 = vsel %vm1097, %v2589, %v2590
      %v2592 = vrot.slane %v2553, 7
      %v2593 = vrot.slane %v2554, 7
      %v2594 = vsel %vm1097, %v2592, %v2593
      %v2611 = vsel %vm1097, 0.0, %v2571
      %v2612 = vsel %vm1097, 0.0, %v2574
      %v2613 = vsel %vm1097, 0.0, %v2577
      %v2614 = vsel %vm1097, 0.0, %v2580
      %v2615 = vsel %vm1097, 0.0, %v2583
      %v2616 = vsel %vm1097, 0.0, %v2586
      %v2617 = vsel %vm1097, 0.0, %v2589
      %v2618 = vsel %vm1097, 0.0, %v2592
      %v2619 = vlaneseq
      %v2620 = vshrl.u32 %v2619, 7
      %v2621 = vsub.s32 1, %v2620
      %v2622 = vrot.slane %v2411, %v2621
      %v2623 = vmul.f32 %v2413, %v2622
      %v2624 = vmul.f32 %v2414, %v2622
      %v2625 = vmul.f32 %v2415, %v2622
      %v2626 = vmul.f32 %v2416, %v2622
      %v2627 = vmul.f32 %v2417, %v2622
      %v2628 = vmul.f32 %v2418, %v2622
      %v2629 = vmul.f32 %v2419, %v2622
      %v2630 = vmul.f32 %v2420, %v2622
      %v2631 = vmul.f32 %v2421, %v2622
      %v2632 = vmul.f32 %v2422, %v2622
      %v2633 = vmul.f32 %v2423, %v2622
      %v2634 = vmul.f32 %v2424, %v2622
      %v2635 = vmul.f32 %v2425, %v2622
      %v2636 = vmul.f32 %v2426, %v2622
      %v2637 = vmul.f32 %v2427, %v2622
      %v2638 = vmul.f32 %v2428, %v2622
      %v2639 = vlaneseq
      %v2640 = vshrl.u32 %v2639, 7
      %v2641 = vsub.s32 4, %v2640
      %v2642 = vrot.slane %v2411, %v2641
      %v2643 = vmul.f32 %v2450, %v2642
      %v2644 = vmul.f32 %v2451, %v2642
      %v2645 = vmul.f32 %v2452, %v2642
      %v2646 = vmul.f32 %v2453, %v2642
      %v2647 = vmul.f32 %v2454, %v2642
      %v2648 = vmul.f32 %v2455, %v2642
      %v2649 = vmul.f32 %v2456, %v2642
      %v2650 = vmul.f32 %v2457, %v2642
      %v2651 = vmul.f32 %v2458, %v2642
      %v2652 = vmul.f32 %v2459, %v2642
      %v2653 = vmul.f32 %v2460, %v2642
      %v2654 = vmul.f32 %v2461, %v2642
      %v2655 = vmul.f32 %v2462, %v2642
      %v2656 = vmul.f32 %v2463, %v2642
      %v2657 = vmul.f32 %v2464, %v2642
      %v2658 = vmul.f32 %v2465, %v2642
      %v2659 = vadd.f32 %v2623, %v2643
      %v2660 = vadd.f32 %v2624, %v2644
      %v2661 = vadd.f32 %v2625, %v2645
      %v2662 = vadd.f32 %v2626, %v2646
      %v2663 = vadd.f32 %v2627, %v2647
      %v2664 = vadd.f32 %v2628, %v2648
      %v2665 = vadd.f32 %v2629, %v2649
      %v2666 = vadd.f32 %v2630, %v2650
      %v2667 = vadd.f32 %v2631, %v2651
      %v2668 = vadd.f32 %v2632, %v2652
      %v2669 = vadd.f32 %v2633, %v2653
      %v2670 = vadd.f32 %v2634, %v2654
      %v2671 = vadd.f32 %v2635, %v2655
      %v2672 = vadd.f32 %v2636, %v2656
      %v2673 = vadd.f32 %v2637, %v2657
      %v2674 = vadd.f32 %v2638, %v2658
      %v2675 = vlaneseq
      %v2676 = vshrl.u32 %v2675, 7
      %v2677 = vsub.s32 7, %v2676
      %v2678 = vrot.slane %v2411, %v2677
      %v2679 = vmul.f32 %v2503, %v2678
      %v2680 = vmul.f32 %v2504, %v2678
      %v2681 = vmul.f32 %v2505, %v2678
      %v2682 = vmul.f32 %v2506, %v2678
      %v2683 = vmul.f32 %v2507, %v2678
      %v2684 = vmul.f32 %v2508, %v2678
      %v2685 = vmul.f32 %v2509, %v2678
      %v2686 = vmul.f32 %v2510, %v2678
      %v2687 = vmul.f32 %v2511, %v2678
      %v2688 = vmul.f32 %v2512, %v2678
      %v2689 = vmul.f32 %v2513, %v2678
      %v2690 = vmul.f32 %v2514, %v2678
      %v2691 = vmul.f32 %v2515, %v2678
      %v2692 = vmul.f32 %v2516, %v2678
      %v2693 = vmul.f32 %v2517, %v2678
      %v2694 = vmul.f32 %v2518, %v2678
      %v2695 = vadd.f32 %v2659, %v2679
      %v2696 = vadd.f32 %v2660, %v2680
      %v2697 = vadd.f32 %v2661, %v2681
      %v2698 = vadd.f32 %v2662, %v2682
      %v2699 = vadd.f32 %v2663, %v2683
      %v2700 = vadd.f32 %v2664, %v2684
      %v2701 = vadd.f32 %v2665, %v2685
      %v2702 = vadd.f32 %v2666, %v2686
      %v2703 = vadd.f32 %v2667, %v2687
      %v2704 = vadd.f32 %v2668, %v2688
      %v2705 = vadd.f32 %v2669, %v2689
      %v2706 = vadd.f32 %v2670, %v2690
      %v2707 = vadd.f32 %v2671, %v2691
      %v2708 = vadd.f32 %v2672, %v2692
      %v2709 = vadd.f32 %v2673, %v2693
      %v2710 = vadd.f32 %v2674, %v2694
      %v2711 = vadd.f32 %v2611, %v2695
      %v2712 = vadd.f32 %v2573, %v2696
      %v2713 = vadd.f32 %v2612, %v2697
      %v2714 = vadd.f32 %v2576, %v2698
      %v2715 = vadd.f32 %v2613, %v2699
      %v2716 = vadd.f32 %v2579, %v2700
      %v2717 = vadd.f32 %v2614, %v2701
      %v2718 = vadd.f32 %v2582, %v2702
      %v2719 = vadd.f32 %v2615, %v2703
      %v2720 = vadd.f32 %v2585, %v2704
      %v2721 = vadd.f32 %v2616, %v2705
      %v2722 = vadd.f32 %v2588, %v2706
      %v2723 = vadd.f32 %v2617, %v2707
      %v2724 = vadd.f32 %v2591, %v2708
      %v2725 = vadd.f32 %v2618, %v2709
      %v2726 = vadd.f32 %v2594, %v2710
      %v2727 = vlaneseq
      %v2728 = vshrl.u32 %v2727, 7
      %v2729 = vsub.s32 2, %v2728
      %v2730 = vrot.slane %v2411, %v2729
      %v2731 = vmul.f32 %v2413, %v2730
      %v2732 = vmul.f32 %v2414, %v2730
      %v2733 = vmul.f32 %v2415, %v2730
      %v2734 = vmul.f32 %v2416, %v2730
      %v2735 = vmul.f32 %v2417, %v2730
      %v2736 = vmul.f32 %v2418, %v2730
      %v2737 = vmul.f32 %v2419, %v2730
      %v2738 = vmul.f32 %v2420, %v2730
      %v2739 = vmul.f32 %v2421, %v2730
      %v2740 = vmul.f32 %v2422, %v2730
      %v2741 = vmul.f32 %v2423, %v2730
      %v2742 = vmul.f32 %v2424, %v2730
      %v2743 = vmul.f32 %v2425, %v2730
      %v2744 = vmul.f32 %v2426, %v2730
      %v2745 = vmul.f32 %v2427, %v2730
      %v2746 = vmul.f32 %v2428, %v2730
      %v2747 = vlaneseq
      %v2748 = vshrl.u32 %v2747, 7
      %v2749 = vsub.s32 5, %v2748
      %v2750 = vrot.slane %v2411, %v2749
      %v2751 = vmul.f32 %v2450, %v2750
      %v2752 = vmul.f32 %v2451, %v2750
      %v2753 = vmul.f32 %v2452, %v2750
      %v2754 = vmul.f32 %v2453, %v2750
      %v2755 = vmul.f32 %v2454, %v2750
      %v2756 = vmul.f32 %v2455, %v2750
      %v2757 = vmul.f32 %v2456, %v2750
      %v2758 = vmul.f32 %v2457, %v2750
      %v2759 = vmul.f32 %v2458, %v2750
      %v2760 = vmul.f32 %v2459, %v2750
      %v2761 = vmul.f32 %v2460, %v2750
      %v2762 = vmul.f32 %v2461, %v2750
      %v2763 = vmul.f32 %v2462, %v2750
      %v2764 = vmul.f32 %v2463, %v2750
      %v2765 = vmul.f32 %v2464, %v2750
      %v2766 = vmul.f32 %v2465, %v2750
      %v2767 = vadd.f32 %v2731, %v2751
      %v2768 = vadd.f32 %v2732, %v2752
      %v2769 = vadd.f32 %v2733, %v2753
      %v2770 = vadd.f32 %v2734, %v2754
      %v2771 = vadd.f32 %v2735, %v2755
      %v2772 = vadd.f32 %v2736, %v2756
      %v2773 = vadd.f32 %v2737, %v2757
      %v2774 = vadd.f32 %v2738, %v2758
      %v2775 = vadd.f32 %v2739, %v2759
      %v2776 = vadd.f32 %v2740, %v2760
      %v2777 = vadd.f32 %v2741, %v2761
      %v2778 = vadd.f32 %v2742, %v2762
      %v2779 = vadd.f32 %v2743, %v2763
      %v2780 = vadd.f32 %v2744, %v2764
      %v2781 = vadd.f32 %v2745, %v2765
      %v2782 = vadd.f32 %v2746, %v2766
      %v2783 = vlaneseq
      %v2784 = vshrl.u32 %v2783, 7
      %v2785 = vsub.s32 0, %v2784
      %v2786 = vrot.slane %v2412, %v2785
      %v2787 = vmul.f32 %v2503, %v2786
      %v2788 = vmul.f32 %v2504, %v2786
      %v2789 = vmul.f32 %v2505, %v2786
      %v2790 = vmul.f32 %v2506, %v2786
      %v2791 = vmul.f32 %v2507, %v2786
      %v2792 = vmul.f32 %v2508, %v2786
      %v2793 = vmul.f32 %v2509, %v2786
      %v2794 = vmul.f32 %v2510, %v2786
      %v2795 = vmul.f32 %v2511, %v2786
      %v2796 = vmul.f32 %v2512, %v2786
      %v2797 = vmul.f32 %v2513, %v2786
      %v2798 = vmul.f32 %v2514, %v2786
      %v2799 = vmul.f32 %v2515, %v2786
      %v2800 = vmul.f32 %v2516, %v2786
      %v2801 = vmul.f32 %v2517, %v2786
      %v2802 = vmul.f32 %v2518, %v2786
      %v2803 = vadd.f32 %v2767, %v2787
      %v2804 = vadd.f32 %v2768, %v2788
      %v2805 = vadd.f32 %v2769, %v2789
      %v2806 = vadd.f32 %v2770, %v2790
      %v2807 = vadd.f32 %v2771, %v2791
      %v2808 = vadd.f32 %v2772, %v2792
      %v2809 = vadd.f32 %v2773, %v2793
      %v2810 = vadd.f32 %v2774, %v2794
      %v2811 = vadd.f32 %v2775, %v2795
      %v2812 = vadd.f32 %v2776, %v2796
      %v2813 = vadd.f32 %v2777, %v2797
      %v2814 = vadd.f32 %v2778, %v2798
      %v2815 = vadd.f32 %v2779, %v2799
      %v2816 = vadd.f32 %v2780, %v2800
      %v2817 = vadd.f32 %v2781, %v2801
      %v2818 = vadd.f32 %v2782, %v2802
      %v2835 = vrot.slane %v2803, 1
      %v2836 = vrot.slane %v2804, 1
      %v2837 = vsel %vm1422, %v2835, %v2836
      %v2838 = vrot.slane %v2805, 1
      %v2839 = vrot.slane %v2806, 1
      %v2840 = vsel %vm1422, %v2838, %v2839
      %v2841 = vrot.slane %v2807, 1
      %v2842 = vrot.slane %v2808, 1
      %v2843 = vsel %vm1422, %v2841, %v2842
      %v2844 = vrot.slane %v2809, 1
      %v2845 = vrot.slane %v2810, 1
      %v2846 = vsel %vm1422, %v2844, %v2845
      %v2847 = vrot.slane %v2811, 1
      %v2848 = vrot.slane %v2812, 1
      %v2849 = vsel %vm1422, %v2847, %v2848
      %v2850 = vrot.slane %v2813, 1
      %v2851 = vrot.slane %v2814, 1
      %v2852 = vsel %vm1422, %v2850, %v2851
      %v2853 = vrot.slane %v2815, 1
      %v2854 = vrot.slane %v2816, 1
      %v2855 = vsel %vm1422, %v2853, %v2854
      %v2856 = vrot.slane %v2817, 1
      %v2857 = vrot.slane %v2818, 1
      %v2858 = vsel %vm1422, %v2856, %v2857
      %v2875 = vsel %vm1422, %v2836, 0.0
      %v2876 = vsel %vm1422, %v2839, 0.0
      %v2877 = vsel %vm1422, %v2842, 0.0
      %v2878 = vsel %vm1422, %v2845, 0.0
      %v2879 = vsel %vm1422, %v2848, 0.0
      %v2880 = vsel %vm1422, %v2851, 0.0
      %v2881 = vsel %vm1422, %v2854, 0.0
      %v2882 = vsel %vm1422, %v2857, 0.0
      %v2883 = vadd.f32 %v2711, %v2837
      %v2884 = vadd.f32 %v2712, %v2875
      %v2885 = vadd.f32 %v2713, %v2840
      %v2886 = vadd.f32 %v2714, %v2876
      %v2887 = vadd.f32 %v2715, %v2843
      %v2888 = vadd.f32 %v2716, %v2877
      %v2889 = vadd.f32 %v2717, %v2846
      %v2890 = vadd.f32 %v2718, %v2878
      %v2891 = vadd.f32 %v2719, %v2849
      %v2892 = vadd.f32 %v2720, %v2879
      %v2893 = vadd.f32 %v2721, %v2852
      %v2894 = vadd.f32 %v2722, %v2880
      %v2895 = vadd.f32 %v2723, %v2855
      %v2896 = vadd.f32 %v2724, %v2881
      %v2897 = vadd.f32 %v2725, %v2858
      %v2898 = vadd.f32 %v2726, %v2882
      %v2899 = vld [vmem:[%s14] sm:$0x1]
      %v2901 = vlaneseq
      %v2902 = vshrl.u32 %v2901, 7
      %v2903 = vsub.s32 0, %v2902
      %v2904 = vrot.slane %v2899, %v2903
      %v2906 = vadd.f32 %v2883, %v2904
      %v2907 = vadd.f32 %v2884, %v2904
      %v2908 = vadd.f32 %v2885, %v2904
      %v2909 = vadd.f32 %v2886, %v2904
      %v2910 = vadd.f32 %v2887, %v2904
      %v2911 = vadd.f32 %v2888, %v2904
      %v2912 = vadd.f32 %v2889, %v2904
      %v2913 = vadd.f32 %v2890, %v2904
      %v2914 = vadd.f32 %v2891, %v2904
      %v2915 = vadd.f32 %v2892, %v2904
      %v2916 = vadd.f32 %v2893, %v2904
      %v2917 = vadd.f32 %v2894, %v2904
      %v2918 = vadd.f32 %v2895, %v2904
      %v2919 = vadd.f32 %v2896, %v2904
      %v2920 = vadd.f32 %v2897, %v2904
      %v2921 = vadd.f32 %v2898, %v2904
      %v2922 = vmul.f32 %v2906, 0.5
      %v2923 = vmul.f32 %v2907, 0.5
      %v2924 = vmul.f32 %v2908, 0.5
      %v2925 = vmul.f32 %v2909, 0.5
      %v2926 = vmul.f32 %v2910, 0.5
      %v2927 = vmul.f32 %v2911, 0.5
      %v2928 = vmul.f32 %v2912, 0.5
      %v2929 = vmul.f32 %v2913, 0.5
      %v2930 = vmul.f32 %v2914, 0.5
      %v2931 = vmul.f32 %v2915, 0.5
      %v2932 = vmul.f32 %v2916, 0.5
      %v2933 = vmul.f32 %v2917, 0.5
      %v2934 = vmul.f32 %v2918, 0.5
      %v2935 = vmul.f32 %v2919, 0.5
      %v2936 = vmul.f32 %v2920, 0.5
      %v2937 = vmul.f32 %v2921, 0.5
      %v2938 = vmul.f32 %v2906, 0.70710677
      %v2939 = vmul.f32 %v2907, 0.70710677
      %v2940 = vmul.f32 %v2908, 0.70710677
      %v2941 = vmul.f32 %v2909, 0.70710677
      %v2942 = vmul.f32 %v2910, 0.70710677
      %v2943 = vmul.f32 %v2911, 0.70710677
      %v2944 = vmul.f32 %v2912, 0.70710677
      %v2945 = vmul.f32 %v2913, 0.70710677
      %v2946 = vmul.f32 %v2914, 0.70710677
      %v2947 = vmul.f32 %v2915, 0.70710677
      %v2948 = vmul.f32 %v2916, 0.70710677
      %v2949 = vmul.f32 %v2917, 0.70710677
      %v2950 = vmul.f32 %v2918, 0.70710677
      %v2951 = vmul.f32 %v2919, 0.70710677
      %v2952 = vmul.f32 %v2920, 0.70710677
      %v2953 = vmul.f32 %v2921, 0.70710677
      %v2954 = vand.u32 2147483647, %v2938
      %v2955 = vand.u32 2147483647, %v2939
      %v2956 = vand.u32 2147483647, %v2940
      %v2957 = vand.u32 2147483647, %v2941
      %v2958 = vand.u32 2147483647, %v2942
      %v2959 = vand.u32 2147483647, %v2943
      %v2960 = vand.u32 2147483647, %v2944
      %v2961 = vand.u32 2147483647, %v2945
      %v2962 = vand.u32 2147483647, %v2946
      %v2963 = vand.u32 2147483647, %v2947
      %v2964 = vand.u32 2147483647, %v2948
      %v2965 = vand.u32 2147483647, %v2949
      %v2966 = vand.u32 2147483647, %v2950
      %v2967 = vand.u32 2147483647, %v2951
      %v2968 = vand.u32 2147483647, %v2952
      %v2969 = vand.u32 2147483647, %v2953
      %v2970 = vmul.f32 %v2954, 0.3275911
      %v2971 = vmul.f32 %v2955, 0.3275911
      %v2972 = vmul.f32 %v2956, 0.3275911
      %v2973 = vmul.f32 %v2957, 0.3275911
      %v2974 = vmul.f32 %v2958, 0.3275911
      %v2975 = vmul.f32 %v2959, 0.3275911
      %v2976 = vmul.f32 %v2960, 0.3275911
      %v2977 = vmul.f32 %v2961, 0.3275911
      %v2978 = vmul.f32 %v2962, 0.3275911
      %v2979 = vmul.f32 %v2963, 0.3275911
      %v2980 = vmul.f32 %v2964, 0.3275911
      %v2981 = vmul.f32 %v2965, 0.3275911
      %v2982 = vmul.f32 %v2966, 0.3275911
      %v2983 = vmul.f32 %v2967, 0.3275911
      %v2984 = vmul.f32 %v2968, 0.3275911
      %v2985 = vmul.f32 %v2969, 0.3275911
      %v2986 = vadd.f32 %v2970, 1.0
      %v2987 = vadd.f32 %v2971, 1.0
      %v2988 = vadd.f32 %v2972, 1.0
      %v2989 = vadd.f32 %v2973, 1.0
      %v2990 = vadd.f32 %v2974, 1.0
      %v2991 = vadd.f32 %v2975, 1.0
      %v2992 = vadd.f32 %v2976, 1.0
      %v2993 = vadd.f32 %v2977, 1.0
      %v2994 = vadd.f32 %v2978, 1.0
      %v2995 = vadd.f32 %v2979, 1.0
      %v2996 = vadd.f32 %v2980, 1.0
      %v2997 = vadd.f32 %v2981, 1.0
      %v2998 = vadd.f32 %v2982, 1.0
      %v2999 = vadd.f32 %v2983, 1.0
      %v3000 = vadd.f32 %v2984, 1.0
      %v3001 = vadd.f32 %v2985, 1.0
      %v3002 = vrcp.pop %v2986
      %v3003 = vrcp.pop %v2987
      %v3004 = vrcp.pop %v2988
      %v3005 = vrcp.pop %v2989
      %v3006 = vrcp.pop %v2990
      %v3007 = vrcp.pop %v2991
      %v3008 = vrcp.pop %v2992
      %v3009 = vrcp.pop %v2993
      %v3010 = vrcp.pop %v2994
      %v3011 = vrcp.pop %v2995
      %v3012 = vrcp.pop %v2996
      %v3013 = vrcp.pop %v2997
      %v3014 = vrcp.pop %v2998
      %v3015 = vrcp.pop %v2999
      %v3016 = vrcp.pop %v3000
      %v3017 = vrcp.pop %v3001
      %v3018 = vmul.f32 %v3002, 1.0614054
      %v3019 = vmul.f32 %v3003, 1.0614054
      %v3020 = vmul.f32 %v3004, 1.0614054
      %v3021 = vmul.f32 %v3005, 1.0614054
      %v3022 = vmul.f32 %v3006, 1.0614054
      %v3023 = vmul.f32 %v3007, 1.0614054
      %v3024 = vmul.f32 %v3008, 1.0614054
      %v3025 = vmul.f32 %v3009, 1.0614054
      %v3026 = vmul.f32 %v3010, 1.0614054
      %v3027 = vmul.f32 %v3011, 1.0614054
      %v3028 = vmul.f32 %v3012, 1.0614054
      %v3029 = vmul.f32 %v3013, 1.0614054
      %v3030 = vmul.f32 %v3014, 1.0614054
      %v3031 = vmul.f32 %v3015, 1.0614054
      %v3032 = vmul.f32 %v3016, 1.0614054
      %v3033 = vmul.f32 %v3017, 1.0614054
      %v3034 = vadd.f32 %v3018, -1.4531521
      %v3035 = vadd.f32 %v3019, -1.4531521
      %v3036 = vadd.f32 %v3020, -1.4531521
      %v3037 = vadd.f32 %v3021, -1.4531521
      %v3038 = vadd.f32 %v3022, -1.4531521
      %v3039 = vadd.f32 %v3023, -1.4531521
      %v3040 = vadd.f32 %v3024, -1.4531521
      %v3041 = vadd.f32 %v3025, -1.4531521
      %v3042 = vadd.f32 %v3026, -1.4531521
      %v3043 = vadd.f32 %v3027, -1.4531521
      %v3044 = vadd.f32 %v3028, -1.4531521
      %v3045 = vadd.f32 %v3029, -1.4531521
      %v3046 = vadd.f32 %v3030, -1.4531521
      %v3047 = vadd.f32 %v3031, -1.4531521
      %v3048 = vadd.f32 %v3032, -1.4531521
      %v3049 = vadd.f32 %v3033, -1.4531521
      %v3050 = vmul.f32 %v3034, %v3002
      %v3051 = vmul.f32 %v3035, %v3003
      %v3052 = vmul.f32 %v3036, %v3004
      %v3053 = vmul.f32 %v3037, %v3005
      %v3054 = vmul.f32 %v3038, %v3006
      %v3055 = vmul.f32 %v3039, %v3007
      %v3056 = vmul.f32 %v3040, %v3008
      %v3057 = vmul.f32 %v3041, %v3009
      %v3058 = vmul.f32 %v3042, %v3010
      %v3059 = vmul.f32 %v3043, %v3011
      %v3060 = vmul.f32 %v3044, %v3012
      %v3061 = vmul.f32 %v3045, %v3013
      %v3062 = vmul.f32 %v3046, %v3014
      %v3063 = vmul.f32 %v3047, %v3015
      %v3064 = vmul.f32 %v3048, %v3016
      %v3065 = vmul.f32 %v3049, %v3017
      %v3066 = vadd.f32 %v3050, 1.4214138
      %v3067 = vadd.f32 %v3051, 1.4214138
      %v3068 = vadd.f32 %v3052, 1.4214138
      %v3069 = vadd.f32 %v3053, 1.4214138
      %v3070 = vadd.f32 %v3054, 1.4214138
      %v3071 = vadd.f32 %v3055, 1.4214138
      %v3072 = vadd.f32 %v3056, 1.4214138
      %v3073 = vadd.f32 %v3057, 1.4214138
      %v3074 = vadd.f32 %v3058, 1.4214138
      %v3075 = vadd.f32 %v3059, 1.4214138
      %v3076 = vadd.f32 %v3060, 1.4214138
      %v3077 = vadd.f32 %v3061, 1.4214138
      %v3078 = vadd.f32 %v3062, 1.4214138
      %v3079 = vadd.f32 %v3063, 1.4214138
      %v3080 = vadd.f32 %v3064, 1.4214138
      %v3081 = vadd.f32 %v3065, 1.4214138
      %v3082 = vmul.f32 %v3066, %v3002
      %v3083 = vmul.f32 %v3067, %v3003
      %v3084 = vmul.f32 %v3068, %v3004
      %v3085 = vmul.f32 %v3069, %v3005
      %v3086 = vmul.f32 %v3070, %v3006
      %v3087 = vmul.f32 %v3071, %v3007
      %v3088 = vmul.f32 %v3072, %v3008
      %v3089 = vmul.f32 %v3073, %v3009
      %v3090 = vmul.f32 %v3074, %v3010
      %v3091 = vmul.f32 %v3075, %v3011
      %v3092 = vmul.f32 %v3076, %v3012
      %v3093 = vmul.f32 %v3077, %v3013
      %v3094 = vmul.f32 %v3078, %v3014
      %v3095 = vmul.f32 %v3079, %v3015
      %v3096 = vmul.f32 %v3080, %v3016
      %v3097 = vmul.f32 %v3081, %v3017
      %v3098 = vadd.f32 %v3082, -0.28449672
      %v3099 = vadd.f32 %v3083, -0.28449672
      %v3100 = vadd.f32 %v3084, -0.28449672
      %v3101 = vadd.f32 %v3085, -0.28449672
      %v3102 = vadd.f32 %v3086, -0.28449672
      %v3103 = vadd.f32 %v3087, -0.28449672
      %v3104 = vadd.f32 %v3088, -0.28449672
      %v3105 = vadd.f32 %v3089, -0.28449672
      %v3106 = vadd.f32 %v3090, -0.28449672
      %v3107 = vadd.f32 %v3091, -0.28449672
      %v3108 = vadd.f32 %v3092, -0.28449672
      %v3109 = vadd.f32 %v3093, -0.28449672
      %v3110 = vadd.f32 %v3094, -0.28449672
      %v3111 = vadd.f32 %v3095, -0.28449672
      %v3112 = vadd.f32 %v3096, -0.28449672
      %v3113 = vadd.f32 %v3097, -0.28449672
      %v3114 = vmul.f32 %v3098, %v3002
      %v3115 = vmul.f32 %v3099, %v3003
      %v3116 = vmul.f32 %v3100, %v3004
      %v3117 = vmul.f32 %v3101, %v3005
      %v3118 = vmul.f32 %v3102, %v3006
      %v3119 = vmul.f32 %v3103, %v3007
      %v3120 = vmul.f32 %v3104, %v3008
      %v3121 = vmul.f32 %v3105, %v3009
      %v3122 = vmul.f32 %v3106, %v3010
      %v3123 = vmul.f32 %v3107, %v3011
      %v3124 = vmul.f32 %v3108, %v3012
      %v3125 = vmul.f32 %v3109, %v3013
      %v3126 = vmul.f32 %v3110, %v3014
      %v3127 = vmul.f32 %v3111, %v3015
      %v3128 = vmul.f32 %v3112, %v3016
      %v3129 = vmul.f32 %v3113, %v3017
      %v3130 = vadd.f32 %v3114, 0.2548296
      %v3131 = vadd.f32 %v3115, 0.2548296
      %v3132 = vadd.f32 %v3116, 0.2548296
      %v3133 = vadd.f32 %v3117, 0.2548296
      %v3134 = vadd.f32 %v3118, 0.2548296
      %v3135 = vadd.f32 %v3119, 0.2548296
      %v3136 = vadd.f32 %v3120, 0.2548296
      %v3137 = vadd.f32 %v3121, 0.2548296
      %v3138 = vadd.f32 %v3122, 0.2548296
      %v3139 = vadd.f32 %v3123, 0.2548296
      %v3140 = vadd.f32 %v3124, 0.2548296
      %v3141 = vadd.f32 %v3125, 0.2548296
      %v3142 = vadd.f32 %v3126, 0.2548296
      %v3143 = vadd.f32 %v3127, 0.2548296
      %v3144 = vadd.f32 %v3128, 0.2548296
      %v3145 = vadd.f32 %v3129, 0.2548296
      %v3146 = vmul.f32 %v3130, %v3002
      %v3147 = vmul.f32 %v3131, %v3003
      %v3148 = vmul.f32 %v3132, %v3004
      %v3149 = vmul.f32 %v3133, %v3005
      %v3150 = vmul.f32 %v3134, %v3006
      %v3151 = vmul.f32 %v3135, %v3007
      %v3152 = vmul.f32 %v3136, %v3008
      %v3153 = vmul.f32 %v3137, %v3009
      %v3154 = vmul.f32 %v3138, %v3010
      %v3155 = vmul.f32 %v3139, %v3011
      %v3156 = vmul.f32 %v3140, %v3012
      %v3157 = vmul.f32 %v3141, %v3013
      %v3158 = vmul.f32 %v3142, %v3014
      %v3159 = vmul.f32 %v3143, %v3015
      %v3160 = vmul.f32 %v3144, %v3016
      %v3161 = vmul.f32 %v3145, %v3017
      %v3162 = vsub.f32 0.0, %v2954
      %v3163 = vsub.f32 0.0, %v2955
      %v3164 = vsub.f32 0.0, %v2956
      %v3165 = vsub.f32 0.0, %v2957
      %v3166 = vsub.f32 0.0, %v2958
      %v3167 = vsub.f32 0.0, %v2959
      %v3168 = vsub.f32 0.0, %v2960
      %v3169 = vsub.f32 0.0, %v2961
      %v3170 = vsub.f32 0.0, %v2962
      %v3171 = vsub.f32 0.0, %v2963
      %v3172 = vsub.f32 0.0, %v2964
      %v3173 = vsub.f32 0.0, %v2965
      %v3174 = vsub.f32 0.0, %v2966
      %v3175 = vsub.f32 0.0, %v2967
      %v3176 = vsub.f32 0.0, %v2968
      %v3177 = vsub.f32 0.0, %v2969
      %v3178 = vmul.f32 %v3162, %v2954
      %v3179 = vmul.f32 %v3163, %v2955
      %v3180 = vmul.f32 %v3164, %v2956
      %v3181 = vmul.f32 %v3165, %v2957
      %v3182 = vmul.f32 %v3166, %v2958
      %v3183 = vmul.f32 %v3167, %v2959
      %v3184 = vmul.f32 %v3168, %v2960
      %v3185 = vmul.f32 %v3169, %v2961
      %v3186 = vmul.f32 %v3170, %v2962
      %v3187 = vmul.f32 %v3171, %v2963
      %v3188 = vmul.f32 %v3172, %v2964
      %v3189 = vmul.f32 %v3173, %v2965
      %v3190 = vmul.f32 %v3174, %v2966
      %v3191 = vmul.f32 %v3175, %v2967
      %v3192 = vmul.f32 %v3176, %v2968
      %v3193 = vmul.f32 %v3177, %v2969
      %v3194 = vmul.f32 %v3178, 1.442695
      %v3195 = vpow.pop %v3194
      %v3196 = vmul.f32 %v3179, 1.442695
      %v3197 = vpow.pop %v3196
      %v3198 = vmul.f32 %v3180, 1.442695
      %v3199 = vpow.pop %v3198
      %v3200 = vmul.f32 %v3181, 1.442695
      %v3201 = vpow.pop %v3200
      %v3202 = vmul.f32 %v3182, 1.442695
      %v3203 = vpow.pop %v3202
      %v3204 = vmul.f32 %v3183, 1.442695
      %v3205 = vpow.pop %v3204
      %v3206 = vmul.f32 %v3184, 1.442695
      %v3207 = vpow.pop %v3206
      %v3208 = vmul.f32 %v3185, 1.442695
      %v3209 = vpow.pop %v3208
      %v3210 = vmul.f32 %v3186, 1.442695
      %v3211 = vpow.pop %v3210
      %v3212 = vmul.f32 %v3187, 1.442695
      %v3213 = vpow.pop %v3212
      %v3214 = vmul.f32 %v3188, 1.442695
      %v3215 = vpow.pop %v3214
      %v3216 = vmul.f32 %v3189, 1.442695
      %v3217 = vpow.pop %v3216
      %v3218 = vmul.f32 %v3190, 1.442695
      %v3219 = vpow.pop %v3218
      %v3220 = vmul.f32 %v3191, 1.442695
      %v3221 = vpow.pop %v3220
      %v3222 = vmul.f32 %v3192, 1.442695
      %v3223 = vpow.pop %v3222
      %v3224 = vmul.f32 %v3193, 1.442695
      %v3225 = vpow.pop %v3224
      %v3226 = vmul.f32 %v3146, %v3195
      %v3227 = vmul.f32 %v3147, %v3197
      %v3228 = vmul.f32 %v3148, %v3199
      %v3229 = vmul.f32 %v3149, %v3201
      %v3230 = vmul.f32 %v3150, %v3203
      %v3231 = vmul.f32 %v3151, %v3205
      %v3232 = vmul.f32 %v3152, %v3207
      %v3233 = vmul.f32 %v3153, %v3209
      %v3234 = vmul.f32 %v3154, %v3211
      %v3235 = vmul.f32 %v3155, %v3213
      %v3236 = vmul.f32 %v3156, %v3215
      %v3237 = vmul.f32 %v3157, %v3217
      %v3238 = vmul.f32 %v3158, %v3219
      %v3239 = vmul.f32 %v3159, %v3221
      %v3240 = vmul.f32 %v3160, %v3223
      %v3241 = vmul.f32 %v3161, %v3225
      %v3242 = vsub.f32 1.0, %v3226
      %v3243 = vsub.f32 1.0, %v3227
      %v3244 = vsub.f32 1.0, %v3228
      %v3245 = vsub.f32 1.0, %v3229
      %v3246 = vsub.f32 1.0, %v3230
      %v3247 = vsub.f32 1.0, %v3231
      %v3248 = vsub.f32 1.0, %v3232
      %v3249 = vsub.f32 1.0, %v3233
      %v3250 = vsub.f32 1.0, %v3234
      %v3251 = vsub.f32 1.0, %v3235
      %v3252 = vsub.f32 1.0, %v3236
      %v3253 = vsub.f32 1.0, %v3237
      %v3254 = vsub.f32 1.0, %v3238
      %v3255 = vsub.f32 1.0, %v3239
      %v3256 = vsub.f32 1.0, %v3240
      %v3257 = vsub.f32 1.0, %v3241
      %vm3258 = vcmp.ge.f32.partialorder %v2938, 0.0
      %vm3259 = vcmp.ge.f32.partialorder %v2939, 0.0
      %vm3260 = vcmp.ge.f32.partialorder %v2940, 0.0
      %vm3261 = vcmp.ge.f32.partialorder %v2941, 0.0
      %vm3262 = vcmp.ge.f32.partialorder %v2942, 0.0
      %vm3263 = vcmp.ge.f32.partialorder %v2943, 0.0
      %vm3264 = vcmp.ge.f32.partialorder %v2944, 0.0
      %vm3265 = vcmp.ge.f32.partialorder %v2945, 0.0
      %vm3266 = vcmp.ge.f32.partialorder %v2946, 0.0
      %vm3267 = vcmp.ge.f32.partialorder %v2947, 0.0
      %vm3268 = vcmp.ge.f32.partialorder %v2948, 0.0
      %vm3269 = vcmp.ge.f32.partialorder %v2949, 0.0
      %vm3270 = vcmp.ge.f32.partialorder %v2950, 0.0
      %vm3271 = vcmp.ge.f32.partialorder %v2951, 0.0
      %vm3272 = vcmp.ge.f32.partialorder %v2952, 0.0
      %vm3273 = vcmp.ge.f32.partialorder %v2953, 0.0
      %v3274 = vsub.f32 0.0, %v3242
      %v3275 = vsub.f32 0.0, %v3243
      %v3276 = vsub.f32 0.0, %v3244
      %v3277 = vsub.f32 0.0, %v3245
      %v3278 = vsub.f32 0.0, %v3246
      %v3279 = vsub.f32 0.0, %v3247
      %v3280 = vsub.f32 0.0, %v3248
      %v3281 = vsub.f32 0.0, %v3249
      %v3282 = vsub.f32 0.0, %v3250
      %v3283 = vsub.f32 0.0, %v3251
      %v3284 = vsub.f32 0.0, %v3252
      %v3285 = vsub.f32 0.0, %v3253
      %v3286 = vsub.f32 0.0, %v3254
      %v3287 = vsub.f32 0.0, %v3255
      %v3288 = vsub.f32 0.0, %v3256
      %v3289 = vsub.f32 0.0, %v3257
      %v3290 = vsel %vm3258, %v3242, %v3274
      %v3291 = vsel %vm3259, %v3243, %v3275
      %v3292 = vsel %vm3260, %v3244, %v3276
      %v3293 = vsel %vm3261, %v3245, %v3277
      %v3294 = vsel %vm3262, %v3246, %v3278
      %v3295 = vsel %vm3263, %v3247, %v3279
      %v3296 = vsel %vm3264, %v3248, %v3280
      %v3297 = vsel %vm3265, %v3249, %v3281
      %v3298 = vsel %vm3266, %v3250, %v3282
      %v3299 = vsel %vm3267, %v3251, %v3283
      %v3300 = vsel %vm3268, %v3252, %v3284
      %v3301 = vsel %vm3269, %v3253, %v3285
      %v3302 = vsel %vm3270, %v3254, %v3286
      %v3303 = vsel %vm3271, %v3255, %v3287
      %v3304 = vsel %vm3272, %v3256, %v3288
      %v3305 = vsel %vm3273, %v3257, %v3289
      %v3306 = vadd.f32 %v3290, 1.0
      %v3307 = vadd.f32 %v3291, 1.0
      %v3308 = vadd.f32 %v3292, 1.0
      %v3309 = vadd.f32 %v3293, 1.0
      %v3310 = vadd.f32 %v3294, 1.0
      %v3311 = vadd.f32 %v3295, 1.0
      %v3312 = vadd.f32 %v3296, 1.0
      %v3313 = vadd.f32 %v3297, 1.0
      %v3314 = vadd.f32 %v3298, 1.0
      %v3315 = vadd.f32 %v3299, 1.0
      %v3316 = vadd.f32 %v3300, 1.0
      %v3317 = vadd.f32 %v3301, 1.0
      %v3318 = vadd.f32 %v3302, 1.0
      %v3319 = vadd.f32 %v3303, 1.0
      %v3320 = vadd.f32 %v3304, 1.0
      %v3321 = vadd.f32 %v3305, 1.0
      %v3322 = vmul.f32 %v2922, %v3306
      %v3323 = vmul.f32 %v2923, %v3307
      %v3324 = vmul.f32 %v2924, %v3308
      %v3325 = vmul.f32 %v2925, %v3309
      %v3326 = vmul.f32 %v2926, %v3310
      %v3327 = vmul.f32 %v2927, %v3311
      %v3328 = vmul.f32 %v2928, %v3312
      %v3329 = vmul.f32 %v2929, %v3313
      %v3330 = vmul.f32 %v2930, %v3314
      %v3331 = vmul.f32 %v2931, %v3315
      %v3332 = vmul.f32 %v2932, %v3316
      %v3333 = vmul.f32 %v2933, %v3317
      %v3334 = vmul.f32 %v2934, %v3318
      %v3335 = vmul.f32 %v2935, %v3319
      %v3336 = vmul.f32 %v2936, %v3320
      %v3337 = vmul.f32 %v2937, %v3321
      %3354 = vrot.lane.b32.xlu0 %v2906, 112
      %v3355 = vpop.permute.xlu0 %3354
      %3356 = vrot.lane.b32.xlu0 %v2907, 112
      %v3357 = vpop.permute.xlu0 %3356
      %3358 = vrot.lane.b32.xlu0 %v2908, 112
      %v3359 = vpop.permute.xlu0 %3358
      %3360 = vrot.lane.b32.xlu0 %v2909, 112
      %v3361 = vpop.permute.xlu0 %3360
      %3362 = vrot.lane.b32.xlu0 %v2910, 112
      %v3363 = vpop.permute.xlu0 %3362
      %3364 = vrot.lane.b32.xlu0 %v2911, 112
      %v3365 = vpop.permute.xlu0 %3364
      %3366 = vrot.lane.b32.xlu0 %v2912, 112
      %v3367 = vpop.permute.xlu0 %3366
      %3368 = vrot.lane.b32.xlu0 %v2913, 112
      %v3369 = vpop.permute.xlu0 %3368
      %3370 = vrot.lane.b32.xlu0 %v2914, 112
      %v3371 = vpop.permute.xlu0 %3370
      %3372 = vrot.lane.b32.xlu0 %v2915, 112
      %v3373 = vpop.permute.xlu0 %3372
      %3374 = vrot.lane.b32.xlu0 %v2916, 112
      %v3375 = vpop.permute.xlu0 %3374
      %3376 = vrot.lane.b32.xlu0 %v2917, 112
      %v3377 = vpop.permute.xlu0 %3376
      %3378 = vrot.lane.b32.xlu0 %v2918, 112
      %v3379 = vpop.permute.xlu0 %3378
      %3380 = vrot.lane.b32.xlu0 %v2919, 112
      %v3381 = vpop.permute.xlu0 %3380
      %3382 = vrot.lane.b32.xlu0 %v2920, 112
      %v3383 = vpop.permute.xlu0 %3382
      %3384 = vrot.lane.b32.xlu0 %v2921, 112
      %v3385 = vpop.permute.xlu0 %3384
      %v3402 = vmul.f32 %v3322, %v3355
      %v3403 = vmul.f32 %v3323, %v3357
      %v3404 = vmul.f32 %v3324, %v3359
      %v3405 = vmul.f32 %v3325, %v3361
      %v3406 = vmul.f32 %v3326, %v3363
      %v3407 = vmul.f32 %v3327, %v3365
      %v3408 = vmul.f32 %v3328, %v3367
      %v3409 = vmul.f32 %v3329, %v3369
      %v3410 = vmul.f32 %v3330, %v3371
      %v3411 = vmul.f32 %v3331, %v3373
      %v3412 = vmul.f32 %v3332, %v3375
      %v3413 = vmul.f32 %v3333, %v3377
      %v3414 = vmul.f32 %v3334, %v3379
      %v3415 = vmul.f32 %v3335, %v3381
      %v3416 = vmul.f32 %v3336, %v3383
      %v3417 = vmul.f32 %v3337, %v3385
      %v3418 = vld [vmem:[%s15] sm:$0xff]
      %v3419 = vld [vmem:[%s15 + $0x8] sm:$0xff]
      %v3420 = vld [vmem:[%s16] sm:$0x1]
      %v3422 = vlaneseq
      %v3423 = vshrl.u32 %v3422, 7
      %v3424 = vsub.s32 0, %v3423
      %v3425 = vrot.slane %v3420, %v3424
      %vm3427 = vcmask 130048
      %v3429 = vsel %vm3427, %v3402, 0
      %v3432 = vsel %vm3427, %v3403, 0
      %v3435 = vsel %vm3427, %v3404, 0
      %v3438 = vsel %vm3427, %v3405, 0
      %v3441 = vsel %vm3427, %v3406, 0
      %v3444 = vsel %vm3427, %v3407, 0
      %v3447 = vsel %vm3427, %v3408, 0
      %v3450 = vsel %vm3427, %v3409, 0
      %v3453 = vsel %vm3427, %v3410, 0
      %v3456 = vsel %vm3427, %v3411, 0
      %v3459 = vsel %vm3427, %v3412, 0
      %v3462 = vsel %vm3427, %v3413, 0
      %v3465 = vsel %vm3427, %v3414, 0
      %v3468 = vsel %vm3427, %v3415, 0
      %v3471 = vsel %vm3427, %v3416, 0
      %v3474 = vsel %vm3427, %v3417, 0
      %3476 = vmatprep.subr.mxu0 0.0
      %3477 = vmatpush1.msra.mxu0 %v3418
      %3478 = vmatprep.subr.mxu0 0.0
      %3479 = vmatpush1.msra.mxu0 %v3419
      %3480 = vmatprep.subr.mxu0 0.0
      %3481 = vmatpush1.msra.mxu0 0.0
      %3482 = vmatprep.subr.mxu0 0.0
      %3483 = vmatpush1.msra.mxu0 0.0
      %3484 = vmatprep.subr.mxu0 0.0
      %3485 = vmatpush1.msra.mxu0 0.0
      %3486 = vmatprep.subr.mxu0 0.0
      %3487 = vmatpush1.msra.mxu0 0.0
      %3488 = vmatprep.subr.mxu0 0.0
      %3489 = vmatpush1.msra.mxu0 0.0
      %3490 = vmatprep.subr.mxu0 0.0
      %3491 = vmatpush1.msra.mxu0 0.0
      %3492 = vmatprep.subr.mxu0 0.0
      %3493 = vmatpush1.msra.mxu0 0.0
      %3494 = vmatprep.subr.mxu0 0.0
      %3495 = vmatpush1.msra.mxu0 0.0
      %3496 = vmatprep.subr.mxu0 0.0
      %3497 = vmatpush1.msra.mxu0 0.0
      %3498 = vmatprep.subr.mxu0 0.0
      %3499 = vmatpush1.msra.mxu0 0.0
      %3500 = vmatprep.subr.mxu0 0.0
      %3501 = vmatpush1.msra.mxu0 0.0
      %3502 = vmatprep.subr.mxu0 0.0
      %3503 = vmatpush1.msra.mxu0 0.0
      %3504 = vmatprep.subr.mxu0 0.0
      %3505 = vmatpush1.msra.mxu0 0.0
      %3506 = vmatprep.subr.mxu0 0.0
      %3507 = vmatpush1.msra.mxu0 0.0
      %3508 = vmatprep.subr.mxu0 0.0
      %3509 = vmatpush1.msra.mxu0 0.0
      %3510 = vmatprep.subr.mxu0 0.0
      %3511 = vmatpush1.msra.mxu0 0.0
      %3512 = vmatprep.subr.mxu0 0.0
      %3513 = vmatpush1.msra.mxu0 0.0
      %3514 = vmatprep.subr.mxu0 0.0
      %3515 = vmatpush1.msra.mxu0 0.0
      %3516 = vmatprep.subr.mxu0 0.0
      %3517 = vmatpush1.msra.mxu0 0.0
      %3518 = vmatprep.subr.mxu0 0.0
      %3519 = vmatpush1.msra.mxu0 0.0
      %3520 = vmatprep.subr.mxu0 0.0
      %3521 = vmatpush1.msra.mxu0 0.0
      %3522 = vmatprep.subr.mxu0 0.0
      %3523 = vmatpush1.msra.mxu0 0.0
      %3524 = vmatprep.subr.mxu0 0.0
      %3525 = vmatpush1.msra.mxu0 0.0
      %3526 = vmatprep.subr.mxu0 0.0
      %3527 = vmatpush1.msra.mxu0 0.0
      %3528 = vmatprep.subr.mxu0 0.0
      %3529 = vmatpush1.msra.mxu0 0.0
      %3530 = vmatprep.subr.mxu0 0.0
      %3531 = vmatpush1.msra.mxu0 0.0
      %3532 = vmatprep.subr.mxu0 0.0
      %3533 = vmatpush1.msra.mxu0 0.0
      %3534 = vmatprep.subr.mxu0 0.0
      %3535 = vmatpush1.msra.mxu0 0.0
      %3536 = vmatprep.subr.mxu0 0.0
      %3537 = vmatpush1.msra.mxu0 0.0
      %3538 = vmatprep.subr.mxu0 0.0
      %3539 = vmatpush1.msra.mxu0 0.0
      %3540 = vmatprep.mubr.f32.mxu0 0.0
      %3541 = vmatmul.mubr.f32.gmra.mrb[0].mxu0 %v3429
      %v3542 = vpop.f32.mrb[0].mxu0
      %v3543 = vadd.f32 %v3425, %v3542
      %v3544 = vpop.f32.mrb[0].mxu0
      %3545 = vmatprep.mubr.f32.mxu0 0.0
      %3546 = vmatmul.mubr.f32.gmra.mrb[0].mxu0 %v3432
      %v3547 = vpop.f32.mrb[0].mxu0
      %v3548 = vadd.f32 %v3425, %v3547
      %v3549 = vpop.f32.mrb[0].mxu0
      %3550 = vmatprep.mubr.f32.mxu0 0.0
      %3551 = vmatmul.mubr.f32.gmra.mrb[0].mxu0 %v3435
      %v3552 = vpop.f32.mrb[0].mxu0
      %v3553 = vadd.f32 %v3425, %v3552
      %v3554 = vpop.f32.mrb[0].mxu0
      %3555 = vmatprep.mubr.f32.mxu0 0.0
      %3556 = vmatmul.mubr.f32.gmra.mrb[0].mxu0 %v3438
      %v3557 = vpop.f32.mrb[0].mxu0
      %v3558 = vadd.f32 %v3425, %v3557
      %v3559 = vpop.f32.mrb[0].mxu0
      %3560 = vmatprep.mubr.f32.mxu0 0.0
      %3561 = vmatmul.mubr.f32.gmra.mrb[0].mxu0 %v3441
      %v3562 = vpop.f32.mrb[0].mxu0
      %v3563 = vadd.f32 %v3425, %v3562
      %v3564 = vpop.f32.mrb[0].mxu0
      %3565 = vmatprep.mubr.f32.mxu0 0.0
      %3566 = vmatmul.mubr.f32.gmra.mrb[0].mxu0 %v3444
      %v3567 = vpop.f32.mrb[0].mxu0
      %v3568 = vadd.f32 %v3425, %v3567
      %v3569 = vpop.f32.mrb[0].mxu0
      %3570 = vmatprep.mubr.f32.mxu0 0.0
      %3571 = vmatmul.mubr.f32.gmra.mrb[0].mxu0 %v3447
      %v3572 = vpop.f32.mrb[0].mxu0
      %v3573 = vadd.f32 %v3425, %v3572
      %v3574 = vpop.f32.mrb[0].mxu0
      %3575 = vmatprep.mubr.f32.mxu0 0.0
      %3576 = vmatmul.mubr.f32.gmra.mrb[0].mxu0 %v3450
      %v3577 = vpop.f32.mrb[0].mxu0
      %v3578 = vadd.f32 %v3425, %v3577
      %v3579 = vpop.f32.mrb[0].mxu0
      %3580 = vmatprep.mubr.f32.mxu0 0.0
      %3581 = vmatmul.mubr.f32.gmra.mrb[0].mxu0 %v3453
      %v3582 = vpop.f32.mrb[0].mxu0
      %v3583 = vadd.f32 %v3425, %v3582
      %v3584 = vpop.f32.mrb[0].mxu0
      %3585 = vmatprep.mubr.f32.mxu0 0.0
      %3586 = vmatmul.mubr.f32.gmra.mrb[0].mxu0 %v3456
      %v3587 = vpop.f32.mrb[0].mxu0
      %v3588 = vadd.f32 %v3425, %v3587
      %v3589 = vpop.f32.mrb[0].mxu0
      %3590 = vmatprep.mubr.f32.mxu0 0.0
      %3591 = vmatmul.mubr.f32.gmra.mrb[0].mxu0 %v3459
      %v3592 = vpop.f32.mrb[0].mxu0
      %v3593 = vadd.f32 %v3425, %v3592
      %v3594 = vpop.f32.mrb[0].mxu0
      %3595 = vmatprep.mubr.f32.mxu0 0.0
      %3596 = vmatmul.mubr.f32.gmra.mrb[0].mxu0 %v3462
      %v3597 = vpop.f32.mrb[0].mxu0
      %v3598 = vadd.f32 %v3425, %v3597
      %v3599 = vpop.f32.mrb[0].mxu0
      %3600 = vmatprep.mubr.f32.mxu0 0.0
      %3601 = vmatmul.mubr.f32.gmra.mrb[0].mxu0 %v3465
      %v3602 = vpop.f32.mrb[0].mxu0
      %v3603 = vadd.f32 %v3425, %v3602
      %v3604 = vpop.f32.mrb[0].mxu0
      %3605 = vmatprep.mubr.f32.mxu0 0.0
      %3606 = vmatmul.mubr.f32.gmra.mrb[0].mxu0 %v3468
      %v3607 = vpop.f32.mrb[0].mxu0
      %v3608 = vadd.f32 %v3425, %v3607
      %v3609 = vpop.f32.mrb[0].mxu0
      %3610 = vmatprep.mubr.f32.mxu0 0.0
      %3611 = vmatmul.mubr.f32.gmra.mrb[0].mxu0 %v3471
      %v3612 = vpop.f32.mrb[0].mxu0
      %v3613 = vadd.f32 %v3425, %v3612
      %v3614 = vpop.f32.mrb[0].mxu0
      %3615 = vmatprep.mubr.f32.mxu0 0.0
      %3616 = vmatmul.mubr.f32.gmra.mrb[0].mxu0 %v3474
      %v3617 = vpop.f32.mrb[0].mxu0
      %v3618 = vadd.f32 %v3425, %v3617
      %v3619 = vpop.f32.mrb[0].mxu0
      %3620 = vdwg.mxu0
      %v3621 = vadd.f32 %v1680, %v3543
      %v3622 = vadd.f32 %v1685, %v3548
      %v3623 = vadd.f32 %v1690, %v3553
      %v3624 = vadd.f32 %v1695, %v3558
      %v3625 = vadd.f32 %v1700, %v3563
      %v3626 = vadd.f32 %v1705, %v3568
      %v3627 = vadd.f32 %v1710, %v3573
      %v3628 = vadd.f32 %v1715, %v3578
      %v3629 = vadd.f32 %v1720, %v3583
      %v3630 = vadd.f32 %v1725, %v3588
      %v3631 = vadd.f32 %v1730, %v3593
      %v3632 = vadd.f32 %v1735, %v3598
      %v3633 = vadd.f32 %v1740, %v3603
      %v3634 = vadd.f32 %v1745, %v3608
      %v3635 = vadd.f32 %v1750, %v3613
      %v3636 = vadd.f32 %v1755, %v3618
      %3637 = vst.msk [vmem:[%s895] sm:$0xff] %vm1768, %v3621
      %3638 = vst.msk [vmem:[%s895 + $0x8] sm:$0xff] %vm1768, %v3622
      %3639 = vst.msk [vmem:[%s895 + $0x10] sm:$0xff] %vm1768, %v3623
      %3640 = vst.msk [vmem:[%s895 + $0x18] sm:$0xff] %vm1768, %v3624
      %3641 = vst.msk [vmem:[%s895 + $0x20] sm:$0xff] %vm1768, %v3625
      %3642 = vst.msk [vmem:[%s895 + $0x28] sm:$0xff] %vm1768, %v3626
      %3643 = vst.msk [vmem:[%s895 + $0x30] sm:$0xff] %vm1768, %v3627
      %3644 = vst.msk [vmem:[%s895 + $0x38] sm:$0xff] %vm1768, %v3628
      %3645 = vst.msk [vmem:[%s895 + $0x40] sm:$0xff] %vm1768, %v3629
      %3646 = vst.msk [vmem:[%s895 + $0x48] sm:$0xff] %vm1768, %v3630
      %3647 = vst.msk [vmem:[%s895 + $0x50] sm:$0xff] %vm1768, %v3631
      %3648 = vst.msk [vmem:[%s895 + $0x58] sm:$0xff] %vm1768, %v3632
      %3649 = vst.msk [vmem:[%s895 + $0x60] sm:$0xff] %vm1768, %v3633
      %3650 = vst.msk [vmem:[%s895 + $0x68] sm:$0xff] %vm1768, %v3634
      %3651 = vst.msk [vmem:[%s895 + $0x70] sm:$0xff] %vm1768, %v3635
      %3652 = vst.msk [vmem:[%s895 + $0x78] sm:$0xff] %vm1768, %v3636
      %s3653 = smul.u32 8, %s33
      %p3654 = scmp.lt.s32.totalorder %s32, 1
      %s3655 = scalar_select %p3654, %s32, 1
      %p3656 = scmp.lt.s32.totalorder %s3653, 15
      %s3657 = scalar_select %p3656, %s3653, 15
      %s3658 = smul.addr %s3657, 2
      %s3659 = smul.addr %s3655, 32
      %s3660 = sadd.s32 %s3658, %s3659
      %s3661 = smul.addr %s3660, 8
      %s3662 = scalar_lea.vmem %s17, %s3661
      // Predicated region
      $region97: #{tpu_custom_call.1} parent=87 // pred_check
        %p3663 = pneg %p500
      $region98: #{tpu_custom_call.1} parent=87 // pred_check_branch
        %3665 = sbr.rel (%p3663) target = $region100
      $region99: #{tpu_custom_call.1} parent=87 // pred_region
        %s3666 = smul.u32 8, %s33
      $region100: #{tpu_custom_call.1} parent=87 // pred_fallthru
        _
    $region88: #{tpu_custom_call.1} parent=5 // pred_fallthru
      _
    %p3667 = scmp.le.s32.totalorder 2, %s23
    // Predicated region
    $region101: #{tpu_custom_call.1} parent=5 // pred_check
      %p3668 = pneg %p3667
    $region102: #{tpu_custom_call.1} parent=5 // pred_check_branch
      %3670 = sbr.rel (%p3668) target = $region104
    $region103: #{tpu_custom_call.1} parent=5 // pred_region
      %s3671 = ssub.s32 %s23, 2
      // Predicated region
      $region105: #{tpu_custom_call.1} parent=103 // pred_check
        %p3672 = pneg %p506
      $region106: #{tpu_custom_call.1} parent=103 // pred_check_branch
        %3674 = sbr.rel (%p3672) target = $region108
      $region107: #{tpu_custom_call.1} parent=103 // pred_region
        %s3675 = smul.u32 8, %s35
        %p3676 = scmp.lt.s32.totalorder %s34, 1
        %s3677 = scalar_select %p3676, %s34, 1
        %p3678 = scmp.lt.s32.totalorder %s3675, 15
        %s3679 = scalar_select %p3678, %s3675, 15
        %s3680 = smul.addr %s3679, 2
        %s3681 = smul.addr %s3677, 32
        %s3682 = sadd.s32 %s3680, %s3681
        %s3683 = smul.addr %s3682, 8
        %s3684 = scalar_lea.vmem %s17, %s3683
      $region108: #{tpu_custom_call.1} parent=103 // pred_fallthru
        _
    $region104: #{tpu_custom_call.1} parent=5 // pred_fallthru
      _
  $region6: #{tpu_custom_call.1} parent=0 // loop_footer
    %s27 = sadd.s32 1, %s23
  $region7: #{tpu_custom_call.1} parent=0 // loop_footer_branch
    %22 = sbr.rel target = $region3
  $region8: #{tpu_custom_call.1} parent=0 // loop_exit
    _

</llo_original>
